<compile_context>
chip_gen: v7x
topology: tpu7x:2x2x1
jax: 0.10.0
libtpu: 0.0.40
codegen_flags: <defaults>
</compile_context>

<pallas_src>
from functools import partial

import jax
import jax.numpy as jnp
from jax.experimental import pallas as pl
from jax.experimental.pallas import tpu as pltpu


def _velocity_gate_kernel(x_ref, w1_ref, w2_ref, b2_ref, o_ref, *,
                          chunk, precision, hidden_dtype):
    # x_ref:  (C, TN)    input point tile (channels x points), VMEM
    # w1_ref: (H, C+1)   conv1 weight with BN scale folded; last column = folded bias
    # w2_ref: (1, H)     row 5 of conv2 weight
    # b2_ref: (1,)       conv2 bias[5], SMEM scalar
    # o_ref:  (1, TN)    v_enhanced tile
    n_chunks = x_ref.shape[-1] // chunk

    def body(i, carry):
        start = pl.multiple_of(i * chunk, chunk)
        xk = x_ref[:, pl.ds(start, chunk)]                              # (C, chunk)
        # Append a ones row so the folded bias rides inside the matmul (K: C -> C+1).
        xa = jnp.concatenate([xk, jnp.ones((1, chunk), xk.dtype)], axis=0)
        h = jnp.dot(w1_ref[...], xa, precision=precision,
                    preferred_element_type=jnp.float32)                 # (H, chunk)
        h = jnp.maximum(h, 0.0).astype(hidden_dtype)
        y = jnp.dot(w2_ref[...].astype(hidden_dtype), h, precision=precision,
                    preferred_element_type=jnp.float32)                 # (1, chunk)
        gate = jax.nn.sigmoid(y + b2_ref[0])                            # (1, chunk)
        o_ref[:, pl.ds(start, chunk)] = (gate * xk[5:6, :]).astype(o_ref.dtype)
        return carry

    jax.lax.fori_loop(0, n_chunks, body, 0)


def velocity_attention_gate(x, conv1_w, conv1_b, gamma, beta, run_mean, run_var,
                            conv2_w, conv2_b, *, eps=1e-5, tn=32768, chunk=512,
                            precision=jax.lax.Precision.HIGHEST,
                            hidden_dtype=jnp.float32):
    """Returns v_enhanced = sigmoid(mlp(x))[:, 5:6, :] * x[:, 5:6, :], shape (B, 1, N)."""
    B, C, N = x.shape
    H = conv1_w.shape[0]
    assert C >= 6, "VelocityAttention uses channel index 5; need C >= 6"
    assert conv1_w.shape == (H, C) and conv2_w.shape == (C, H)
    assert tn % 128 == 0 and chunk % 128 == 0 and tn % chunk == 0

    itemsize = jnp.dtype(x.dtype).itemsize
    round_up = lambda a, b: pl.cdiv(a, b) * b

    # --- tile selection -----------------------------------------------------------------
    cap = tn
    # Keep >= 4 grid steps so both v7x TensorCores get work (v5e/v6e take the largest tile).
    while cap > 16384 and B * pl.cdiv(N, cap) < 4:
        cap //= 2
    tn_eff = min(cap, round_up(N, chunk))          # multiple of `chunk` (and of 128)
    chunk = min(chunk, tn_eff)
    n_pad = round_up(N, tn_eff) - N                # pad ragged point counts
    x_k = jnp.pad(x, ((0, 0), (0, 0), (0, n_pad))) if n_pad else x
    n_p = N + n_pad

    # --- parameter folding (inference-mode BN) -------------------------------------------
    inv_std = gamma / jnp.sqrt(run_var + eps)                              # (H,)
    t = inv_std * (conv1_b - run_mean) + beta                              # (H,)
    w1_aug = jnp.concatenate(
        [conv1_w * inv_std[:, None], t[:, None]], axis=1).astype(jnp.float32)  # (H, C+1)
    w2_5 = conv2_w[5:6, :].astype(jnp.float32)                             # (1, H)
    b2_5 = conv2_b[5:6].astype(jnp.float32)                                # (1,) -> SMEM

    grid = (B, n_p // tn_eff)
    # Double-buffered in/out tiles + slack for weights / chunk temporaries.
    vmem_bytes = (2 * C * tn_eff + 2 * tn_eff) * itemsize + (2 << 20)
    cost = pl.CostEstimate(
        flops=2 * B * n_p * (H * (C + 1) + H),
        transcendentals=B * n_p,
        bytes_accessed=itemsize * (B * C * n_p + B * n_p) + 4 * (H * (C + 2) + 1),
    )

    v = pl.pallas_call(
        partial(_velocity_gate_kernel, chunk=chunk, precision=precision,
                hidden_dtype=hidden_dtype),
        out_shape=jax.ShapeDtypeStruct((B, 1, n_p), x.dtype),
        grid_spec=pltpu.PrefetchScalarGridSpec(
            num_scalar_prefetch=0,
            grid=grid,
            in_specs=[
                pl.BlockSpec((None, C, tn_eff), lambda b, n: (b, 0, n)),   # x tile
                pl.BlockSpec((H, C + 1), lambda b, n: (0, 0)),             # W1_aug
                pl.BlockSpec((1, H), lambda b, n: (0, 0)),                 # W2 row 5
                pl.BlockSpec(memory_space=pltpu.MemorySpace.SMEM),         # b2[5]
            ],
            out_specs=pl.BlockSpec((None, 1, tn_eff), lambda b, n: (b, 0, n)),
        ),
        compiler_params=pltpu.CompilerParams(
            dimension_semantics=("parallel", "parallel"),
            vmem_limit_bytes=int(max(vmem_bytes, 16 * 1024 * 1024)),
        ),
        cost_estimate=cost,
    )(x_k, w1_aug, w2_5, b2_5)

    return v[:, :, :N] if n_pad else v


def velocity_attention(x, conv1_w, conv1_b, gamma, beta, run_mean, run_var,
                       conv2_w, conv2_b, **kwargs):
    """Full module forward: (B, C, N) -> (B, C+1, N) = concat([x, v_enhanced], axis=1).

    x never streams through the kernel; the concat is done lazily on the caller side.
    """
    v = velocity_attention_gate(x, conv1_w, conv1_b, gamma, beta, run_mean, run_var,
                                conv2_w, conv2_b, **kwargs)
    return jnp.concatenate([x, v], axis=1)


def _reference(x, conv1_w, conv1_b, gamma, beta, run_mean, run_var, conv2_w, conv2_b,
               eps=1e-5, precision=jax.lax.Precision.HIGHEST):
    # Pure-JAX reference of the PyTorch forward (inference-mode BN).
    h = jnp.einsum("hc,bcn->bhn", conv1_w, x, precision=precision) + conv1_b[None, :, None]
    h = (h - run_mean[None, :, None]) / jnp.sqrt(run_var + eps)[None, :, None]
    h = h * gamma[None, :, None] + beta[None, :, None]
    h = jnp.maximum(h, 0.0)
    y = jnp.einsum("ch,bhn->bcn", conv2_w, h, precision=precision) + conv2_b[None, :, None]
    w = jax.nn.sigmoid(y)
    v_enh = w[:, 5:6, :] * x[:, 5:6, :]
    return jnp.concatenate([x, v_enh], axis=1)


if __name__ == "__main__":
    B, C, N, H = 2, 8, 512, 64   # in_channel=8 (>=6 so index 5 exists), 512 points
    key = jax.random.PRNGKey(0)
    kx, k1, kb1, k2, kb2, kg, kbe, km, kv = jax.random.split(key, 9)

    x = jax.random.normal(kx, (B, C, N), dtype=jnp.float32)
    # Conv1d(C, 64, 1): weight (64, C), bias (64,)
    conv1_w = 0.1 * jax.random.normal(k1, (H, C), dtype=jnp.float32)
    conv1_b = 0.1 * jax.random.normal(kb1, (H,), dtype=jnp.float32)
    # BatchNorm1d(64) params + running stats (inference mode)
    gamma = 1.0 + 0.1 * jax.random.normal(kg, (H,), dtype=jnp.float32)
    beta = 0.1 * jax.random.normal(kbe, (H,), dtype=jnp.float32)
    run_mean = 0.1 * jax.random.normal(km, (H,), dtype=jnp.float32)
    run_var = jnp.abs(1.0 + 0.1 * jax.random.normal(kv, (H,), dtype=jnp.float32))
    # Conv1d(64, C, 1): weight (C, 64), bias (C,)
    conv2_w = 0.1 * jax.random.normal(k2, (C, H), dtype=jnp.float32)
    conv2_b = 0.1 * jax.random.normal(kb2, (C,), dtype=jnp.float32)

    out = velocity_attention(x, conv1_w, conv1_b, gamma, beta, run_mean, run_var,
                             conv2_w, conv2_b)
    out = jax.block_until_ready(out)

    ref = _reference(x, conv1_w, conv1_b, gamma, beta, run_mean, run_var,
                     conv2_w, conv2_b)
    assert out.shape == (B, C + 1, N)
    err = float(jnp.max(jnp.abs(out - ref)))
    assert jnp.allclose(out, ref, atol=1e-4, rtol=1e-4), f"max abs err {err}"
    print("KERNEL_OK")
</pallas_src>

<mosaic_0001>
module attributes {stable_mosaic.version = 11 : i64} {
  func.func @_velocity_gate_kernel(%arg0: i32, %arg1: i32, %arg2: memref<1x8x512xf32, #tpu.memory_space<vmem>>, %arg3: memref<64x9xf32, #tpu.memory_space<vmem>>, %arg4: memref<1x64xf32, #tpu.memory_space<vmem>>, %arg5: memref<1xf32, #tpu.memory_space<smem>>, %arg6: memref<1x1x512xf32, #tpu.memory_space<vmem>>) attributes {dimension_semantics = [#tpu.dimension_semantics<parallel>, #tpu.dimension_semantics<parallel>], iteration_bounds = array<i64: 2, 1>, scalar_prefetch = 0 : i64, scratch_operands = 0 : i64, tpu.core_type = #tpu.core_type<tc>, window_params = [{transform_indices = @transform_0, window_bounds = array<i64: 1, 8, 512>}, {pipeline_mode = #tpu.pipeline_mode<synchronous>, transform_indices = @transform_1, window_bounds = array<i64: 64, 9>}, {pipeline_mode = #tpu.pipeline_mode<synchronous>, transform_indices = @transform_2, window_bounds = array<i64: 1, 64>}, {transform_indices = @transform_3, window_bounds = array<i64: 1>}, {transform_indices = @transform_4, window_bounds = array<i64: 1, 1, 512>}]} {
    %c0_i32 = arith.constant 0 : i32
    %c512_i32 = arith.constant 512 : i32
    %0 = arith.muli %c0_i32, %c512_i32 : i32
    %1 = tpu.assume_multiple %0, 512 : i32
    %c0 = arith.constant 0 : index
    %c0_0 = arith.constant 0 : index
    %2 = arith.index_cast %1 : i32 to index
    %3 = vector.load %arg2[%c0, %c0_0, %2] : memref<1x8x512xf32, #tpu.memory_space<vmem>>, vector<1x8x512xf32>
    %4 = vector.shape_cast %3 : vector<1x8x512xf32> to vector<8x512xf32>
    %cst = arith.constant 1.000000e+00 : f32
    %5 = vector.broadcast %cst : f32 to vector<1x512xf32>
    %6 = tpu.concatenate %4, %5 in 0 : vector<8x512xf32>, vector<1x512xf32> -> vector<9x512xf32>
    %c0_1 = arith.constant 0 : index
    %c0_2 = arith.constant 0 : index
    %7 = vector.load %arg3[%c0_1, %c0_2] : memref<64x9xf32, #tpu.memory_space<vmem>>, vector<64x9xf32>
    %cst_3 = arith.constant dense<0.000000e+00> : vector<64x512xf32>
    %8 = tpu.matmul %7, %6, %cst_3 {dimension_numbers = #tpu.dot_dimension_numbers<[1], [0], [0], [1], [0, 0, 1, 1], [], []>, precision = #tpu.contract_precision<fp32>} : vector<64x9xf32>, vector<9x512xf32>, vector<64x512xf32> -> vector<64x512xf32>
    %cst_4 = arith.constant 0.000000e+00 : f32
    %9 = vector.broadcast %cst_4 : f32 to vector<64x512xf32>
    %10 = arith.maximumf %8, %9 : vector<64x512xf32>
    %c0_5 = arith.constant 0 : index
    %c0_6 = arith.constant 0 : index
    %11 = vector.load %arg4[%c0_5, %c0_6] : memref<1x64xf32, #tpu.memory_space<vmem>>, vector<1x64xf32>
    %cst_7 = arith.constant dense<0.000000e+00> : vector<1x512xf32>
    %12 = tpu.matmul %11, %10, %cst_7 {dimension_numbers = #tpu.dot_dimension_numbers<[1], [0], [0], [1], [0, 0, 1, 1], [], []>, precision = #tpu.contract_precision<fp32>} : vector<1x64xf32>, vector<64x512xf32>, vector<1x512xf32> -> vector<1x512xf32>
    %c0_8 = arith.constant 0 : index
    %13 = memref.load %arg5[%c0_8] : memref<1xf32, #tpu.memory_space<smem>>
    %14 = vector.broadcast %13 : f32 to vector<1x512xf32>
    %15 = arith.addf %12, %14 : vector<1x512xf32>
    %16 = arith.negf %15 : vector<1x512xf32>
    %17 = math.exp %16 : vector<1x512xf32>
    %cst_9 = arith.constant 1.000000e+00 : f32
    %18 = vector.broadcast %cst_9 : f32 to vector<1x512xf32>
    %19 = arith.addf %18, %17 : vector<1x512xf32>
    %20 = arith.divf %18, %19 : vector<1x512xf32>
    %21 = vector.extract_strided_slice %4 {offsets = [5, 0], sizes = [1, 512], strides = [1, 1]} : vector<8x512xf32> to vector<1x512xf32>
    %22 = arith.mulf %20, %21 : vector<1x512xf32>
    %c0_10 = arith.constant 0 : index
    %c0_11 = arith.constant 0 : index
    %23 = arith.index_cast %1 : i32 to index
    %24 = vector.load %arg6[%c0_10, %c0_11, %23] : memref<1x1x512xf32, #tpu.memory_space<vmem>>, vector<1x1x512xf32>
    %25 = vector.shape_cast %24 : vector<1x1x512xf32> to vector<1x512xf32>
    %26 = vector.shape_cast %22 : vector<1x512xf32> to vector<1x1x512xf32>
    tpu.vector_store %arg6[%c0_10, %c0_11, %23], %26 {strides = array<i32>} : memref<1x1x512xf32, #tpu.memory_space<vmem>>, vector<1x1x512xf32>,
    %c1_i32 = arith.constant 1 : i32
    return
  }
  func.func @transform_0(%arg0: i32, %arg1: i32) -> (i32, i32, i32) {
    %c0_i32 = arith.constant 0 : i32
    %c0_i32_0 = arith.constant 0 : i32
    return %arg0, %c0_i32, %arg1 : i32, i32, i32
  }
  func.func @transform_1(%arg0: i32, %arg1: i32) -> (i32, i32) {
    %c0_i32 = arith.constant 0 : i32
    %c0_i32_0 = arith.constant 0 : i32
    %c0_i32_1 = arith.constant 0 : i32
    return %c0_i32, %c0_i32_0 : i32, i32
  }
  func.func @transform_2(%arg0: i32, %arg1: i32) -> (i32, i32) {
    %c0_i32 = arith.constant 0 : i32
    %c0_i32_0 = arith.constant 0 : i32
    %c0_i32_1 = arith.constant 0 : i32
    return %c0_i32, %c0_i32_0 : i32, i32
  }
  func.func @transform_3(%arg0: i32, %arg1: i32) -> i32 {
    %c0_i32 = arith.constant 0 : i32
    %c0_i32_0 = arith.constant 0 : i32
    return %c0_i32 : i32
  }
  func.func @transform_4(%arg0: i32, %arg1: i32) -> (i32, i32, i32) {
    %c0_i32 = arith.constant 0 : i32
    %c0_i32_0 = arith.constant 0 : i32
    return %arg0, %c0_i32, %arg1 : i32, i32, i32
  }
}

</mosaic_0001>

<llo_original>
// kernel: tpu_custom_call.1
$region0: #{tpu_custom_call.1}
  #allocation0 [shape = 'u32[]', space=smem, size = 0x4, offset = 0x4, fixed_abs, tag = 'smem constant byte address 0x4 - core index']
  #allocation1 [shape = 'u32[144,128]{1,0:T(1,128)}', space=vmem, size = 0x12000, scoped, tag = 'internal scratch']
  #allocation2 [shape = 'f32[1]{0:T(128)S(6)}', space=smem, size = 0x200, scoped, tag = 'scoped memory for tpu_custom_call.1']
  %s0 = inlined_call_operand.vmem [shape: f32[2,8,512], index: 0, kind: input, shape index: {}]
  %s1 = inlined_call_operand.vmem [shape: f32[64,9], index: 1, kind: input, shape index: {}]
  %s2 = inlined_call_operand.vmem [shape: f32[1,64], index: 2, kind: input, shape index: {}]
  %s3 = inlined_call_operand.<no memory space> [shape: f32[1], index: 3, kind: input, shape index: {}]
  %s4 = inlined_call_operand.hbm [shape: f32[2,1,512], index: 4, kind: output, shape index: {}]
  %s5 = sld [smem:[#allocation0]]
  $region49: #{tpu_custom_call.1} parent=0
    _
  %s7 = ssub.s32 1, %s5
  %s8 = scalar_select 0, %s7, %s5
  %9 = sst [smem:[#allocation2]] %s3
  $region1: #{tpu_custom_call.1} parent=0
    #allocation3 [shape = 'u8[4096]{0}', space=vmem, size = 0x1000, scoped, tag = 'output window, operand 0']
    #allocation4 [shape = 's32[2]{0}', space=sflag, size = 0x8, scoped, tag = 'scoped memory for tpu_custom_call.1']
    %10 = vsyncpa [#allocation4], 0
    %s11 = scalar_lea.sflag [#allocation4], 1
    %12 = vsyncpa %s11, 0
    loop: start=0, step=1, limit=4
    $region2: #{tpu_custom_call.1} parent=1 // loop_pre_header
      _
    $region3: #{tpu_custom_call.1} parent=1 // loop_header
      %s14 = sphi 0, %s18
      %p15 = scmp.ge.s32.totalorder %s14, 4
      %s21 = sphi 0, %s33
      %s22 = sphi 0, %s29
      %s23 = sphi 0, %s21
      %s24 = sphi 0, %s22
      %s25 = sphi 0, %s23
      %s26 = sphi 0, %s24
      %s38 = sphi 0, %s40
      %s41 = sphi 0, %s38
      %s42 = sphi 0, %s41
      %s58 = sphi 0, %s42
      %s62 = sphi 0, %s62
      %s64 = sphi 0, %s62
      %s65 = sphi 0, %s64
      %s79 = sphi 0, %s65
      %s83 = sphi 0, %s83
      %s85 = sphi 0, %s83
      %s86 = sphi 0, %s85
      %s100 = sphi 0, %s86
      %s104 = sphi 0, %s104
      %s106 = sphi 0, %s104
      %s107 = sphi 0, %s106
      %s121 = sphi 0, %s107
      %s129 = sphi 0, %s131
      %s132 = sphi 0, %s129
      %s133 = sphi 0, %s132
      %s149 = sphi 0, %s133
    $region4: #{tpu_custom_call.1} parent=1 // loop_header_branch
      %17 = sbr.rel (%p15) target = $region8
    $region5: #{tpu_custom_call.1} parent=1 // loop_body
      %s19 = ssub.s32 %s14, 1
      %s20 = ssub.s32 %s14, 2
      %s27 = sadd.s32 1, %s22
      %p28 = scmp.ge.s32.totalorder %s27, 1
      %s29 = scalar_select %p28, 0, %s27
      %s30 = sadd.s32 1, %s21
      %s31 = scalar_select %p28, %s30, %s21
      %p32 = scmp.ge.s32.totalorder %s31, 2
      %s33 = scalar_select %p32, 0, %s31
      %s34 = ssub.s32 %s21, %s33
      %s35 = ssub.s32 %s22, %s29
      %s36 = sor.u32 %s34, %s35
      %p37 = scmp.eq.s32.totalorder %s36, 0
      %s39 = sadd.s32 %s38, 1
      %s40 = scalar_select %p37, %s38, %s39
      %p43 = pneg %p37
      %p44 = scmp.eq.s32.totalorder %s14, 1
      %p45 = por %p43, %p44
      %p46 = scmp.ne.s32.totalorder %s38, %s41
      %p47 = scmp.eq.s32.totalorder %s14, 0
      %p48 = por %p46, %p47
      %p49 = scmp.ne.s32.totalorder %s38, %s41
      %p50 = scmp.eq.s32.totalorder %s19, 1
      %p51 = por %p49, %p50
      %p52 = scmp.ne.s32.totalorder %s41, %s42
      %p53 = scmp.eq.s32.totalorder %s19, 0
      %p54 = por %p52, %p53
      %p55 = scmp.ne.s32.totalorder %s41, %s42
      %p56 = scmp.eq.s32.totalorder %s20, 1
      %p57 = por %p55, %p56
      %p59 = scmp.ne.s32.totalorder %s42, %s58
      %p60 = scmp.eq.s32.totalorder %s20, 0
      %p61 = por %p59, %p60
      %s63 = sadd.s32 %s62, 1
      %p66 = scmp.eq.s32.totalorder %s14, 1
      %p67 = scmp.ne.s32.totalorder %s62, %s64
      %p68 = scmp.eq.s32.totalorder %s14, 0
      %p69 = por %p67, %p68
      %p70 = scmp.ne.s32.totalorder %s62, %s64
      %p71 = scmp.eq.s32.totalorder %s19, 1
      %p72 = por %p70, %p71
      %p73 = scmp.ne.s32.totalorder %s64, %s65
      %p74 = scmp.eq.s32.totalorder %s19, 0
      %p75 = por %p73, %p74
      %p76 = scmp.ne.s32.totalorder %s64, %s65
      %p77 = scmp.eq.s32.totalorder %s20, 1
      %p78 = por %p76, %p77
      %p80 = scmp.ne.s32.totalorder %s65, %s79
      %p81 = scmp.eq.s32.totalorder %s20, 0
      %p82 = por %p80, %p81
      %s84 = sadd.s32 %s83, 1
      %p87 = scmp.eq.s32.totalorder %s14, 1
      %p88 = scmp.ne.s32.totalorder %s83, %s85
      %p89 = scmp.eq.s32.totalorder %s14, 0
      %p90 = por %p88, %p89
      %p91 = scmp.ne.s32.totalorder %s83, %s85
      %p92 = scmp.eq.s32.totalorder %s19, 1
      %p93 = por %p91, %p92
      %p94 = scmp.ne.s32.totalorder %s85, %s86
      %p95 = scmp.eq.s32.totalorder %s19, 0
      %p96 = por %p94, %p95
      %p97 = scmp.ne.s32.totalorder %s85, %s86
      %p98 = scmp.eq.s32.totalorder %s20, 1
      %p99 = por %p97, %p98
      %p101 = scmp.ne.s32.totalorder %s86, %s100
      %p102 = scmp.eq.s32.totalorder %s20, 0
      %p103 = por %p101, %p102
      %s105 = sadd.s32 %s104, 1
      %p108 = scmp.eq.s32.totalorder %s14, 1
      %p109 = scmp.ne.s32.totalorder %s104, %s106
      %p110 = scmp.eq.s32.totalorder %s14, 0
      %p111 = por %p109, %p110
      %p112 = scmp.ne.s32.totalorder %s104, %s106
      %p113 = scmp.eq.s32.totalorder %s19, 1
      %p114 = por %p112, %p113
      %p115 = scmp.ne.s32.totalorder %s106, %s107
      %p116 = scmp.eq.s32.totalorder %s19, 0
      %p117 = por %p115, %p116
      %p118 = scmp.ne.s32.totalorder %s106, %s107
      %p119 = scmp.eq.s32.totalorder %s20, 1
      %p120 = por %p118, %p119
      %p122 = scmp.ne.s32.totalorder %s107, %s121
      %p123 = scmp.eq.s32.totalorder %s20, 0
      %p124 = por %p122, %p123
      %s125 = ssub.s32 %s21, %s33
      %s126 = ssub.s32 %s22, %s29
      %s127 = sor.u32 %s125, %s126
      %p128 = scmp.eq.s32.totalorder %s127, 0
      %s130 = sadd.s32 %s129, 1
      %s131 = scalar_select %p128, %s129, %s130
      %p134 = pneg %p128
      %p135 = scmp.eq.s32.totalorder %s14, 1
      %p136 = por %p134, %p135
      %p137 = scmp.ne.s32.totalorder %s129, %s132
      %p138 = scmp.eq.s32.totalorder %s14, 0
      %p139 = por %p137, %p138
      %p140 = scmp.ne.s32.totalorder %s129, %s132
      %p141 = scmp.eq.s32.totalorder %s19, 1
      %p142 = por %p140, %p141
      %p143 = scmp.ne.s32.totalorder %s132, %s133
      %p144 = scmp.eq.s32.totalorder %s19, 0
      %p145 = por %p143, %p144
      %p146 = scmp.ne.s32.totalorder %s132, %s133
      %p147 = scmp.eq.s32.totalorder %s20, 1
      %p148 = por %p146, %p147
      %p150 = scmp.ne.s32.totalorder %s133, %s149
      %p151 = scmp.eq.s32.totalorder %s20, 0
      %p152 = por %p150, %p151
      %p153 = scmp.le.s32.totalorder 1, %s14
      %p154 = scmp.lt.s32.totalorder %s14, 3
      %p155 = pnand %p153, %p154
      %p156 = pneg %p155
      // Predicated region
      $region9: #{tpu_custom_call.1} parent=5 // pred_check
        _
      $region10: #{tpu_custom_call.1} parent=5 // pred_check_branch
        %158 = sbr.rel (%p155) target = $region12
      $region11: #{tpu_custom_call.1} parent=5 // pred_region
        %s159 = ssub.s32 %s14, 1
        // Predicated region
        $region13: #{tpu_custom_call.1} parent=11 // pred_check
          %p160 = pneg %p75
        $region14: #{tpu_custom_call.1} parent=11 // pred_check_branch
          %162 = sbr.rel (%p160) target = $region16
        $region15: #{tpu_custom_call.1} parent=11 // pred_region
          _
        $region16: #{tpu_custom_call.1} parent=11 // pred_fallthru
          _
        // Predicated region
        $region17: #{tpu_custom_call.1} parent=11 // pred_check
          %p163 = pneg %p96
        $region18: #{tpu_custom_call.1} parent=11 // pred_check_branch
          %165 = sbr.rel (%p163) target = $region20
        $region19: #{tpu_custom_call.1} parent=11 // pred_region
          _
        $region20: #{tpu_custom_call.1} parent=11 // pred_fallthru
          _
        // Predicated region
        $region21: #{tpu_custom_call.1} parent=11 // pred_check
          %p166 = pneg %p117
        $region22: #{tpu_custom_call.1} parent=11 // pred_check_branch
          %168 = sbr.rel (%p166) target = $region24
        $region23: #{tpu_custom_call.1} parent=11 // pred_region
          _
        $region24: #{tpu_custom_call.1} parent=11 // pred_fallthru
          _
      $region12: #{tpu_custom_call.1} parent=5 // pred_fallthru
        _
      %p169 = scmp.lt.s32.totalorder %s14, 2
      // Predicated region
      $region25: #{tpu_custom_call.1} parent=5 // pred_check
        %p170 = pneg %p169
      $region26: #{tpu_custom_call.1} parent=5 // pred_check_branch
        %172 = sbr.rel (%p170) target = $region28
      $region27: #{tpu_custom_call.1} parent=5 // pred_region
        // Predicated region
        $region29: #{tpu_custom_call.1} parent=27 // pred_check
          %p173 = pneg %p48
        $region30: #{tpu_custom_call.1} parent=27 // pred_check_branch
          %175 = sbr.rel (%p173) target = $region32
        $region31: #{tpu_custom_call.1} parent=27 // pred_region
          %s176 = smul.u32 4, %s22
          %p177 = scmp.lt.s32.totalorder %s21, 1
          %s178 = scalar_select %p177, %s21, 1
          %p179 = scmp.lt.s32.totalorder %s176, 3
          %s180 = scalar_select %p179, %s176, 3
          %s181 = smul.addr %s178, 4
          %s182 = sadd.s32 %s180, %s181
          %s183 = smul.addr %s182, 8
          %s184 = scalar_lea.vmem %s0, %s183
          %s185 = smul.u32 4, %s22
        $region32: #{tpu_custom_call.1} parent=27 // pred_fallthru
          _
      $region28: #{tpu_custom_call.1} parent=5 // pred_fallthru
        _
      %p186 = scmp.le.s32.totalorder 1, %s14
      %p187 = scmp.lt.s32.totalorder %s14, 3
      %p188 = pnand %p186, %p187
      %p189 = pneg %p188
      // Predicated region
      $region33: #{tpu_custom_call.1} parent=5 // pred_check
        _
      $region34: #{tpu_custom_call.1} parent=5 // pred_check_branch
        %191 = sbr.rel (%p188) target = $region36
      $region35: #{tpu_custom_call.1} parent=5 // pred_region
        %s192 = ssub.s32 %s14, 1
        %s193 = smul.u32 4, %s24
        %p194 = scmp.lt.s32.totalorder %s23, 1
        %s195 = scalar_select %p194, %s23, 1
        %p196 = scmp.lt.s32.totalorder %s193, 3
        %s197 = scalar_select %p196, %s193, 3
        %s198 = smul.addr %s195, 4
        %s199 = sadd.s32 %s197, %s198
        %s200 = smul.addr %s199, 8
        %s201 = scalar_lea.vmem %s0, %s200
        %p202 = pneg %p54
        %p203 = pneg %p51
        %p204 = pneg %p75
        %p205 = pneg %p72
        %p206 = pneg %p96
        %p207 = pneg %p93
        %p208 = pneg %p117
        %p209 = pneg %p114
        %p210 = pneg %p145
        %p211 = pneg %p142
        %s212 = sand.u32 %s132, 1
        %s213 = scalar_lea.sflag [#allocation4], %s212
        %s214 = sand.u32 %s132, 1
        %s215 = smul.addr %s214, 4
        %s216 = scalar_lea.vmem [#allocation3], %s215
        %s217 = smul.u32 4, %s24
        %p218 = scmp.lt.s32.totalorder %s23, 1
        %s219 = scalar_select %p218, %s23, 1
        %p220 = scmp.lt.s32.totalorder %s217, 3
        %s221 = scalar_select %p220, %s217, 3
        %s222 = smul.addr %s219, 4
        %s223 = sadd.s32 %s221, %s222
        %s224 = smul.addr %s223, 8
        %s225 = scalar_lea.vmem %s0, %s224
        %s226 = smul.u32 4, %s24
        %s227 = smul.u32 4, %s24
        %v228 = vld [vmem:[%s225] sm:$0xff]
        %v229 = vld [vmem:[%s225 + $0x8] sm:$0xff]
        %v230 = vld [vmem:[%s225 + $0x10] sm:$0xff]
        %v231 = vld [vmem:[%s225 + $0x18] sm:$0xff]
        %v232 = vld [vmem:[%s1] sm:$0xff]
        %v233 = vld [vmem:[%s1 + $0x8] sm:$0xff]
        %v234 = vld [vmem:[%s1 + $0x10] sm:$0xff]
        %v235 = vld [vmem:[%s1 + $0x18] sm:$0xff]
        %v236 = vld [vmem:[%s1 + $0x20] sm:$0xff]
        %v237 = vld [vmem:[%s1 + $0x28] sm:$0xff]
        %v238 = vld [vmem:[%s1 + $0x30] sm:$0xff]
        %v239 = vld [vmem:[%s1 + $0x38] sm:$0xff]
        %vm240 = vcmask 72704
        %v242 = vsel %vm240, %v232, 0
        %v245 = vsel %vm240, %v233, 0
        %v248 = vsel %vm240, %v234, 0
        %v251 = vsel %vm240, %v235, 0
        %v254 = vsel %vm240, %v236, 0
        %v257 = vsel %vm240, %v237, 0
        %v260 = vsel %vm240, %v238, 0
        %v263 = vsel %vm240, %v239, 0
        %vm265 = vcmask 1040384
        %v267 = vsel %vm265, 1.0, 0
        %v269 = vand.u32 %v229, 4294901760
        %270 = vmatprep.subr.mxu0 %v269
        %v271 = vand.u32 %v228, 4294901760
        %272 = vmatpush1.msra.mxu0 %v271
        %v273 = vand.u32 %v267, 4294901760
        %274 = vmatprep.subr.mxu0 %v273
        %v275 = vand.u32 %v267, 4294901760
        %276 = vmatpush1.msra.mxu0 %v275
        %277 = vmatprep.subr.mxu0 0.0
        %278 = vmatpush1.msra.mxu0 0.0
        %279 = vmatprep.subr.mxu0 0.0
        %280 = vmatpush1.msra.mxu0 0.0
        %281 = vmatprep.subr.mxu0 0.0
        %282 = vmatpush1.msra.mxu0 0.0
        %283 = vmatprep.subr.mxu0 0.0
        %284 = vmatpush1.msra.mxu0 0.0
        %285 = vmatprep.subr.mxu0 0.0
        %286 = vmatpush1.msra.mxu0 0.0
        %287 = vmatprep.subr.mxu0 0.0
        %288 = vmatpush1.msra.mxu0 0.0
        %289 = vmatprep.subr.mxu0 0.0
        %290 = vmatpush1.msra.mxu0 0.0
        %291 = vmatprep.subr.mxu0 0.0
        %292 = vmatpush1.msra.mxu0 0.0
        %293 = vmatprep.subr.mxu0 0.0
        %294 = vmatpush1.msra.mxu0 0.0
        %295 = vmatprep.subr.mxu0 0.0
        %296 = vmatpush1.msra.mxu0 0.0
        %297 = vmatprep.subr.mxu0 0.0
        %298 = vmatpush1.msra.mxu0 0.0
        %299 = vmatprep.subr.mxu0 0.0
        %300 = vmatpush1.msra.mxu0 0.0
        %301 = vmatprep.subr.mxu0 0.0
        %302 = vmatpush1.msra.mxu0 0.0
        %303 = vmatprep.subr.mxu0 0.0
        %304 = vmatpush1.msra.mxu0 0.0
        %305 = vmatprep.subr.mxu0 0.0
        %306 = vmatpush1.msra.mxu0 0.0
        %307 = vmatprep.subr.mxu0 0.0
        %308 = vmatpush1.msra.mxu0 0.0
        %309 = vmatprep.subr.mxu0 0.0
        %310 = vmatpush1.msra.mxu0 0.0
        %311 = vmatprep.subr.mxu0 0.0
        %312 = vmatpush1.msra.mxu0 0.0
        %313 = vmatprep.subr.mxu0 0.0
        %314 = vmatpush1.msra.mxu0 0.0
        %315 = vmatprep.subr.mxu0 0.0
        %316 = vmatpush1.msra.mxu0 0.0
        %317 = vmatprep.subr.mxu0 0.0
        %318 = vmatpush1.msra.mxu0 0.0
        %319 = vmatprep.subr.mxu0 0.0
        %320 = vmatpush1.msra.mxu0 0.0
        %321 = vmatprep.subr.mxu0 0.0
        %322 = vmatpush1.msra.mxu0 0.0
        %323 = vmatprep.subr.mxu0 0.0
        %324 = vmatpush1.msra.mxu0 0.0
        %325 = vmatprep.subr.mxu0 0.0
        %326 = vmatpush1.msra.mxu0 0.0
        %327 = vmatprep.subr.mxu0 0.0
        %328 = vmatpush1.msra.mxu0 0.0
        %329 = vmatprep.subr.mxu0 0.0
        %330 = vmatpush1.msra.mxu0 0.0
        %331 = vmatprep.subr.mxu0 0.0
        %332 = vmatpush1.msra.mxu0 0.0
        %333 = vmatprep.subr.mxu0 0.0
        %334 = vmatpush1.msra.mxu0 0.0
        %335 = vmatprep.subr.mxu0 0.0
        %336 = vmatpush1.msra.mxu0 0.0
        %337 = vmatprep.mubr.f32.mxu0 0.0
        %v338 = vand.u32 %v242, 4294901760
        %v339 = vsub.f32 %v242, %v338
        %v340 = vand.u32 %v339, 4294901760
        %v341 = vsub.f32 %v339, %v340
        %v342 = vand.u32 %v341, 4294901760
        %343 = vmatmul.mubr.f32.gmra.mrb[0].mxu0 %v342
        %v344 = vpop.f32.mrb[0].mxu0
        %v345 = vadd.f32 0.0, %v344
        %v346 = vpop.f32.mrb[0].mxu0
        %v347 = vadd.f32 0.0, %v346
        %348 = vmatprep.mubr.f32.mxu0 0.0
        %v349 = vand.u32 %v245, 4294901760
        %v350 = vsub.f32 %v245, %v349
        %v351 = vand.u32 %v350, 4294901760
        %v352 = vsub.f32 %v350, %v351
        %v353 = vand.u32 %v352, 4294901760
        %354 = vmatmul.mubr.f32.gmra.mrb[0].mxu0 %v353
        %v355 = vpop.f32.mrb[0].mxu0
        %v356 = vadd.f32 0.0, %v355
        %v357 = vpop.f32.mrb[0].mxu0
        %v358 = vadd.f32 0.0, %v357
        %359 = vmatprep.mubr.f32.mxu0 0.0
        %v360 = vand.u32 %v248, 4294901760
        %v361 = vsub.f32 %v248, %v360
        %v362 = vand.u32 %v361, 4294901760
        %v363 = vsub.f32 %v361, %v362
        %v364 = vand.u32 %v363, 4294901760
        %365 = vmatmul.mubr.f32.gmra.mrb[0].mxu0 %v364
        %v366 = vpop.f32.mrb[0].mxu0
        %v367 = vadd.f32 0.0, %v366
        %v368 = vpop.f32.mrb[0].mxu0
        %v369 = vadd.f32 0.0, %v368
        %370 = vmatprep.mubr.f32.mxu0 0.0
        %v371 = vand.u32 %v251, 4294901760
        %v372 = vsub.f32 %v251, %v371
        %v373 = vand.u32 %v372, 4294901760
        %v374 = vsub.f32 %v372, %v373
        %v375 = vand.u32 %v374, 4294901760
        %376 = vmatmul.mubr.f32.gmra.mrb[0].mxu0 %v375
        %v377 = vpop.f32.mrb[0].mxu0
        %v378 = vadd.f32 0.0, %v377
        %v379 = vpop.f32.mrb[0].mxu0
        %v380 = vadd.f32 0.0, %v379
        %381 = vmatprep.mubr.f32.mxu0 0.0
        %v382 = vand.u32 %v254, 4294901760
        %v383 = vsub.f32 %v254, %v382
        %v384 = vand.u32 %v383, 4294901760
        %v385 = vsub.f32 %v383, %v384
        %v386 = vand.u32 %v385, 4294901760
        %387 = vmatmul.mubr.f32.gmra.mrb[0].mxu0 %v386
        %v388 = vpop.f32.mrb[0].mxu0
        %v389 = vadd.f32 0.0, %v388
        %v390 = vpop.f32.mrb[0].mxu0
        %v391 = vadd.f32 0.0, %v390
        %392 = vmatprep.mubr.f32.mxu0 0.0
        %v393 = vand.u32 %v257, 4294901760
        %v394 = vsub.f32 %v257, %v393
        %v395 = vand.u32 %v394, 4294901760
        %v396 = vsub.f32 %v394, %v395
        %v397 = vand.u32 %v396, 4294901760
        %398 = vmatmul.mubr.f32.gmra.mrb[0].mxu0 %v397
        %v399 = vpop.f32.mrb[0].mxu0
        %v400 = vadd.f32 0.0, %v399
        %v401 = vpop.f32.mrb[0].mxu0
        %v402 = vadd.f32 0.0, %v401
        %403 = vmatprep.mubr.f32.mxu0 0.0
        %v404 = vand.u32 %v260, 4294901760
        %v405 = vsub.f32 %v260, %v404
        %v406 = vand.u32 %v405, 4294901760
        %v407 = vsub.f32 %v405, %v406
        %v408 = vand.u32 %v407, 4294901760
        %409 = vmatmul.mubr.f32.gmra.mrb[0].mxu0 %v408
        %v410 = vpop.f32.mrb[0].mxu0
        %v411 = vadd.f32 0.0, %v410
        %v412 = vpop.f32.mrb[0].mxu0
        %v413 = vadd.f32 0.0, %v412
        %414 = vmatprep.mubr.f32.mxu0 0.0
        %v415 = vand.u32 %v263, 4294901760
        %v416 = vsub.f32 %v263, %v415
        %v417 = vand.u32 %v416, 4294901760
        %v418 = vsub.f32 %v416, %v417
        %v419 = vand.u32 %v418, 4294901760
        %420 = vmatmul.mubr.f32.gmra.mrb[0].mxu0 %v419
        %v421 = vpop.f32.mrb[0].mxu0
        %v422 = vadd.f32 0.0, %v421
        %v423 = vpop.f32.mrb[0].mxu0
        %v424 = vadd.f32 0.0, %v423
        %425 = vdwg.mxu0
        %v426 = vand.u32 %v229, 4294901760
        %v427 = vsub.f32 %v229, %v426
        %v428 = vand.u32 %v427, 4294901760
        %v429 = vsub.f32 %v427, %v428
        %v430 = vand.u32 %v429, 4294901760
        %431 = vmatprep.subr.mxu0 %v430
        %v432 = vand.u32 %v228, 4294901760
        %v433 = vsub.f32 %v228, %v432
        %v434 = vand.u32 %v433, 4294901760
        %v435 = vsub.f32 %v433, %v434
        %v436 = vand.u32 %v435, 4294901760
        %437 = vmatpush1.msra.mxu0 %v436
        %v438 = vand.u32 %v267, 4294901760
        %v439 = vsub.f32 %v267, %v438
        %v440 = vand.u32 %v439, 4294901760
        %v441 = vsub.f32 %v439, %v440
        %v442 = vand.u32 %v441, 4294901760
        %443 = vmatprep.subr.mxu0 %v442
        %v444 = vand.u32 %v267, 4294901760
        %v445 = vsub.f32 %v267, %v444
        %v446 = vand.u32 %v445, 4294901760
        %v447 = vsub.f32 %v445, %v446
        %v448 = vand.u32 %v447, 4294901760
        %449 = vmatpush1.msra.mxu0 %v448
        %450 = vmatprep.subr.mxu0 0.0
        %451 = vmatpush1.msra.mxu0 0.0
        %452 = vmatprep.subr.mxu0 0.0
        %453 = vmatpush1.msra.mxu0 0.0
        %454 = vmatprep.subr.mxu0 0.0
        %455 = vmatpush1.msra.mxu0 0.0
        %456 = vmatprep.subr.mxu0 0.0
        %457 = vmatpush1.msra.mxu0 0.0
        %458 = vmatprep.subr.mxu0 0.0
        %459 = vmatpush1.msra.mxu0 0.0
        %460 = vmatprep.subr.mxu0 0.0
        %461 = vmatpush1.msra.mxu0 0.0
        %462 = vmatprep.subr.mxu0 0.0
        %463 = vmatpush1.msra.mxu0 0.0
        %464 = vmatprep.subr.mxu0 0.0
        %465 = vmatpush1.msra.mxu0 0.0
        %466 = vmatprep.subr.mxu0 0.0
        %467 = vmatpush1.msra.mxu0 0.0
        %468 = vmatprep.subr.mxu0 0.0
        %469 = vmatpush1.msra.mxu0 0.0
        %470 = vmatprep.subr.mxu0 0.0
        %471 = vmatpush1.msra.mxu0 0.0
        %472 = vmatprep.subr.mxu0 0.0
        %473 = vmatpush1.msra.mxu0 0.0
        %474 = vmatprep.subr.mxu0 0.0
        %475 = vmatpush1.msra.mxu0 0.0
        %476 = vmatprep.subr.mxu0 0.0
        %477 = vmatpush1.msra.mxu0 0.0
        %478 = vmatprep.subr.mxu0 0.0
        %479 = vmatpush1.msra.mxu0 0.0
        %480 = vmatprep.subr.mxu0 0.0
        %481 = vmatpush1.msra.mxu0 0.0
        %482 = vmatprep.subr.mxu0 0.0
        %483 = vmatpush1.msra.mxu0 0.0
        %484 = vmatprep.subr.mxu0 0.0
        %485 = vmatpush1.msra.mxu0 0.0
        %486 = vmatprep.subr.mxu0 0.0
        %487 = vmatpush1.msra.mxu0 0.0
        %488 = vmatprep.subr.mxu0 0.0
        %489 = vmatpush1.msra.mxu0 0.0
        %490 = vmatprep.subr.mxu0 0.0
        %491 = vmatpush1.msra.mxu0 0.0
        %492 = vmatprep.subr.mxu0 0.0
        %493 = vmatpush1.msra.mxu0 0.0
        %494 = vmatprep.subr.mxu0 0.0
        %495 = vmatpush1.msra.mxu0 0.0
        %496 = vmatprep.subr.mxu0 0.0
        %497 = vmatpush1.msra.mxu0 0.0
        %498 = vmatprep.subr.mxu0 0.0
        %499 = vmatpush1.msra.mxu0 0.0
        %500 = vmatprep.subr.mxu0 0.0
        %501 = vmatpush1.msra.mxu0 0.0
        %502 = vmatprep.subr.mxu0 0.0
        %503 = vmatpush1.msra.mxu0 0.0
        %504 = vmatprep.subr.mxu0 0.0
        %505 = vmatpush1.msra.mxu0 0.0
        %506 = vmatprep.subr.mxu0 0.0
        %507 = vmatpush1.msra.mxu0 0.0
        %508 = vmatprep.subr.mxu0 0.0
        %509 = vmatpush1.msra.mxu0 0.0
        %510 = vmatprep.mubr.f32.mxu0 0.0
        %v511 = vand.u32 %v242, 4294901760
        %512 = vmatmul.mubr.f32.gmra.mrb[0].mxu0 %v511
        %v513 = vpop.f32.mrb[0].mxu0
        %v514 = vadd.f32 %v345, %v513
        %v515 = vpop.f32.mrb[0].mxu0
        %v516 = vadd.f32 %v347, %v515
        %517 = vmatprep.mubr.f32.mxu0 0.0
        %v518 = vand.u32 %v245, 4294901760
        %519 = vmatmul.mubr.f32.gmra.mrb[0].mxu0 %v518
        %v520 = vpop.f32.mrb[0].mxu0
        %v521 = vadd.f32 %v356, %v520
        %v522 = vpop.f32.mrb[0].mxu0
        %v523 = vadd.f32 %v358, %v522
        %524 = vmatprep.mubr.f32.mxu0 0.0
        %v525 = vand.u32 %v248, 4294901760
        %526 = vmatmul.mubr.f32.gmra.mrb[0].mxu0 %v525
        %v527 = vpop.f32.mrb[0].mxu0
        %v528 = vadd.f32 %v367, %v527
        %v529 = vpop.f32.mrb[0].mxu0
        %v530 = vadd.f32 %v369, %v529
        %531 = vmatprep.mubr.f32.mxu0 0.0
        %v532 = vand.u32 %v251, 4294901760
        %533 = vmatmul.mubr.f32.gmra.mrb[0].mxu0 %v532
        %v534 = vpop.f32.mrb[0].mxu0
        %v535 = vadd.f32 %v378, %v534
        %v536 = vpop.f32.mrb[0].mxu0
        %v537 = vadd.f32 %v380, %v536
        %538 = vmatprep.mubr.f32.mxu0 0.0
        %v539 = vand.u32 %v254, 4294901760
        %540 = vmatmul.mubr.f32.gmra.mrb[0].mxu0 %v539
        %v541 = vpop.f32.mrb[0].mxu0
        %v542 = vadd.f32 %v389, %v541
        %v543 = vpop.f32.mrb[0].mxu0
        %v544 = vadd.f32 %v391, %v543
        %545 = vmatprep.mubr.f32.mxu0 0.0
        %v546 = vand.u32 %v257, 4294901760
        %547 = vmatmul.mubr.f32.gmra.mrb[0].mxu0 %v546
        %v548 = vpop.f32.mrb[0].mxu0
        %v549 = vadd.f32 %v400, %v548
        %v550 = vpop.f32.mrb[0].mxu0
        %v551 = vadd.f32 %v402, %v550
        %552 = vmatprep.mubr.f32.mxu0 0.0
        %v553 = vand.u32 %v260, 4294901760
        %554 = vmatmul.mubr.f32.gmra.mrb[0].mxu0 %v553
        %v555 = vpop.f32.mrb[0].mxu0
        %v556 = vadd.f32 %v411, %v555
        %v557 = vpop.f32.mrb[0].mxu0
        %v558 = vadd.f32 %v413, %v557
        %559 = vmatprep.mubr.f32.mxu0 0.0
        %v560 = vand.u32 %v263, 4294901760
        %561 = vmatmul.mubr.f32.gmra.mrb[0].mxu0 %v560
        %v562 = vpop.f32.mrb[0].mxu0
        %v563 = vadd.f32 %v422, %v562
        %v564 = vpop.f32.mrb[0].mxu0
        %v565 = vadd.f32 %v424, %v564
        %566 = vdwg.mxu0
        %v567 = vand.u32 %v229, 4294901760
        %v568 = vsub.f32 %v229, %v567
        %569 = vmatprep.subr.mxu0 %v568
        %v570 = vand.u32 %v228, 4294901760
        %v571 = vsub.f32 %v228, %v570
        %572 = vmatpush1.msra.mxu0 %v571
        %v573 = vand.u32 %v267, 4294901760
        %v574 = vsub.f32 %v267, %v573
        %575 = vmatprep.subr.mxu0 %v574
        %v576 = vand.u32 %v267, 4294901760
        %v577 = vsub.f32 %v267, %v576
        %578 = vmatpush1.msra.mxu0 %v577
        %579 = vmatprep.subr.mxu0 0.0
        %580 = vmatpush1.msra.mxu0 0.0
        %581 = vmatprep.subr.mxu0 0.0
        %582 = vmatpush1.msra.mxu0 0.0
        %583 = vmatprep.subr.mxu0 0.0
        %584 = vmatpush1.msra.mxu0 0.0
        %585 = vmatprep.subr.mxu0 0.0
        %586 = vmatpush1.msra.mxu0 0.0
        %587 = vmatprep.subr.mxu0 0.0
        %588 = vmatpush1.msra.mxu0 0.0
        %589 = vmatprep.subr.mxu0 0.0
        %590 = vmatpush1.msra.mxu0 0.0
        %591 = vmatprep.subr.mxu0 0.0
        %592 = vmatpush1.msra.mxu0 0.0
        %593 = vmatprep.subr.mxu0 0.0
        %594 = vmatpush1.msra.mxu0 0.0
        %595 = vmatprep.subr.mxu0 0.0
        %596 = vmatpush1.msra.mxu0 0.0
        %597 = vmatprep.subr.mxu0 0.0
        %598 = vmatpush1.msra.mxu0 0.0
        %599 = vmatprep.subr.mxu0 0.0
        %600 = vmatpush1.msra.mxu0 0.0
        %601 = vmatprep.subr.mxu0 0.0
        %602 = vmatpush1.msra.mxu0 0.0
        %603 = vmatprep.subr.mxu0 0.0
        %604 = vmatpush1.msra.mxu0 0.0
        %605 = vmatprep.subr.mxu0 0.0
        %606 = vmatpush1.msra.mxu0 0.0
        %607 = vmatprep.subr.mxu0 0.0
        %608 = vmatpush1.msra.mxu0 0.0
        %609 = vmatprep.subr.mxu0 0.0
        %610 = vmatpush1.msra.mxu0 0.0
        %611 = vmatprep.subr.mxu0 0.0
        %612 = vmatpush1.msra.mxu0 0.0
        %613 = vmatprep.subr.mxu0 0.0
        %614 = vmatpush1.msra.mxu0 0.0
        %615 = vmatprep.subr.mxu0 0.0
        %616 = vmatpush1.msra.mxu0 0.0
        %617 = vmatprep.subr.mxu0 0.0
        %618 = vmatpush1.msra.mxu0 0.0
        %619 = vmatprep.subr.mxu0 0.0
        %620 = vmatpush1.msra.mxu0 0.0
        %621 = vmatprep.subr.mxu0 0.0
        %622 = vmatpush1.msra.mxu0 0.0
        %623 = vmatprep.subr.mxu0 0.0
        %624 = vmatpush1.msra.mxu0 0.0
        %625 = vmatprep.subr.mxu0 0.0
        %626 = vmatpush1.msra.mxu0 0.0
        %627 = vmatprep.subr.mxu0 0.0
        %628 = vmatpush1.msra.mxu0 0.0
        %629 = vmatprep.subr.mxu0 0.0
        %630 = vmatpush1.msra.mxu0 0.0
        %631 = vmatprep.subr.mxu0 0.0
        %632 = vmatpush1.msra.mxu0 0.0
        %633 = vmatprep.subr.mxu0 0.0
        %634 = vmatpush1.msra.mxu0 0.0
        %635 = vmatprep.subr.mxu0 0.0
        %636 = vmatpush1.msra.mxu0 0.0
        %637 = vmatprep.subr.mxu0 0.0
        %638 = vmatpush1.msra.mxu0 0.0
        %639 = vmatprep.mubr.f32.mxu0 0.0
        %v640 = vand.u32 %v242, 4294901760
        %v641 = vsub.f32 %v242, %v640
        %642 = vmatmul.mubr.f32.gmra.mrb[0].mxu0 %v641
        %v643 = vpop.f32.mrb[0].mxu0
        %v644 = vadd.f32 %v514, %v643
        %v645 = vpop.f32.mrb[0].mxu0
        %v646 = vadd.f32 %v516, %v645
        %647 = vmatprep.mubr.f32.mxu0 0.0
        %v648 = vand.u32 %v245, 4294901760
        %v649 = vsub.f32 %v245, %v648
        %650 = vmatmul.mubr.f32.gmra.mrb[0].mxu0 %v649
        %v651 = vpop.f32.mrb[0].mxu0
        %v652 = vadd.f32 %v521, %v651
        %v653 = vpop.f32.mrb[0].mxu0
        %v654 = vadd.f32 %v523, %v653
        %655 = vmatprep.mubr.f32.mxu0 0.0
        %v656 = vand.u32 %v248, 4294901760
        %v657 = vsub.f32 %v248, %v656
        %658 = vmatmul.mubr.f32.gmra.mrb[0].mxu0 %v657
        %v659 = vpop.f32.mrb[0].mxu0
        %v660 = vadd.f32 %v528, %v659
        %v661 = vpop.f32.mrb[0].mxu0
        %v662 = vadd.f32 %v530, %v661
        %663 = vmatprep.mubr.f32.mxu0 0.0
        %v664 = vand.u32 %v251, 4294901760
        %v665 = vsub.f32 %v251, %v664
        %666 = vmatmul.mubr.f32.gmra.mrb[0].mxu0 %v665
        %v667 = vpop.f32.mrb[0].mxu0
        %v668 = vadd.f32 %v535, %v667
        %v669 = vpop.f32.mrb[0].mxu0
        %v670 = vadd.f32 %v537, %v669
        %671 = vmatprep.mubr.f32.mxu0 0.0
        %v672 = vand.u32 %v254, 4294901760
        %v673 = vsub.f32 %v254, %v672
        %674 = vmatmul.mubr.f32.gmra.mrb[0].mxu0 %v673
        %v675 = vpop.f32.mrb[0].mxu0
        %v676 = vadd.f32 %v542, %v675
        %v677 = vpop.f32.mrb[0].mxu0
        %v678 = vadd.f32 %v544, %v677
        %679 = vmatprep.mubr.f32.mxu0 0.0
        %v680 = vand.u32 %v257, 4294901760
        %v681 = vsub.f32 %v257, %v680
        %682 = vmatmul.mubr.f32.gmra.mrb[0].mxu0 %v681
        %v683 = vpop.f32.mrb[0].mxu0
        %v684 = vadd.f32 %v549, %v683
        %v685 = vpop.f32.mrb[0].mxu0
        %v686 = vadd.f32 %v551, %v685
        %687 = vmatprep.mubr.f32.mxu0 0.0
        %v688 = vand.u32 %v260, 4294901760
        %v689 = vsub.f32 %v260, %v688
        %690 = vmatmul.mubr.f32.gmra.mrb[0].mxu0 %v689
        %v691 = vpop.f32.mrb[0].mxu0
        %v692 = vadd.f32 %v556, %v691
        %v693 = vpop.f32.mrb[0].mxu0
        %v694 = vadd.f32 %v558, %v693
        %695 = vmatprep.mubr.f32.mxu0 0.0
        %v696 = vand.u32 %v263, 4294901760
        %v697 = vsub.f32 %v263, %v696
        %698 = vmatmul.mubr.f32.gmra.mrb[0].mxu0 %v697
        %v699 = vpop.f32.mrb[0].mxu0
        %v700 = vadd.f32 %v563, %v699
        %v701 = vpop.f32.mrb[0].mxu0
        %v702 = vadd.f32 %v565, %v701
        %703 = vdwg.mxu0
        %v704 = vand.u32 %v229, 4294901760
        %705 = vmatprep.subr.mxu0 %v704
        %v706 = vand.u32 %v228, 4294901760
        %707 = vmatpush1.msra.mxu0 %v706
        %v708 = vand.u32 %v267, 4294901760
        %709 = vmatprep.subr.mxu0 %v708
        %v710 = vand.u32 %v267, 4294901760
        %711 = vmatpush1.msra.mxu0 %v710
        %712 = vmatprep.subr.mxu0 0.0
        %713 = vmatpush1.msra.mxu0 0.0
        %714 = vmatprep.subr.mxu0 0.0
        %715 = vmatpush1.msra.mxu0 0.0
        %716 = vmatprep.subr.mxu0 0.0
        %717 = vmatpush1.msra.mxu0 0.0
        %718 = vmatprep.subr.mxu0 0.0
        %719 = vmatpush1.msra.mxu0 0.0
        %720 = vmatprep.subr.mxu0 0.0
        %721 = vmatpush1.msra.mxu0 0.0
        %722 = vmatprep.subr.mxu0 0.0
        %723 = vmatpush1.msra.mxu0 0.0
        %724 = vmatprep.subr.mxu0 0.0
        %725 = vmatpush1.msra.mxu0 0.0
        %726 = vmatprep.subr.mxu0 0.0
        %727 = vmatpush1.msra.mxu0 0.0
        %728 = vmatprep.subr.mxu0 0.0
        %729 = vmatpush1.msra.mxu0 0.0
        %730 = vmatprep.subr.mxu0 0.0
        %731 = vmatpush1.msra.mxu0 0.0
        %732 = vmatprep.subr.mxu0 0.0
        %733 = vmatpush1.msra.mxu0 0.0
        %734 = vmatprep.subr.mxu0 0.0
        %735 = vmatpush1.msra.mxu0 0.0
        %736 = vmatprep.subr.mxu0 0.0
        %737 = vmatpush1.msra.mxu0 0.0
        %738 = vmatprep.subr.mxu0 0.0
        %739 = vmatpush1.msra.mxu0 0.0
        %740 = vmatprep.subr.mxu0 0.0
        %741 = vmatpush1.msra.mxu0 0.0
        %742 = vmatprep.subr.mxu0 0.0
        %743 = vmatpush1.msra.mxu0 0.0
        %744 = vmatprep.subr.mxu0 0.0
        %745 = vmatpush1.msra.mxu0 0.0
        %746 = vmatprep.subr.mxu0 0.0
        %747 = vmatpush1.msra.mxu0 0.0
        %748 = vmatprep.subr.mxu0 0.0
        %749 = vmatpush1.msra.mxu0 0.0
        %750 = vmatprep.subr.mxu0 0.0
        %751 = vmatpush1.msra.mxu0 0.0
        %752 = vmatprep.subr.mxu0 0.0
        %753 = vmatpush1.msra.mxu0 0.0
        %754 = vmatprep.subr.mxu0 0.0
        %755 = vmatpush1.msra.mxu0 0.0
        %756 = vmatprep.subr.mxu0 0.0
        %757 = vmatpush1.msra.mxu0 0.0
        %758 = vmatprep.subr.mxu0 0.0
        %759 = vmatpush1.msra.mxu0 0.0
        %760 = vmatprep.subr.mxu0 0.0
        %761 = vmatpush1.msra.mxu0 0.0
        %762 = vmatprep.subr.mxu0 0.0
        %763 = vmatpush1.msra.mxu0 0.0
        %764 = vmatprep.subr.mxu0 0.0
        %765 = vmatpush1.msra.mxu0 0.0
        %766 = vmatprep.subr.mxu0 0.0
        %767 = vmatpush1.msra.mxu0 0.0
        %768 = vmatprep.subr.mxu0 0.0
        %769 = vmatpush1.msra.mxu0 0.0
        %770 = vmatprep.subr.mxu0 0.0
        %771 = vmatpush1.msra.mxu0 0.0
        %772 = vmatprep.mubr.f32.mxu0 0.0
        %v773 = vand.u32 %v242, 4294901760
        %v774 = vsub.f32 %v242, %v773
        %v775 = vand.u32 %v774, 4294901760
        %776 = vmatmul.mubr.f32.gmra.mrb[0].mxu0 %v775
        %v777 = vpop.f32.mrb[0].mxu0
        %v778 = vadd.f32 %v644, %v777
        %v779 = vpop.f32.mrb[0].mxu0
        %v780 = vadd.f32 %v646, %v779
        %781 = vmatprep.mubr.f32.mxu0 0.0
        %v782 = vand.u32 %v245, 4294901760
        %v783 = vsub.f32 %v245, %v782
        %v784 = vand.u32 %v783, 4294901760
        %785 = vmatmul.mubr.f32.gmra.mrb[0].mxu0 %v784
        %v786 = vpop.f32.mrb[0].mxu0
        %v787 = vadd.f32 %v652, %v786
        %v788 = vpop.f32.mrb[0].mxu0
        %v789 = vadd.f32 %v654, %v788
        %790 = vmatprep.mubr.f32.mxu0 0.0
        %v791 = vand.u32 %v248, 4294901760
        %v792 = vsub.f32 %v248, %v791
        %v793 = vand.u32 %v792, 4294901760
        %794 = vmatmul.mubr.f32.gmra.mrb[0].mxu0 %v793
        %v795 = vpop.f32.mrb[0].mxu0
        %v796 = vadd.f32 %v660, %v795
        %v797 = vpop.f32.mrb[0].mxu0
        %v798 = vadd.f32 %v662, %v797
        %799 = vmatprep.mubr.f32.mxu0 0.0
        %v800 = vand.u32 %v251, 4294901760
        %v801 = vsub.f32 %v251, %v800
        %v802 = vand.u32 %v801, 4294901760
        %803 = vmatmul.mubr.f32.gmra.mrb[0].mxu0 %v802
        %v804 = vpop.f32.mrb[0].mxu0
        %v805 = vadd.f32 %v668, %v804
        %v806 = vpop.f32.mrb[0].mxu0
        %v807 = vadd.f32 %v670, %v806
        %808 = vmatprep.mubr.f32.mxu0 0.0
        %v809 = vand.u32 %v254, 4294901760
        %v810 = vsub.f32 %v254, %v809
        %v811 = vand.u32 %v810, 4294901760
        %812 = vmatmul.mubr.f32.gmra.mrb[0].mxu0 %v811
        %v813 = vpop.f32.mrb[0].mxu0
        %v814 = vadd.f32 %v676, %v813
        %v815 = vpop.f32.mrb[0].mxu0
        %v816 = vadd.f32 %v678, %v815
        %817 = vmatprep.mubr.f32.mxu0 0.0
        %v818 = vand.u32 %v257, 4294901760
        %v819 = vsub.f32 %v257, %v818
        %v820 = vand.u32 %v819, 4294901760
        %821 = vmatmul.mubr.f32.gmra.mrb[0].mxu0 %v820
        %v822 = vpop.f32.mrb[0].mxu0
        %v823 = vadd.f32 %v684, %v822
        %v824 = vpop.f32.mrb[0].mxu0
        %v825 = vadd.f32 %v686, %v824
        %826 = vmatprep.mubr.f32.mxu0 0.0
        %v827 = vand.u32 %v260, 4294901760
        %v828 = vsub.f32 %v260, %v827
        %v829 = vand.u32 %v828, 4294901760
        %830 = vmatmul.mubr.f32.gmra.mrb[0].mxu0 %v829
        %v831 = vpop.f32.mrb[0].mxu0
        %v832 = vadd.f32 %v692, %v831
        %v833 = vpop.f32.mrb[0].mxu0
        %v834 = vadd.f32 %v694, %v833
        %835 = vmatprep.mubr.f32.mxu0 0.0
        %v836 = vand.u32 %v263, 4294901760
        %v837 = vsub.f32 %v263, %v836
        %v838 = vand.u32 %v837, 4294901760
        %839 = vmatmul.mubr.f32.gmra.mrb[0].mxu0 %v838
        %v840 = vpop.f32.mrb[0].mxu0
        %v841 = vadd.f32 %v700, %v840
        %v842 = vpop.f32.mrb[0].mxu0
        %v843 = vadd.f32 %v702, %v842
        %844 = vdwg.mxu0
        %v845 = vand.u32 %v229, 4294901760
        %v846 = vsub.f32 %v229, %v845
        %v847 = vand.u32 %v846, 4294901760
        %848 = vmatprep.subr.mxu0 %v847
        %v849 = vand.u32 %v228, 4294901760
        %v850 = vsub.f32 %v228, %v849
        %v851 = vand.u32 %v850, 4294901760
        %852 = vmatpush1.msra.mxu0 %v851
        %v853 = vand.u32 %v267, 4294901760
        %v854 = vsub.f32 %v267, %v853
        %v855 = vand.u32 %v854, 4294901760
        %856 = vmatprep.subr.mxu0 %v855
        %v857 = vand.u32 %v267, 4294901760
        %v858 = vsub.f32 %v267, %v857
        %v859 = vand.u32 %v858, 4294901760
        %860 = vmatpush1.msra.mxu0 %v859
        %861 = vmatprep.subr.mxu0 0.0
        %862 = vmatpush1.msra.mxu0 0.0
        %863 = vmatprep.subr.mxu0 0.0
        %864 = vmatpush1.msra.mxu0 0.0
        %865 = vmatprep.subr.mxu0 0.0
        %866 = vmatpush1.msra.mxu0 0.0
        %867 = vmatprep.subr.mxu0 0.0
        %868 = vmatpush1.msra.mxu0 0.0
        %869 = vmatprep.subr.mxu0 0.0
        %870 = vmatpush1.msra.mxu0 0.0
        %871 = vmatprep.subr.mxu0 0.0
        %872 = vmatpush1.msra.mxu0 0.0
        %873 = vmatprep.subr.mxu0 0.0
        %874 = vmatpush1.msra.mxu0 0.0
        %875 = vmatprep.subr.mxu0 0.0
        %876 = vmatpush1.msra.mxu0 0.0
        %877 = vmatprep.subr.mxu0 0.0
        %878 = vmatpush1.msra.mxu0 0.0
        %879 = vmatprep.subr.mxu0 0.0
        %880 = vmatpush1.msra.mxu0 0.0
        %881 = vmatprep.subr.mxu0 0.0
        %882 = vmatpush1.msra.mxu0 0.0
        %883 = vmatprep.subr.mxu0 0.0
        %884 = vmatpush1.msra.mxu0 0.0
        %885 = vmatprep.subr.mxu0 0.0
        %886 = vmatpush1.msra.mxu0 0.0
        %887 = vmatprep.subr.mxu0 0.0
        %888 = vmatpush1.msra.mxu0 0.0
        %889 = vmatprep.subr.mxu0 0.0
        %890 = vmatpush1.msra.mxu0 0.0
        %891 = vmatprep.subr.mxu0 0.0
        %892 = vmatpush1.msra.mxu0 0.0
        %893 = vmatprep.subr.mxu0 0.0
        %894 = vmatpush1.msra.mxu0 0.0
        %895 = vmatprep.subr.mxu0 0.0
        %896 = vmatpush1.msra.mxu0 0.0
        %897 = vmatprep.subr.mxu0 0.0
        %898 = vmatpush1.msra.mxu0 0.0
        %899 = vmatprep.subr.mxu0 0.0
        %900 = vmatpush1.msra.mxu0 0.0
        %901 = vmatprep.subr.mxu0 0.0
        %902 = vmatpush1.msra.mxu0 0.0
        %903 = vmatprep.subr.mxu0 0.0
        %904 = vmatpush1.msra.mxu0 0.0
        %905 = vmatprep.subr.mxu0 0.0
        %906 = vmatpush1.msra.mxu0 0.0
        %907 = vmatprep.subr.mxu0 0.0
        %908 = vmatpush1.msra.mxu0 0.0
        %909 = vmatprep.subr.mxu0 0.0
        %910 = vmatpush1.msra.mxu0 0.0
        %911 = vmatprep.subr.mxu0 0.0
        %912 = vmatpush1.msra.mxu0 0.0
        %913 = vmatprep.subr.mxu0 0.0
        %914 = vmatpush1.msra.mxu0 0.0
        %915 = vmatprep.subr.mxu0 0.0
        %916 = vmatpush1.msra.mxu0 0.0
        %917 = vmatprep.subr.mxu0 0.0
        %918 = vmatpush1.msra.mxu0 0.0
        %919 = vmatprep.subr.mxu0 0.0
        %920 = vmatpush1.msra.mxu0 0.0
        %921 = vmatprep.mubr.f32.mxu0 0.0
        %v922 = vand.u32 %v242, 4294901760
        %923 = vmatmul.mubr.f32.gmra.mrb[0].mxu0 %v922
        %v924 = vpop.f32.mrb[0].mxu0
        %v925 = vadd.f32 %v778, %v924
        %v926 = vpop.f32.mrb[0].mxu0
        %v927 = vadd.f32 %v780, %v926
        %928 = vmatprep.mubr.f32.mxu0 0.0
        %v929 = vand.u32 %v245, 4294901760
        %930 = vmatmul.mubr.f32.gmra.mrb[0].mxu0 %v929
        %v931 = vpop.f32.mrb[0].mxu0
        %v932 = vadd.f32 %v787, %v931
        %v933 = vpop.f32.mrb[0].mxu0
        %v934 = vadd.f32 %v789, %v933
        %935 = vmatprep.mubr.f32.mxu0 0.0
        %v936 = vand.u32 %v248, 4294901760
        %937 = vmatmul.mubr.f32.gmra.mrb[0].mxu0 %v936
        %v938 = vpop.f32.mrb[0].mxu0
        %v939 = vadd.f32 %v796, %v938
        %v940 = vpop.f32.mrb[0].mxu0
        %v941 = vadd.f32 %v798, %v940
        %942 = vmatprep.mubr.f32.mxu0 0.0
        %v943 = vand.u32 %v251, 4294901760
        %944 = vmatmul.mubr.f32.gmra.mrb[0].mxu0 %v943
        %v945 = vpop.f32.mrb[0].mxu0
        %v946 = vadd.f32 %v805, %v945
        %v947 = vpop.f32.mrb[0].mxu0
        %v948 = vadd.f32 %v807, %v947
        %949 = vmatprep.mubr.f32.mxu0 0.0
        %v950 = vand.u32 %v254, 4294901760
        %951 = vmatmul.mubr.f32.gmra.mrb[0].mxu0 %v950
        %v952 = vpop.f32.mrb[0].mxu0
        %v953 = vadd.f32 %v814, %v952
        %v954 = vpop.f32.mrb[0].mxu0
        %v955 = vadd.f32 %v816, %v954
        %956 = vmatprep.mubr.f32.mxu0 0.0
        %v957 = vand.u32 %v257, 4294901760
        %958 = vmatmul.mubr.f32.gmra.mrb[0].mxu0 %v957
        %v959 = vpop.f32.mrb[0].mxu0
        %v960 = vadd.f32 %v823, %v959
        %v961 = vpop.f32.mrb[0].mxu0
        %v962 = vadd.f32 %v825, %v961
        %963 = vmatprep.mubr.f32.mxu0 0.0
        %v964 = vand.u32 %v260, 4294901760
        %965 = vmatmul.mubr.f32.gmra.mrb[0].mxu0 %v964
        %v966 = vpop.f32.mrb[0].mxu0
        %v967 = vadd.f32 %v832, %v966
        %v968 = vpop.f32.mrb[0].mxu0
        %v969 = vadd.f32 %v834, %v968
        %970 = vmatprep.mubr.f32.mxu0 0.0
        %v971 = vand.u32 %v263, 4294901760
        %972 = vmatmul.mubr.f32.gmra.mrb[0].mxu0 %v971
        %v973 = vpop.f32.mrb[0].mxu0
        %v974 = vadd.f32 %v841, %v973
        %v975 = vpop.f32.mrb[0].mxu0
        %v976 = vadd.f32 %v843, %v975
        %977 = vdwg.mxu0
        %v978 = vand.u32 %v229, 4294901760
        %979 = vmatprep.subr.mxu0 %v978
        %v980 = vand.u32 %v228, 4294901760
        %981 = vmatpush1.msra.mxu0 %v980
        %v982 = vand.u32 %v267, 4294901760
        %983 = vmatprep.subr.mxu0 %v982
        %v984 = vand.u32 %v267, 4294901760
        %985 = vmatpush1.msra.mxu0 %v984
        %986 = vmatprep.subr.mxu0 0.0
        %987 = vmatpush1.msra.mxu0 0.0
        %988 = vmatprep.subr.mxu0 0.0
        %989 = vmatpush1.msra.mxu0 0.0
        %990 = vmatprep.subr.mxu0 0.0
        %991 = vmatpush1.msra.mxu0 0.0
        %992 = vmatprep.subr.mxu0 0.0
        %993 = vmatpush1.msra.mxu0 0.0
        %994 = vmatprep.subr.mxu0 0.0
        %995 = vmatpush1.msra.mxu0 0.0
        %996 = vmatprep.subr.mxu0 0.0
        %997 = vmatpush1.msra.mxu0 0.0
        %998 = vmatprep.subr.mxu0 0.0
        %999 = vmatpush1.msra.mxu0 0.0
        %1000 = vmatprep.subr.mxu0 0.0
        %1001 = vmatpush1.msra.mxu0 0.0
        %1002 = vmatprep.subr.mxu0 0.0
        %1003 = vmatpush1.msra.mxu0 0.0
        %1004 = vmatprep.subr.mxu0 0.0
        %1005 = vmatpush1.msra.mxu0 0.0
        %1006 = vmatprep.subr.mxu0 0.0
        %1007 = vmatpush1.msra.mxu0 0.0
        %1008 = vmatprep.subr.mxu0 0.0
        %1009 = vmatpush1.msra.mxu0 0.0
        %1010 = vmatprep.subr.mxu0 0.0
        %1011 = vmatpush1.msra.mxu0 0.0
        %1012 = vmatprep.subr.mxu0 0.0
        %1013 = vmatpush1.msra.mxu0 0.0
        %1014 = vmatprep.subr.mxu0 0.0
        %1015 = vmatpush1.msra.mxu0 0.0
        %1016 = vmatprep.subr.mxu0 0.0
        %1017 = vmatpush1.msra.mxu0 0.0
        %1018 = vmatprep.subr.mxu0 0.0
        %1019 = vmatpush1.msra.mxu0 0.0
        %1020 = vmatprep.subr.mxu0 0.0
        %1021 = vmatpush1.msra.mxu0 0.0
        %1022 = vmatprep.subr.mxu0 0.0
        %1023 = vmatpush1.msra.mxu0 0.0
        %1024 = vmatprep.subr.mxu0 0.0
        %1025 = vmatpush1.msra.mxu0 0.0
        %1026 = vmatprep.subr.mxu0 0.0
        %1027 = vmatpush1.msra.mxu0 0.0
        %1028 = vmatprep.subr.mxu0 0.0
        %1029 = vmatpush1.msra.mxu0 0.0
        %1030 = vmatprep.subr.mxu0 0.0
        %1031 = vmatpush1.msra.mxu0 0.0
        %1032 = vmatprep.subr.mxu0 0.0
        %1033 = vmatpush1.msra.mxu0 0.0
        %1034 = vmatprep.subr.mxu0 0.0
        %1035 = vmatpush1.msra.mxu0 0.0
        %1036 = vmatprep.subr.mxu0 0.0
        %1037 = vmatpush1.msra.mxu0 0.0
        %1038 = vmatprep.subr.mxu0 0.0
        %1039 = vmatpush1.msra.mxu0 0.0
        %1040 = vmatprep.subr.mxu0 0.0
        %1041 = vmatpush1.msra.mxu0 0.0
        %1042 = vmatprep.subr.mxu0 0.0
        %1043 = vmatpush1.msra.mxu0 0.0
        %1044 = vmatprep.subr.mxu0 0.0
        %1045 = vmatpush1.msra.mxu0 0.0
        %1046 = vmatprep.mubr.f32.mxu0 0.0
        %v1047 = vand.u32 %v242, 4294901760
        %1048 = vmatmul.mubr.f32.gmra.mrb[0].mxu0 %v1047
        %v1049 = vpop.f32.mrb[0].mxu0
        %v1050 = vadd.f32 %v925, %v1049
        %v1051 = vpop.f32.mrb[0].mxu0
        %v1052 = vadd.f32 %v927, %v1051
        %1053 = vmatprep.mubr.f32.mxu0 0.0
        %v1054 = vand.u32 %v245, 4294901760
        %1055 = vmatmul.mubr.f32.gmra.mrb[0].mxu0 %v1054
        %v1056 = vpop.f32.mrb[0].mxu0
        %v1057 = vadd.f32 %v932, %v1056
        %v1058 = vpop.f32.mrb[0].mxu0
        %v1059 = vadd.f32 %v934, %v1058
        %1060 = vmatprep.mubr.f32.mxu0 0.0
        %v1061 = vand.u32 %v248, 4294901760
        %1062 = vmatmul.mubr.f32.gmra.mrb[0].mxu0 %v1061
        %v1063 = vpop.f32.mrb[0].mxu0
        %v1064 = vadd.f32 %v939, %v1063
        %v1065 = vpop.f32.mrb[0].mxu0
        %v1066 = vadd.f32 %v941, %v1065
        %1067 = vmatprep.mubr.f32.mxu0 0.0
        %v1068 = vand.u32 %v251, 4294901760
        %1069 = vmatmul.mubr.f32.gmra.mrb[0].mxu0 %v1068
        %v1070 = vpop.f32.mrb[0].mxu0
        %v1071 = vadd.f32 %v946, %v1070
        %v1072 = vpop.f32.mrb[0].mxu0
        %v1073 = vadd.f32 %v948, %v1072
        %1074 = vmatprep.mubr.f32.mxu0 0.0
        %v1075 = vand.u32 %v254, 4294901760
        %1076 = vmatmul.mubr.f32.gmra.mrb[0].mxu0 %v1075
        %v1077 = vpop.f32.mrb[0].mxu0
        %v1078 = vadd.f32 %v953, %v1077
        %v1079 = vpop.f32.mrb[0].mxu0
        %v1080 = vadd.f32 %v955, %v1079
        %1081 = vmatprep.mubr.f32.mxu0 0.0
        %v1082 = vand.u32 %v257, 4294901760
        %1083 = vmatmul.mubr.f32.gmra.mrb[0].mxu0 %v1082
        %v1084 = vpop.f32.mrb[0].mxu0
        %v1085 = vadd.f32 %v960, %v1084
        %v1086 = vpop.f32.mrb[0].mxu0
        %v1087 = vadd.f32 %v962, %v1086
        %1088 = vmatprep.mubr.f32.mxu0 0.0
        %v1089 = vand.u32 %v260, 4294901760
        %1090 = vmatmul.mubr.f32.gmra.mrb[0].mxu0 %v1089
        %v1091 = vpop.f32.mrb[0].mxu0
        %v1092 = vadd.f32 %v967, %v1091
        %v1093 = vpop.f32.mrb[0].mxu0
        %v1094 = vadd.f32 %v969, %v1093
        %1095 = vmatprep.mubr.f32.mxu0 0.0
        %v1096 = vand.u32 %v263, 4294901760
        %1097 = vmatmul.mubr.f32.gmra.mrb[0].mxu0 %v1096
        %v1098 = vpop.f32.mrb[0].mxu0
        %v1099 = vadd.f32 %v974, %v1098
        %v1100 = vpop.f32.mrb[0].mxu0
        %v1101 = vadd.f32 %v976, %v1100
        %1102 = vdwg.mxu0
        %v1103 = vand.u32 %v231, 4294901760
        %1104 = vmatprep.subr.mxu0 %v1103
        %v1105 = vand.u32 %v230, 4294901760
        %1106 = vmatpush1.msra.mxu0 %v1105
        %v1107 = vand.u32 %v267, 4294901760
        %1108 = vmatprep.subr.mxu0 %v1107
        %v1109 = vand.u32 %v267, 4294901760
        %1110 = vmatpush1.msra.mxu0 %v1109
        %1111 = vmatprep.subr.mxu0 0.0
        %1112 = vmatpush1.msra.mxu0 0.0
        %1113 = vmatprep.subr.mxu0 0.0
        %1114 = vmatpush1.msra.mxu0 0.0
        %1115 = vmatprep.subr.mxu0 0.0
        %1116 = vmatpush1.msra.mxu0 0.0
        %1117 = vmatprep.subr.mxu0 0.0
        %1118 = vmatpush1.msra.mxu0 0.0
        %1119 = vmatprep.subr.mxu0 0.0
        %1120 = vmatpush1.msra.mxu0 0.0
        %1121 = vmatprep.subr.mxu0 0.0
        %1122 = vmatpush1.msra.mxu0 0.0
        %1123 = vmatprep.subr.mxu0 0.0
        %1124 = vmatpush1.msra.mxu0 0.0
        %1125 = vmatprep.subr.mxu0 0.0
        %1126 = vmatpush1.msra.mxu0 0.0
        %1127 = vmatprep.subr.mxu0 0.0
        %1128 = vmatpush1.msra.mxu0 0.0
        %1129 = vmatprep.subr.mxu0 0.0
        %1130 = vmatpush1.msra.mxu0 0.0
        %1131 = vmatprep.subr.mxu0 0.0
        %1132 = vmatpush1.msra.mxu0 0.0
        %1133 = vmatprep.subr.mxu0 0.0
        %1134 = vmatpush1.msra.mxu0 0.0
        %1135 = vmatprep.subr.mxu0 0.0
        %1136 = vmatpush1.msra.mxu0 0.0
        %1137 = vmatprep.subr.mxu0 0.0
        %1138 = vmatpush1.msra.mxu0 0.0
        %1139 = vmatprep.subr.mxu0 0.0
        %1140 = vmatpush1.msra.mxu0 0.0
        %1141 = vmatprep.subr.mxu0 0.0
        %1142 = vmatpush1.msra.mxu0 0.0
        %1143 = vmatprep.subr.mxu0 0.0
        %1144 = vmatpush1.msra.mxu0 0.0
        %1145 = vmatprep.subr.mxu0 0.0
        %1146 = vmatpush1.msra.mxu0 0.0
        %1147 = vmatprep.subr.mxu0 0.0
        %1148 = vmatpush1.msra.mxu0 0.0
        %1149 = vmatprep.subr.mxu0 0.0
        %1150 = vmatpush1.msra.mxu0 0.0
        %1151 = vmatprep.subr.mxu0 0.0
        %1152 = vmatpush1.msra.mxu0 0.0
        %1153 = vmatprep.subr.mxu0 0.0
        %1154 = vmatpush1.msra.mxu0 0.0
        %1155 = vmatprep.subr.mxu0 0.0
        %1156 = vmatpush1.msra.mxu0 0.0
        %1157 = vmatprep.subr.mxu0 0.0
        %1158 = vmatpush1.msra.mxu0 0.0
        %1159 = vmatprep.subr.mxu0 0.0
        %1160 = vmatpush1.msra.mxu0 0.0
        %1161 = vmatprep.subr.mxu0 0.0
        %1162 = vmatpush1.msra.mxu0 0.0
        %1163 = vmatprep.subr.mxu0 0.0
        %1164 = vmatpush1.msra.mxu0 0.0
        %1165 = vmatprep.subr.mxu0 0.0
        %1166 = vmatpush1.msra.mxu0 0.0
        %1167 = vmatprep.subr.mxu0 0.0
        %1168 = vmatpush1.msra.mxu0 0.0
        %1169 = vmatprep.subr.mxu0 0.0
        %1170 = vmatpush1.msra.mxu0 0.0
        %1171 = vmatprep.mubr.f32.mxu0 0.0
        %v1172 = vand.u32 %v242, 4294901760
        %v1173 = vsub.f32 %v242, %v1172
        %v1174 = vand.u32 %v1173, 4294901760
        %v1175 = vsub.f32 %v1173, %v1174
        %v1176 = vand.u32 %v1175, 4294901760
        %1177 = vmatmul.mubr.f32.gmra.mrb[0].mxu0 %v1176
        %v1178 = vpop.f32.mrb[0].mxu0
        %v1179 = vadd.f32 0.0, %v1178
        %v1180 = vpop.f32.mrb[0].mxu0
        %v1181 = vadd.f32 0.0, %v1180
        %1182 = vmatprep.mubr.f32.mxu0 0.0
        %v1183 = vand.u32 %v245, 4294901760
        %v1184 = vsub.f32 %v245, %v1183
        %v1185 = vand.u32 %v1184, 4294901760
        %v1186 = vsub.f32 %v1184, %v1185
        %v1187 = vand.u32 %v1186, 4294901760
        %1188 = vmatmul.mubr.f32.gmra.mrb[0].mxu0 %v1187
        %v1189 = vpop.f32.mrb[0].mxu0
        %v1190 = vadd.f32 0.0, %v1189
        %v1191 = vpop.f32.mrb[0].mxu0
        %v1192 = vadd.f32 0.0, %v1191
        %1193 = vmatprep.mubr.f32.mxu0 0.0
        %v1194 = vand.u32 %v248, 4294901760
        %v1195 = vsub.f32 %v248, %v1194
        %v1196 = vand.u32 %v1195, 4294901760
        %v1197 = vsub.f32 %v1195, %v1196
        %v1198 = vand.u32 %v1197, 4294901760
        %1199 = vmatmul.mubr.f32.gmra.mrb[0].mxu0 %v1198
        %v1200 = vpop.f32.mrb[0].mxu0
        %v1201 = vadd.f32 0.0, %v1200
        %v1202 = vpop.f32.mrb[0].mxu0
        %v1203 = vadd.f32 0.0, %v1202
        %1204 = vmatprep.mubr.f32.mxu0 0.0
        %v1205 = vand.u32 %v251, 4294901760
        %v1206 = vsub.f32 %v251, %v1205
        %v1207 = vand.u32 %v1206, 4294901760
        %v1208 = vsub.f32 %v1206, %v1207
        %v1209 = vand.u32 %v1208, 4294901760
        %1210 = vmatmul.mubr.f32.gmra.mrb[0].mxu0 %v1209
        %v1211 = vpop.f32.mrb[0].mxu0
        %v1212 = vadd.f32 0.0, %v1211
        %v1213 = vpop.f32.mrb[0].mxu0
        %v1214 = vadd.f32 0.0, %v1213
        %1215 = vmatprep.mubr.f32.mxu0 0.0
        %v1216 = vand.u32 %v254, 4294901760
        %v1217 = vsub.f32 %v254, %v1216
        %v1218 = vand.u32 %v1217, 4294901760
        %v1219 = vsub.f32 %v1217, %v1218
        %v1220 = vand.u32 %v1219, 4294901760
        %1221 = vmatmul.mubr.f32.gmra.mrb[0].mxu0 %v1220
        %v1222 = vpop.f32.mrb[0].mxu0
        %v1223 = vadd.f32 0.0, %v1222
        %v1224 = vpop.f32.mrb[0].mxu0
        %v1225 = vadd.f32 0.0, %v1224
        %1226 = vmatprep.mubr.f32.mxu0 0.0
        %v1227 = vand.u32 %v257, 4294901760
        %v1228 = vsub.f32 %v257, %v1227
        %v1229 = vand.u32 %v1228, 4294901760
        %v1230 = vsub.f32 %v1228, %v1229
        %v1231 = vand.u32 %v1230, 4294901760
        %1232 = vmatmul.mubr.f32.gmra.mrb[0].mxu0 %v1231
        %v1233 = vpop.f32.mrb[0].mxu0
        %v1234 = vadd.f32 0.0, %v1233
        %v1235 = vpop.f32.mrb[0].mxu0
        %v1236 = vadd.f32 0.0, %v1235
        %1237 = vmatprep.mubr.f32.mxu0 0.0
        %v1238 = vand.u32 %v260, 4294901760
        %v1239 = vsub.f32 %v260, %v1238
        %v1240 = vand.u32 %v1239, 4294901760
        %v1241 = vsub.f32 %v1239, %v1240
        %v1242 = vand.u32 %v1241, 4294901760
        %1243 = vmatmul.mubr.f32.gmra.mrb[0].mxu0 %v1242
        %v1244 = vpop.f32.mrb[0].mxu0
        %v1245 = vadd.f32 0.0, %v1244
        %v1246 = vpop.f32.mrb[0].mxu0
        %v1247 = vadd.f32 0.0, %v1246
        %1248 = vmatprep.mubr.f32.mxu0 0.0
        %v1249 = vand.u32 %v263, 4294901760
        %v1250 = vsub.f32 %v263, %v1249
        %v1251 = vand.u32 %v1250, 4294901760
        %v1252 = vsub.f32 %v1250, %v1251
        %v1253 = vand.u32 %v1252, 4294901760
        %1254 = vmatmul.mubr.f32.gmra.mrb[0].mxu0 %v1253
        %v1255 = vpop.f32.mrb[0].mxu0
        %v1256 = vadd.f32 0.0, %v1255
        %v1257 = vpop.f32.mrb[0].mxu0
        %v1258 = vadd.f32 0.0, %v1257
        %1259 = vdwg.mxu0
        %v1260 = vand.u32 %v231, 4294901760
        %v1261 = vsub.f32 %v231, %v1260
        %v1262 = vand.u32 %v1261, 4294901760
        %v1263 = vsub.f32 %v1261, %v1262
        %v1264 = vand.u32 %v1263, 4294901760
        %1265 = vmatprep.subr.mxu0 %v1264
        %v1266 = vand.u32 %v230, 4294901760
        %v1267 = vsub.f32 %v230, %v1266
        %v1268 = vand.u32 %v1267, 4294901760
        %v1269 = vsub.f32 %v1267, %v1268
        %v1270 = vand.u32 %v1269, 4294901760
        %1271 = vmatpush1.msra.mxu0 %v1270
        %v1272 = vand.u32 %v267, 4294901760
        %v1273 = vsub.f32 %v267, %v1272
        %v1274 = vand.u32 %v1273, 4294901760
        %v1275 = vsub.f32 %v1273, %v1274
        %v1276 = vand.u32 %v1275, 4294901760
        %1277 = vmatprep.subr.mxu0 %v1276
        %v1278 = vand.u32 %v267, 4294901760
        %v1279 = vsub.f32 %v267, %v1278
        %v1280 = vand.u32 %v1279, 4294901760
        %v1281 = vsub.f32 %v1279, %v1280
        %v1282 = vand.u32 %v1281, 4294901760
        %1283 = vmatpush1.msra.mxu0 %v1282
        %1284 = vmatprep.subr.mxu0 0.0
        %1285 = vmatpush1.msra.mxu0 0.0
        %1286 = vmatprep.subr.mxu0 0.0
        %1287 = vmatpush1.msra.mxu0 0.0
        %1288 = vmatprep.subr.mxu0 0.0
        %1289 = vmatpush1.msra.mxu0 0.0
        %1290 = vmatprep.subr.mxu0 0.0
        %1291 = vmatpush1.msra.mxu0 0.0
        %1292 = vmatprep.subr.mxu0 0.0
        %1293 = vmatpush1.msra.mxu0 0.0
        %1294 = vmatprep.subr.mxu0 0.0
        %1295 = vmatpush1.msra.mxu0 0.0
        %1296 = vmatprep.subr.mxu0 0.0
        %1297 = vmatpush1.msra.mxu0 0.0
        %1298 = vmatprep.subr.mxu0 0.0
        %1299 = vmatpush1.msra.mxu0 0.0
        %1300 = vmatprep.subr.mxu0 0.0
        %1301 = vmatpush1.msra.mxu0 0.0
        %1302 = vmatprep.subr.mxu0 0.0
        %1303 = vmatpush1.msra.mxu0 0.0
        %1304 = vmatprep.subr.mxu0 0.0
        %1305 = vmatpush1.msra.mxu0 0.0
        %1306 = vmatprep.subr.mxu0 0.0
        %1307 = vmatpush1.msra.mxu0 0.0
        %1308 = vmatprep.subr.mxu0 0.0
        %1309 = vmatpush1.msra.mxu0 0.0
        %1310 = vmatprep.subr.mxu0 0.0
        %1311 = vmatpush1.msra.mxu0 0.0
        %1312 = vmatprep.subr.mxu0 0.0
        %1313 = vmatpush1.msra.mxu0 0.0
        %1314 = vmatprep.subr.mxu0 0.0
        %1315 = vmatpush1.msra.mxu0 0.0
        %1316 = vmatprep.subr.mxu0 0.0
        %1317 = vmatpush1.msra.mxu0 0.0
        %1318 = vmatprep.subr.mxu0 0.0
        %1319 = vmatpush1.msra.mxu0 0.0
        %1320 = vmatprep.subr.mxu0 0.0
        %1321 = vmatpush1.msra.mxu0 0.0
        %1322 = vmatprep.subr.mxu0 0.0
        %1323 = vmatpush1.msra.mxu0 0.0
        %1324 = vmatprep.subr.mxu0 0.0
        %1325 = vmatpush1.msra.mxu0 0.0
        %1326 = vmatprep.subr.mxu0 0.0
        %1327 = vmatpush1.msra.mxu0 0.0
        %1328 = vmatprep.subr.mxu0 0.0
        %1329 = vmatpush1.msra.mxu0 0.0
        %1330 = vmatprep.subr.mxu0 0.0
        %1331 = vmatpush1.msra.mxu0 0.0
        %1332 = vmatprep.subr.mxu0 0.0
        %1333 = vmatpush1.msra.mxu0 0.0
        %1334 = vmatprep.subr.mxu0 0.0
        %1335 = vmatpush1.msra.mxu0 0.0
        %1336 = vmatprep.subr.mxu0 0.0
        %1337 = vmatpush1.msra.mxu0 0.0
        %1338 = vmatprep.subr.mxu0 0.0
        %1339 = vmatpush1.msra.mxu0 0.0
        %1340 = vmatprep.subr.mxu0 0.0
        %1341 = vmatpush1.msra.mxu0 0.0
        %1342 = vmatprep.subr.mxu0 0.0
        %1343 = vmatpush1.msra.mxu0 0.0
        %1344 = vmatprep.mubr.f32.mxu0 0.0
        %v1345 = vand.u32 %v242, 4294901760
        %1346 = vmatmul.mubr.f32.gmra.mrb[0].mxu0 %v1345
        %v1347 = vpop.f32.mrb[0].mxu0
        %v1348 = vadd.f32 %v1179, %v1347
        %v1349 = vpop.f32.mrb[0].mxu0
        %v1350 = vadd.f32 %v1181, %v1349
        %1351 = vmatprep.mubr.f32.mxu0 0.0
        %v1352 = vand.u32 %v245, 4294901760
        %1353 = vmatmul.mubr.f32.gmra.mrb[0].mxu0 %v1352
        %v1354 = vpop.f32.mrb[0].mxu0
        %v1355 = vadd.f32 %v1190, %v1354
        %v1356 = vpop.f32.mrb[0].mxu0
        %v1357 = vadd.f32 %v1192, %v1356
        %1358 = vmatprep.mubr.f32.mxu0 0.0
        %v1359 = vand.u32 %v248, 4294901760
        %1360 = vmatmul.mubr.f32.gmra.mrb[0].mxu0 %v1359
        %v1361 = vpop.f32.mrb[0].mxu0
        %v1362 = vadd.f32 %v1201, %v1361
        %v1363 = vpop.f32.mrb[0].mxu0
        %v1364 = vadd.f32 %v1203, %v1363
        %1365 = vmatprep.mubr.f32.mxu0 0.0
        %v1366 = vand.u32 %v251, 4294901760
        %1367 = vmatmul.mubr.f32.gmra.mrb[0].mxu0 %v1366
        %v1368 = vpop.f32.mrb[0].mxu0
        %v1369 = vadd.f32 %v1212, %v1368
        %v1370 = vpop.f32.mrb[0].mxu0
        %v1371 = vadd.f32 %v1214, %v1370
        %1372 = vmatprep.mubr.f32.mxu0 0.0
        %v1373 = vand.u32 %v254, 4294901760
        %1374 = vmatmul.mubr.f32.gmra.mrb[0].mxu0 %v1373
        %v1375 = vpop.f32.mrb[0].mxu0
        %v1376 = vadd.f32 %v1223, %v1375
        %v1377 = vpop.f32.mrb[0].mxu0
        %v1378 = vadd.f32 %v1225, %v1377
        %1379 = vmatprep.mubr.f32.mxu0 0.0
        %v1380 = vand.u32 %v257, 4294901760
        %1381 = vmatmul.mubr.f32.gmra.mrb[0].mxu0 %v1380
        %v1382 = vpop.f32.mrb[0].mxu0
        %v1383 = vadd.f32 %v1234, %v1382
        %v1384 = vpop.f32.mrb[0].mxu0
        %v1385 = vadd.f32 %v1236, %v1384
        %1386 = vmatprep.mubr.f32.mxu0 0.0
        %v1387 = vand.u32 %v260, 4294901760
        %1388 = vmatmul.mubr.f32.gmra.mrb[0].mxu0 %v1387
        %v1389 = vpop.f32.mrb[0].mxu0
        %v1390 = vadd.f32 %v1245, %v1389
        %v1391 = vpop.f32.mrb[0].mxu0
        %v1392 = vadd.f32 %v1247, %v1391
        %1393 = vmatprep.mubr.f32.mxu0 0.0
        %v1394 = vand.u32 %v263, 4294901760
        %1395 = vmatmul.mubr.f32.gmra.mrb[0].mxu0 %v1394
        %v1396 = vpop.f32.mrb[0].mxu0
        %v1397 = vadd.f32 %v1256, %v1396
        %v1398 = vpop.f32.mrb[0].mxu0
        %v1399 = vadd.f32 %v1258, %v1398
        %1400 = vdwg.mxu0
        %v1401 = vand.u32 %v231, 4294901760
        %v1402 = vsub.f32 %v231, %v1401
        %1403 = vmatprep.subr.mxu0 %v1402
        %v1404 = vand.u32 %v230, 4294901760
        %v1405 = vsub.f32 %v230, %v1404
        %1406 = vmatpush1.msra.mxu0 %v1405
        %v1407 = vand.u32 %v267, 4294901760
        %v1408 = vsub.f32 %v267, %v1407
        %1409 = vmatprep.subr.mxu0 %v1408
        %v1410 = vand.u32 %v267, 4294901760
        %v1411 = vsub.f32 %v267, %v1410
        %1412 = vmatpush1.msra.mxu0 %v1411
        %1413 = vmatprep.subr.mxu0 0.0
        %1414 = vmatpush1.msra.mxu0 0.0
        %1415 = vmatprep.subr.mxu0 0.0
        %1416 = vmatpush1.msra.mxu0 0.0
        %1417 = vmatprep.subr.mxu0 0.0
        %1418 = vmatpush1.msra.mxu0 0.0
        %1419 = vmatprep.subr.mxu0 0.0
        %1420 = vmatpush1.msra.mxu0 0.0
        %1421 = vmatprep.subr.mxu0 0.0
        %1422 = vmatpush1.msra.mxu0 0.0
        %1423 = vmatprep.subr.mxu0 0.0
        %1424 = vmatpush1.msra.mxu0 0.0
        %1425 = vmatprep.subr.mxu0 0.0
        %1426 = vmatpush1.msra.mxu0 0.0
        %1427 = vmatprep.subr.mxu0 0.0
        %1428 = vmatpush1.msra.mxu0 0.0
        %1429 = vmatprep.subr.mxu0 0.0
        %1430 = vmatpush1.msra.mxu0 0.0
        %1431 = vmatprep.subr.mxu0 0.0
        %1432 = vmatpush1.msra.mxu0 0.0
        %1433 = vmatprep.subr.mxu0 0.0
        %1434 = vmatpush1.msra.mxu0 0.0
        %1435 = vmatprep.subr.mxu0 0.0
        %1436 = vmatpush1.msra.mxu0 0.0
        %1437 = vmatprep.subr.mxu0 0.0
        %1438 = vmatpush1.msra.mxu0 0.0
        %1439 = vmatprep.subr.mxu0 0.0
        %1440 = vmatpush1.msra.mxu0 0.0
        %1441 = vmatprep.subr.mxu0 0.0
        %1442 = vmatpush1.msra.mxu0 0.0
        %1443 = vmatprep.subr.mxu0 0.0
        %1444 = vmatpush1.msra.mxu0 0.0
        %1445 = vmatprep.subr.mxu0 0.0
        %1446 = vmatpush1.msra.mxu0 0.0
        %1447 = vmatprep.subr.mxu0 0.0
        %1448 = vmatpush1.msra.mxu0 0.0
        %1449 = vmatprep.subr.mxu0 0.0
        %1450 = vmatpush1.msra.mxu0 0.0
        %1451 = vmatprep.subr.mxu0 0.0
        %1452 = vmatpush1.msra.mxu0 0.0
        %1453 = vmatprep.subr.mxu0 0.0
        %1454 = vmatpush1.msra.mxu0 0.0
        %1455 = vmatprep.subr.mxu0 0.0
        %1456 = vmatpush1.msra.mxu0 0.0
        %1457 = vmatprep.subr.mxu0 0.0
        %1458 = vmatpush1.msra.mxu0 0.0
        %1459 = vmatprep.subr.mxu0 0.0
        %1460 = vmatpush1.msra.mxu0 0.0
        %1461 = vmatprep.subr.mxu0 0.0
        %1462 = vmatpush1.msra.mxu0 0.0
        %1463 = vmatprep.subr.mxu0 0.0
        %1464 = vmatpush1.msra.mxu0 0.0
        %1465 = vmatprep.subr.mxu0 0.0
        %1466 = vmatpush1.msra.mxu0 0.0
        %1467 = vmatprep.subr.mxu0 0.0
        %1468 = vmatpush1.msra.mxu0 0.0
        %1469 = vmatprep.subr.mxu0 0.0
        %1470 = vmatpush1.msra.mxu0 0.0
        %1471 = vmatprep.subr.mxu0 0.0
        %1472 = vmatpush1.msra.mxu0 0.0
        %1473 = vmatprep.mubr.f32.mxu0 0.0
        %v1474 = vand.u32 %v242, 4294901760
        %v1475 = vsub.f32 %v242, %v1474
        %1476 = vmatmul.mubr.f32.gmra.mrb[0].mxu0 %v1475
        %v1477 = vpop.f32.mrb[0].mxu0
        %v1478 = vadd.f32 %v1348, %v1477
        %v1479 = vpop.f32.mrb[0].mxu0
        %v1480 = vadd.f32 %v1350, %v1479
        %1481 = vmatprep.mubr.f32.mxu0 0.0
        %v1482 = vand.u32 %v245, 4294901760
        %v1483 = vsub.f32 %v245, %v1482
        %1484 = vmatmul.mubr.f32.gmra.mrb[0].mxu0 %v1483
        %v1485 = vpop.f32.mrb[0].mxu0
        %v1486 = vadd.f32 %v1355, %v1485
        %v1487 = vpop.f32.mrb[0].mxu0
        %v1488 = vadd.f32 %v1357, %v1487
        %1489 = vmatprep.mubr.f32.mxu0 0.0
        %v1490 = vand.u32 %v248, 4294901760
        %v1491 = vsub.f32 %v248, %v1490
        %1492 = vmatmul.mubr.f32.gmra.mrb[0].mxu0 %v1491
        %v1493 = vpop.f32.mrb[0].mxu0
        %v1494 = vadd.f32 %v1362, %v1493
        %v1495 = vpop.f32.mrb[0].mxu0
        %v1496 = vadd.f32 %v1364, %v1495
        %1497 = vmatprep.mubr.f32.mxu0 0.0
        %v1498 = vand.u32 %v251, 4294901760
        %v1499 = vsub.f32 %v251, %v1498
        %1500 = vmatmul.mubr.f32.gmra.mrb[0].mxu0 %v1499
        %v1501 = vpop.f32.mrb[0].mxu0
        %v1502 = vadd.f32 %v1369, %v1501
        %v1503 = vpop.f32.mrb[0].mxu0
        %v1504 = vadd.f32 %v1371, %v1503
        %1505 = vmatprep.mubr.f32.mxu0 0.0
        %v1506 = vand.u32 %v254, 4294901760
        %v1507 = vsub.f32 %v254, %v1506
        %1508 = vmatmul.mubr.f32.gmra.mrb[0].mxu0 %v1507
        %v1509 = vpop.f32.mrb[0].mxu0
        %v1510 = vadd.f32 %v1376, %v1509
        %v1511 = vpop.f32.mrb[0].mxu0
        %v1512 = vadd.f32 %v1378, %v1511
        %1513 = vmatprep.mubr.f32.mxu0 0.0
        %v1514 = vand.u32 %v257, 4294901760
        %v1515 = vsub.f32 %v257, %v1514
        %1516 = vmatmul.mubr.f32.gmra.mrb[0].mxu0 %v1515
        %v1517 = vpop.f32.mrb[0].mxu0
        %v1518 = vadd.f32 %v1383, %v1517
        %v1519 = vpop.f32.mrb[0].mxu0
        %v1520 = vadd.f32 %v1385, %v1519
        %1521 = vmatprep.mubr.f32.mxu0 0.0
        %v1522 = vand.u32 %v260, 4294901760
        %v1523 = vsub.f32 %v260, %v1522
        %1524 = vmatmul.mubr.f32.gmra.mrb[0].mxu0 %v1523
        %v1525 = vpop.f32.mrb[0].mxu0
        %v1526 = vadd.f32 %v1390, %v1525
        %v1527 = vpop.f32.mrb[0].mxu0
        %v1528 = vadd.f32 %v1392, %v1527
        %1529 = vmatprep.mubr.f32.mxu0 0.0
        %v1530 = vand.u32 %v263, 4294901760
        %v1531 = vsub.f32 %v263, %v1530
        %1532 = vmatmul.mubr.f32.gmra.mrb[0].mxu0 %v1531
        %v1533 = vpop.f32.mrb[0].mxu0
        %v1534 = vadd.f32 %v1397, %v1533
        %v1535 = vpop.f32.mrb[0].mxu0
        %v1536 = vadd.f32 %v1399, %v1535
        %1537 = vdwg.mxu0
        %v1538 = vand.u32 %v231, 4294901760
        %1539 = vmatprep.subr.mxu0 %v1538
        %v1540 = vand.u32 %v230, 4294901760
        %1541 = vmatpush1.msra.mxu0 %v1540
        %v1542 = vand.u32 %v267, 4294901760
        %1543 = vmatprep.subr.mxu0 %v1542
        %v1544 = vand.u32 %v267, 4294901760
        %1545 = vmatpush1.msra.mxu0 %v1544
        %1546 = vmatprep.subr.mxu0 0.0
        %1547 = vmatpush1.msra.mxu0 0.0
        %1548 = vmatprep.subr.mxu0 0.0
        %1549 = vmatpush1.msra.mxu0 0.0
        %1550 = vmatprep.subr.mxu0 0.0
        %1551 = vmatpush1.msra.mxu0 0.0
        %1552 = vmatprep.subr.mxu0 0.0
        %1553 = vmatpush1.msra.mxu0 0.0
        %1554 = vmatprep.subr.mxu0 0.0
        %1555 = vmatpush1.msra.mxu0 0.0
        %1556 = vmatprep.subr.mxu0 0.0
        %1557 = vmatpush1.msra.mxu0 0.0
        %1558 = vmatprep.subr.mxu0 0.0
        %1559 = vmatpush1.msra.mxu0 0.0
        %1560 = vmatprep.subr.mxu0 0.0
        %1561 = vmatpush1.msra.mxu0 0.0
        %1562 = vmatprep.subr.mxu0 0.0
        %1563 = vmatpush1.msra.mxu0 0.0
        %1564 = vmatprep.subr.mxu0 0.0
        %1565 = vmatpush1.msra.mxu0 0.0
        %1566 = vmatprep.subr.mxu0 0.0
        %1567 = vmatpush1.msra.mxu0 0.0
        %1568 = vmatprep.subr.mxu0 0.0
        %1569 = vmatpush1.msra.mxu0 0.0
        %1570 = vmatprep.subr.mxu0 0.0
        %1571 = vmatpush1.msra.mxu0 0.0
        %1572 = vmatprep.subr.mxu0 0.0
        %1573 = vmatpush1.msra.mxu0 0.0
        %1574 = vmatprep.subr.mxu0 0.0
        %1575 = vmatpush1.msra.mxu0 0.0
        %1576 = vmatprep.subr.mxu0 0.0
        %1577 = vmatpush1.msra.mxu0 0.0
        %1578 = vmatprep.subr.mxu0 0.0
        %1579 = vmatpush1.msra.mxu0 0.0
        %1580 = vmatprep.subr.mxu0 0.0
        %1581 = vmatpush1.msra.mxu0 0.0
        %1582 = vmatprep.subr.mxu0 0.0
        %1583 = vmatpush1.msra.mxu0 0.0
        %1584 = vmatprep.subr.mxu0 0.0
        %1585 = vmatpush1.msra.mxu0 0.0
        %1586 = vmatprep.subr.mxu0 0.0
        %1587 = vmatpush1.msra.mxu0 0.0
        %1588 = vmatprep.subr.mxu0 0.0
        %1589 = vmatpush1.msra.mxu0 0.0
        %1590 = vmatprep.subr.mxu0 0.0
        %1591 = vmatpush1.msra.mxu0 0.0
        %1592 = vmatprep.subr.mxu0 0.0
        %1593 = vmatpush1.msra.mxu0 0.0
        %1594 = vmatprep.subr.mxu0 0.0
        %1595 = vmatpush1.msra.mxu0 0.0
        %1596 = vmatprep.subr.mxu0 0.0
        %1597 = vmatpush1.msra.mxu0 0.0
        %1598 = vmatprep.subr.mxu0 0.0
        %1599 = vmatpush1.msra.mxu0 0.0
        %1600 = vmatprep.subr.mxu0 0.0
        %1601 = vmatpush1.msra.mxu0 0.0
        %1602 = vmatprep.subr.mxu0 0.0
        %1603 = vmatpush1.msra.mxu0 0.0
        %1604 = vmatprep.subr.mxu0 0.0
        %1605 = vmatpush1.msra.mxu0 0.0
        %1606 = vmatprep.mubr.f32.mxu0 0.0
        %v1607 = vand.u32 %v242, 4294901760
        %v1608 = vsub.f32 %v242, %v1607
        %v1609 = vand.u32 %v1608, 4294901760
        %1610 = vmatmul.mubr.f32.gmra.mrb[0].mxu0 %v1609
        %v1611 = vpop.f32.mrb[0].mxu0
        %v1612 = vadd.f32 %v1478, %v1611
        %v1613 = vpop.f32.mrb[0].mxu0
        %v1614 = vadd.f32 %v1480, %v1613
        %1615 = vmatprep.mubr.f32.mxu0 0.0
        %v1616 = vand.u32 %v245, 4294901760
        %v1617 = vsub.f32 %v245, %v1616
        %v1618 = vand.u32 %v1617, 4294901760
        %1619 = vmatmul.mubr.f32.gmra.mrb[0].mxu0 %v1618
        %v1620 = vpop.f32.mrb[0].mxu0
        %v1621 = vadd.f32 %v1486, %v1620
        %v1622 = vpop.f32.mrb[0].mxu0
        %v1623 = vadd.f32 %v1488, %v1622
        %1624 = vmatprep.mubr.f32.mxu0 0.0
        %v1625 = vand.u32 %v248, 4294901760
        %v1626 = vsub.f32 %v248, %v1625
        %v1627 = vand.u32 %v1626, 4294901760
        %1628 = vmatmul.mubr.f32.gmra.mrb[0].mxu0 %v1627
        %v1629 = vpop.f32.mrb[0].mxu0
        %v1630 = vadd.f32 %v1494, %v1629
        %v1631 = vpop.f32.mrb[0].mxu0
        %v1632 = vadd.f32 %v1496, %v1631
        %1633 = vmatprep.mubr.f32.mxu0 0.0
        %v1634 = vand.u32 %v251, 4294901760
        %v1635 = vsub.f32 %v251, %v1634
        %v1636 = vand.u32 %v1635, 4294901760
        %1637 = vmatmul.mubr.f32.gmra.mrb[0].mxu0 %v1636
        %v1638 = vpop.f32.mrb[0].mxu0
        %v1639 = vadd.f32 %v1502, %v1638
        %v1640 = vpop.f32.mrb[0].mxu0
        %v1641 = vadd.f32 %v1504, %v1640
        %1642 = vmatprep.mubr.f32.mxu0 0.0
        %v1643 = vand.u32 %v254, 4294901760
        %v1644 = vsub.f32 %v254, %v1643
        %v1645 = vand.u32 %v1644, 4294901760
        %1646 = vmatmul.mubr.f32.gmra.mrb[0].mxu0 %v1645
        %v1647 = vpop.f32.mrb[0].mxu0
        %v1648 = vadd.f32 %v1510, %v1647
        %v1649 = vpop.f32.mrb[0].mxu0
        %v1650 = vadd.f32 %v1512, %v1649
        %1651 = vmatprep.mubr.f32.mxu0 0.0
        %v1652 = vand.u32 %v257, 4294901760
        %v1653 = vsub.f32 %v257, %v1652
        %v1654 = vand.u32 %v1653, 4294901760
        %1655 = vmatmul.mubr.f32.gmra.mrb[0].mxu0 %v1654
        %v1656 = vpop.f32.mrb[0].mxu0
        %v1657 = vadd.f32 %v1518, %v1656
        %v1658 = vpop.f32.mrb[0].mxu0
        %v1659 = vadd.f32 %v1520, %v1658
        %1660 = vmatprep.mubr.f32.mxu0 0.0
        %v1661 = vand.u32 %v260, 4294901760
        %v1662 = vsub.f32 %v260, %v1661
        %v1663 = vand.u32 %v1662, 4294901760
        %1664 = vmatmul.mubr.f32.gmra.mrb[0].mxu0 %v1663
        %v1665 = vpop.f32.mrb[0].mxu0
        %v1666 = vadd.f32 %v1526, %v1665
        %v1667 = vpop.f32.mrb[0].mxu0
        %v1668 = vadd.f32 %v1528, %v1667
        %1669 = vmatprep.mubr.f32.mxu0 0.0
        %v1670 = vand.u32 %v263, 4294901760
        %v1671 = vsub.f32 %v263, %v1670
        %v1672 = vand.u32 %v1671, 4294901760
        %1673 = vmatmul.mubr.f32.gmra.mrb[0].mxu0 %v1672
        %v1674 = vpop.f32.mrb[0].mxu0
        %v1675 = vadd.f32 %v1534, %v1674
        %v1676 = vpop.f32.mrb[0].mxu0
        %v1677 = vadd.f32 %v1536, %v1676
        %1678 = vdwg.mxu0
        %v1679 = vand.u32 %v231, 4294901760
        %v1680 = vsub.f32 %v231, %v1679
        %v1681 = vand.u32 %v1680, 4294901760
        %1682 = vmatprep.subr.mxu0 %v1681
        %v1683 = vand.u32 %v230, 4294901760
        %v1684 = vsub.f32 %v230, %v1683
        %v1685 = vand.u32 %v1684, 4294901760
        %1686 = vmatpush1.msra.mxu0 %v1685
        %v1687 = vand.u32 %v267, 4294901760
        %v1688 = vsub.f32 %v267, %v1687
        %v1689 = vand.u32 %v1688, 4294901760
        %1690 = vmatprep.subr.mxu0 %v1689
        %v1691 = vand.u32 %v267, 4294901760
        %v1692 = vsub.f32 %v267, %v1691
        %v1693 = vand.u32 %v1692, 4294901760
        %1694 = vmatpush1.msra.mxu0 %v1693
        %1695 = vmatprep.subr.mxu0 0.0
        %1696 = vmatpush1.msra.mxu0 0.0
        %1697 = vmatprep.subr.mxu0 0.0
        %1698 = vmatpush1.msra.mxu0 0.0
        %1699 = vmatprep.subr.mxu0 0.0
        %1700 = vmatpush1.msra.mxu0 0.0
        %1701 = vmatprep.subr.mxu0 0.0
        %1702 = vmatpush1.msra.mxu0 0.0
        %1703 = vmatprep.subr.mxu0 0.0
        %1704 = vmatpush1.msra.mxu0 0.0
        %1705 = vmatprep.subr.mxu0 0.0
        %1706 = vmatpush1.msra.mxu0 0.0
        %1707 = vmatprep.subr.mxu0 0.0
        %1708 = vmatpush1.msra.mxu0 0.0
        %1709 = vmatprep.subr.mxu0 0.0
        %1710 = vmatpush1.msra.mxu0 0.0
        %1711 = vmatprep.subr.mxu0 0.0
        %1712 = vmatpush1.msra.mxu0 0.0
        %1713 = vmatprep.subr.mxu0 0.0
        %1714 = vmatpush1.msra.mxu0 0.0
        %1715 = vmatprep.subr.mxu0 0.0
        %1716 = vmatpush1.msra.mxu0 0.0
        %1717 = vmatprep.subr.mxu0 0.0
        %1718 = vmatpush1.msra.mxu0 0.0
        %1719 = vmatprep.subr.mxu0 0.0
        %1720 = vmatpush1.msra.mxu0 0.0
        %1721 = vmatprep.subr.mxu0 0.0
        %1722 = vmatpush1.msra.mxu0 0.0
        %1723 = vmatprep.subr.mxu0 0.0
        %1724 = vmatpush1.msra.mxu0 0.0
        %1725 = vmatprep.subr.mxu0 0.0
        %1726 = vmatpush1.msra.mxu0 0.0
        %1727 = vmatprep.subr.mxu0 0.0
        %1728 = vmatpush1.msra.mxu0 0.0
        %1729 = vmatprep.subr.mxu0 0.0
        %1730 = vmatpush1.msra.mxu0 0.0
        %1731 = vmatprep.subr.mxu0 0.0
        %1732 = vmatpush1.msra.mxu0 0.0
        %1733 = vmatprep.subr.mxu0 0.0
        %1734 = vmatpush1.msra.mxu0 0.0
        %1735 = vmatprep.subr.mxu0 0.0
        %1736 = vmatpush1.msra.mxu0 0.0
        %1737 = vmatprep.subr.mxu0 0.0
        %1738 = vmatpush1.msra.mxu0 0.0
        %1739 = vmatprep.subr.mxu0 0.0
        %1740 = vmatpush1.msra.mxu0 0.0
        %1741 = vmatprep.subr.mxu0 0.0
        %1742 = vmatpush1.msra.mxu0 0.0
        %1743 = vmatprep.subr.mxu0 0.0
        %1744 = vmatpush1.msra.mxu0 0.0
        %1745 = vmatprep.subr.mxu0 0.0
        %1746 = vmatpush1.msra.mxu0 0.0
        %1747 = vmatprep.subr.mxu0 0.0
        %1748 = vmatpush1.msra.mxu0 0.0
        %1749 = vmatprep.subr.mxu0 0.0
        %1750 = vmatpush1.msra.mxu0 0.0
        %1751 = vmatprep.subr.mxu0 0.0
        %1752 = vmatpush1.msra.mxu0 0.0
        %1753 = vmatprep.subr.mxu0 0.0
        %1754 = vmatpush1.msra.mxu0 0.0
        %1755 = vmatprep.mubr.f32.mxu0 0.0
        %v1756 = vand.u32 %v242, 4294901760
        %1757 = vmatmul.mubr.f32.gmra.mrb[0].mxu0 %v1756
        %v1758 = vpop.f32.mrb[0].mxu0
        %v1759 = vadd.f32 %v1612, %v1758
        %v1760 = vpop.f32.mrb[0].mxu0
        %v1761 = vadd.f32 %v1614, %v1760
        %1762 = vmatprep.mubr.f32.mxu0 0.0
        %v1763 = vand.u32 %v245, 4294901760
        %1764 = vmatmul.mubr.f32.gmra.mrb[0].mxu0 %v1763
        %v1765 = vpop.f32.mrb[0].mxu0
        %v1766 = vadd.f32 %v1621, %v1765
        %v1767 = vpop.f32.mrb[0].mxu0
        %v1768 = vadd.f32 %v1623, %v1767
        %1769 = vmatprep.mubr.f32.mxu0 0.0
        %v1770 = vand.u32 %v248, 4294901760
        %1771 = vmatmul.mubr.f32.gmra.mrb[0].mxu0 %v1770
        %v1772 = vpop.f32.mrb[0].mxu0
        %v1773 = vadd.f32 %v1630, %v1772
        %v1774 = vpop.f32.mrb[0].mxu0
        %v1775 = vadd.f32 %v1632, %v1774
        %1776 = vmatprep.mubr.f32.mxu0 0.0
        %v1777 = vand.u32 %v251, 4294901760
        %1778 = vmatmul.mubr.f32.gmra.mrb[0].mxu0 %v1777
        %v1779 = vpop.f32.mrb[0].mxu0
        %v1780 = vadd.f32 %v1639, %v1779
        %v1781 = vpop.f32.mrb[0].mxu0
        %v1782 = vadd.f32 %v1641, %v1781
        %1783 = vmatprep.mubr.f32.mxu0 0.0
        %v1784 = vand.u32 %v254, 4294901760
        %1785 = vmatmul.mubr.f32.gmra.mrb[0].mxu0 %v1784
        %v1786 = vpop.f32.mrb[0].mxu0
        %v1787 = vadd.f32 %v1648, %v1786
        %v1788 = vpop.f32.mrb[0].mxu0
        %v1789 = vadd.f32 %v1650, %v1788
        %1790 = vmatprep.mubr.f32.mxu0 0.0
        %v1791 = vand.u32 %v257, 4294901760
        %1792 = vmatmul.mubr.f32.gmra.mrb[0].mxu0 %v1791
        %v1793 = vpop.f32.mrb[0].mxu0
        %v1794 = vadd.f32 %v1657, %v1793
        %v1795 = vpop.f32.mrb[0].mxu0
        %v1796 = vadd.f32 %v1659, %v1795
        %1797 = vmatprep.mubr.f32.mxu0 0.0
        %v1798 = vand.u32 %v260, 4294901760
        %1799 = vmatmul.mubr.f32.gmra.mrb[0].mxu0 %v1798
        %v1800 = vpop.f32.mrb[0].mxu0
        %v1801 = vadd.f32 %v1666, %v1800
        %v1802 = vpop.f32.mrb[0].mxu0
        %v1803 = vadd.f32 %v1668, %v1802
        %1804 = vmatprep.mubr.f32.mxu0 0.0
        %v1805 = vand.u32 %v263, 4294901760
        %1806 = vmatmul.mubr.f32.gmra.mrb[0].mxu0 %v1805
        %v1807 = vpop.f32.mrb[0].mxu0
        %v1808 = vadd.f32 %v1675, %v1807
        %v1809 = vpop.f32.mrb[0].mxu0
        %v1810 = vadd.f32 %v1677, %v1809
        %1811 = vdwg.mxu0
        %v1812 = vand.u32 %v231, 4294901760
        %1813 = vmatprep.subr.mxu0 %v1812
        %v1814 = vand.u32 %v230, 4294901760
        %1815 = vmatpush1.msra.mxu0 %v1814
        %v1816 = vand.u32 %v267, 4294901760
        %1817 = vmatprep.subr.mxu0 %v1816
        %v1818 = vand.u32 %v267, 4294901760
        %1819 = vmatpush1.msra.mxu0 %v1818
        %1820 = vmatprep.subr.mxu0 0.0
        %1821 = vmatpush1.msra.mxu0 0.0
        %1822 = vmatprep.subr.mxu0 0.0
        %1823 = vmatpush1.msra.mxu0 0.0
        %1824 = vmatprep.subr.mxu0 0.0
        %1825 = vmatpush1.msra.mxu0 0.0
        %1826 = vmatprep.subr.mxu0 0.0
        %1827 = vmatpush1.msra.mxu0 0.0
        %1828 = vmatprep.subr.mxu0 0.0
        %1829 = vmatpush1.msra.mxu0 0.0
        %1830 = vmatprep.subr.mxu0 0.0
        %1831 = vmatpush1.msra.mxu0 0.0
        %1832 = vmatprep.subr.mxu0 0.0
        %1833 = vmatpush1.msra.mxu0 0.0
        %1834 = vmatprep.subr.mxu0 0.0
        %1835 = vmatpush1.msra.mxu0 0.0
        %1836 = vmatprep.subr.mxu0 0.0
        %1837 = vmatpush1.msra.mxu0 0.0
        %1838 = vmatprep.subr.mxu0 0.0
        %1839 = vmatpush1.msra.mxu0 0.0
        %1840 = vmatprep.subr.mxu0 0.0
        %1841 = vmatpush1.msra.mxu0 0.0
        %1842 = vmatprep.subr.mxu0 0.0
        %1843 = vmatpush1.msra.mxu0 0.0
        %1844 = vmatprep.subr.mxu0 0.0
        %1845 = vmatpush1.msra.mxu0 0.0
        %1846 = vmatprep.subr.mxu0 0.0
        %1847 = vmatpush1.msra.mxu0 0.0
        %1848 = vmatprep.subr.mxu0 0.0
        %1849 = vmatpush1.msra.mxu0 0.0
        %1850 = vmatprep.subr.mxu0 0.0
        %1851 = vmatpush1.msra.mxu0 0.0
        %1852 = vmatprep.subr.mxu0 0.0
        %1853 = vmatpush1.msra.mxu0 0.0
        %1854 = vmatprep.subr.mxu0 0.0
        %1855 = vmatpush1.msra.mxu0 0.0
        %1856 = vmatprep.subr.mxu0 0.0
        %1857 = vmatpush1.msra.mxu0 0.0
        %1858 = vmatprep.subr.mxu0 0.0
        %1859 = vmatpush1.msra.mxu0 0.0
        %1860 = vmatprep.subr.mxu0 0.0
        %1861 = vmatpush1.msra.mxu0 0.0
        %1862 = vmatprep.subr.mxu0 0.0
        %1863 = vmatpush1.msra.mxu0 0.0
        %1864 = vmatprep.subr.mxu0 0.0
        %1865 = vmatpush1.msra.mxu0 0.0
        %1866 = vmatprep.subr.mxu0 0.0
        %1867 = vmatpush1.msra.mxu0 0.0
        %1868 = vmatprep.subr.mxu0 0.0
        %1869 = vmatpush1.msra.mxu0 0.0
        %1870 = vmatprep.subr.mxu0 0.0
        %1871 = vmatpush1.msra.mxu0 0.0
        %1872 = vmatprep.subr.mxu0 0.0
        %1873 = vmatpush1.msra.mxu0 0.0
        %1874 = vmatprep.subr.mxu0 0.0
        %1875 = vmatpush1.msra.mxu0 0.0
        %1876 = vmatprep.subr.mxu0 0.0
        %1877 = vmatpush1.msra.mxu0 0.0
        %1878 = vmatprep.subr.mxu0 0.0
        %1879 = vmatpush1.msra.mxu0 0.0
        %1880 = vmatprep.mubr.f32.mxu0 0.0
        %v1881 = vand.u32 %v242, 4294901760
        %1882 = vmatmul.mubr.f32.gmra.mrb[0].mxu0 %v1881
        %v1883 = vpop.f32.mrb[0].mxu0
        %v1884 = vadd.f32 %v1759, %v1883
        %v1885 = vpop.f32.mrb[0].mxu0
        %v1886 = vadd.f32 %v1761, %v1885
        %1887 = vmatprep.mubr.f32.mxu0 0.0
        %v1888 = vand.u32 %v245, 4294901760
        %1889 = vmatmul.mubr.f32.gmra.mrb[0].mxu0 %v1888
        %v1890 = vpop.f32.mrb[0].mxu0
        %v1891 = vadd.f32 %v1766, %v1890
        %v1892 = vpop.f32.mrb[0].mxu0
        %v1893 = vadd.f32 %v1768, %v1892
        %1894 = vmatprep.mubr.f32.mxu0 0.0
        %v1895 = vand.u32 %v248, 4294901760
        %1896 = vmatmul.mubr.f32.gmra.mrb[0].mxu0 %v1895
        %v1897 = vpop.f32.mrb[0].mxu0
        %v1898 = vadd.f32 %v1773, %v1897
        %v1899 = vpop.f32.mrb[0].mxu0
        %v1900 = vadd.f32 %v1775, %v1899
        %1901 = vmatprep.mubr.f32.mxu0 0.0
        %v1902 = vand.u32 %v251, 4294901760
        %1903 = vmatmul.mubr.f32.gmra.mrb[0].mxu0 %v1902
        %v1904 = vpop.f32.mrb[0].mxu0
        %v1905 = vadd.f32 %v1780, %v1904
        %v1906 = vpop.f32.mrb[0].mxu0
        %v1907 = vadd.f32 %v1782, %v1906
        %1908 = vmatprep.mubr.f32.mxu0 0.0
        %v1909 = vand.u32 %v254, 4294901760
        %1910 = vmatmul.mubr.f32.gmra.mrb[0].mxu0 %v1909
        %v1911 = vpop.f32.mrb[0].mxu0
        %v1912 = vadd.f32 %v1787, %v1911
        %v1913 = vpop.f32.mrb[0].mxu0
        %v1914 = vadd.f32 %v1789, %v1913
        %1915 = vmatprep.mubr.f32.mxu0 0.0
        %v1916 = vand.u32 %v257, 4294901760
        %1917 = vmatmul.mubr.f32.gmra.mrb[0].mxu0 %v1916
        %v1918 = vpop.f32.mrb[0].mxu0
        %v1919 = vadd.f32 %v1794, %v1918
        %v1920 = vpop.f32.mrb[0].mxu0
        %v1921 = vadd.f32 %v1796, %v1920
        %1922 = vmatprep.mubr.f32.mxu0 0.0
        %v1923 = vand.u32 %v260, 4294901760
        %1924 = vmatmul.mubr.f32.gmra.mrb[0].mxu0 %v1923
        %v1925 = vpop.f32.mrb[0].mxu0
        %v1926 = vadd.f32 %v1801, %v1925
        %v1927 = vpop.f32.mrb[0].mxu0
        %v1928 = vadd.f32 %v1803, %v1927
        %1929 = vmatprep.mubr.f32.mxu0 0.0
        %v1930 = vand.u32 %v263, 4294901760
        %1931 = vmatmul.mubr.f32.gmra.mrb[0].mxu0 %v1930
        %v1932 = vpop.f32.mrb[0].mxu0
        %v1933 = vadd.f32 %v1808, %v1932
        %v1934 = vpop.f32.mrb[0].mxu0
        %v1935 = vadd.f32 %v1810, %v1934
        %1936 = vdwg.mxu0
        %v1937 = vmax.f32 %v1050, 0.0
        %v1938 = vmax.f32 %v1052, 0.0
        %v1939 = vmax.f32 %v1884, 0.0
        %v1940 = vmax.f32 %v1886, 0.0
        %v1941 = vmax.f32 %v1057, 0.0
        %v1942 = vmax.f32 %v1059, 0.0
        %v1943 = vmax.f32 %v1891, 0.0
        %v1944 = vmax.f32 %v1893, 0.0
        %v1945 = vmax.f32 %v1064, 0.0
        %v1946 = vmax.f32 %v1066, 0.0
        %v1947 = vmax.f32 %v1898, 0.0
        %v1948 = vmax.f32 %v1900, 0.0
        %v1949 = vmax.f32 %v1071, 0.0
        %v1950 = vmax.f32 %v1073, 0.0
        %v1951 = vmax.f32 %v1905, 0.0
        %v1952 = vmax.f32 %v1907, 0.0
        %v1953 = vmax.f32 %v1078, 0.0
        %v1954 = vmax.f32 %v1080, 0.0
        %v1955 = vmax.f32 %v1912, 0.0
        %v1956 = vmax.f32 %v1914, 0.0
        %v1957 = vmax.f32 %v1085, 0.0
        %v1958 = vmax.f32 %v1087, 0.0
        %v1959 = vmax.f32 %v1919, 0.0
        %v1960 = vmax.f32 %v1921, 0.0
        %v1961 = vmax.f32 %v1092, 0.0
        %v1962 = vmax.f32 %v1094, 0.0
        %v1963 = vmax.f32 %v1926, 0.0
        %v1964 = vmax.f32 %v1928, 0.0
        %v1965 = vmax.f32 %v1099, 0.0
        %v1966 = vmax.f32 %v1101, 0.0
        %v1967 = vmax.f32 %v1933, 0.0
        %v1968 = vmax.f32 %v1935, 0.0
        %v1969 = vld [vmem:[%s2] sm:$0x1]
        %s1970 = sld [smem:[#allocation2]]
        %v1971 = vstv %s1970
        %vm1972 = vcmask 523264
        %v1974 = vsel %vm1972, %v1969, 0
        %v1976 = vand.u32 %v1938, 4294901760
        %1977 = vmatprep.subr.mxu0 %v1976
        %v1978 = vand.u32 %v1937, 4294901760
        %1979 = vmatpush1.msra.mxu0 %v1978
        %v1980 = vand.u32 %v1942, 4294901760
        %1981 = vmatprep.subr.mxu0 %v1980
        %v1982 = vand.u32 %v1941, 4294901760
        %1983 = vmatpush1.msra.mxu0 %v1982
        %v1984 = vand.u32 %v1946, 4294901760
        %1985 = vmatprep.subr.mxu0 %v1984
        %v1986 = vand.u32 %v1945, 4294901760
        %1987 = vmatpush1.msra.mxu0 %v1986
        %v1988 = vand.u32 %v1950, 4294901760
        %1989 = vmatprep.subr.mxu0 %v1988
        %v1990 = vand.u32 %v1949, 4294901760
        %1991 = vmatpush1.msra.mxu0 %v1990
        %v1992 = vand.u32 %v1954, 4294901760
        %1993 = vmatprep.subr.mxu0 %v1992
        %v1994 = vand.u32 %v1953, 4294901760
        %1995 = vmatpush1.msra.mxu0 %v1994
        %v1996 = vand.u32 %v1958, 4294901760
        %1997 = vmatprep.subr.mxu0 %v1996
        %v1998 = vand.u32 %v1957, 4294901760
        %1999 = vmatpush1.msra.mxu0 %v1998
        %v2000 = vand.u32 %v1962, 4294901760
        %2001 = vmatprep.subr.mxu0 %v2000
        %v2002 = vand.u32 %v1961, 4294901760
        %2003 = vmatpush1.msra.mxu0 %v2002
        %v2004 = vand.u32 %v1966, 4294901760
        %2005 = vmatprep.subr.mxu0 %v2004
        %v2006 = vand.u32 %v1965, 4294901760
        %2007 = vmatpush1.msra.mxu0 %v2006
        %2008 = vmatprep.subr.mxu0 0.0
        %2009 = vmatpush1.msra.mxu0 0.0
        %2010 = vmatprep.subr.mxu0 0.0
        %2011 = vmatpush1.msra.mxu0 0.0
        %2012 = vmatprep.subr.mxu0 0.0
        %2013 = vmatpush1.msra.mxu0 0.0
        %2014 = vmatprep.subr.mxu0 0.0
        %2015 = vmatpush1.msra.mxu0 0.0
        %2016 = vmatprep.subr.mxu0 0.0
        %2017 = vmatpush1.msra.mxu0 0.0
        %2018 = vmatprep.subr.mxu0 0.0
        %2019 = vmatpush1.msra.mxu0 0.0
        %2020 = vmatprep.subr.mxu0 0.0
        %2021 = vmatpush1.msra.mxu0 0.0
        %2022 = vmatprep.subr.mxu0 0.0
        %2023 = vmatpush1.msra.mxu0 0.0
        %2024 = vmatprep.subr.mxu0 0.0
        %2025 = vmatpush1.msra.mxu0 0.0
        %2026 = vmatprep.subr.mxu0 0.0
        %2027 = vmatpush1.msra.mxu0 0.0
        %2028 = vmatprep.subr.mxu0 0.0
        %2029 = vmatpush1.msra.mxu0 0.0
        %2030 = vmatprep.subr.mxu0 0.0
        %2031 = vmatpush1.msra.mxu0 0.0
        %2032 = vmatprep.subr.mxu0 0.0
        %2033 = vmatpush1.msra.mxu0 0.0
        %2034 = vmatprep.subr.mxu0 0.0
        %2035 = vmatpush1.msra.mxu0 0.0
        %2036 = vmatprep.subr.mxu0 0.0
        %2037 = vmatpush1.msra.mxu0 0.0
        %2038 = vmatprep.subr.mxu0 0.0
        %2039 = vmatpush1.msra.mxu0 0.0
        %2040 = vmatprep.subr.mxu0 0.0
        %2041 = vmatpush1.msra.mxu0 0.0
        %2042 = vmatprep.subr.mxu0 0.0
        %2043 = vmatpush1.msra.mxu0 0.0
        %2044 = vmatprep.subr.mxu0 0.0
        %2045 = vmatpush1.msra.mxu0 0.0
        %2046 = vmatprep.subr.mxu0 0.0
        %2047 = vmatpush1.msra.mxu0 0.0
        %2048 = vmatprep.subr.mxu0 0.0
        %2049 = vmatpush1.msra.mxu0 0.0
        %2050 = vmatprep.subr.mxu0 0.0
        %2051 = vmatpush1.msra.mxu0 0.0
        %2052 = vmatprep.subr.mxu0 0.0
        %2053 = vmatpush1.msra.mxu0 0.0
        %2054 = vmatprep.subr.mxu0 0.0
        %2055 = vmatpush1.msra.mxu0 0.0
        %2056 = vmatprep.mubr.f32.mxu0 0.0
        %v2057 = vand.u32 %v1974, 4294901760
        %v2058 = vsub.f32 %v1974, %v2057
        %v2059 = vand.u32 %v2058, 4294901760
        %v2060 = vsub.f32 %v2058, %v2059
        %v2061 = vand.u32 %v2060, 4294901760
        %2062 = vmatmul.mubr.f32.gmra.mrb[0].mxu0 %v2061
        %v2063 = vpop.f32.mrb[0].mxu0
        %v2064 = vadd.f32 %v1971, %v2063
        %v2065 = vpop.f32.mrb[0].mxu0
        %v2066 = vadd.f32 %v1971, %v2065
        %2067 = vdwg.mxu0
        %v2068 = vand.u32 %v1938, 4294901760
        %v2069 = vsub.f32 %v1938, %v2068
        %v2070 = vand.u32 %v2069, 4294901760
        %v2071 = vsub.f32 %v2069, %v2070
        %v2072 = vand.u32 %v2071, 4294901760
        %2073 = vmatprep.subr.mxu0 %v2072
        %v2074 = vand.u32 %v1937, 4294901760
        %v2075 = vsub.f32 %v1937, %v2074
        %v2076 = vand.u32 %v2075, 4294901760
        %v2077 = vsub.f32 %v2075, %v2076
        %v2078 = vand.u32 %v2077, 4294901760
        %2079 = vmatpush1.msra.mxu0 %v2078
        %v2080 = vand.u32 %v1942, 4294901760
        %v2081 = vsub.f32 %v1942, %v2080
        %v2082 = vand.u32 %v2081, 4294901760
        %v2083 = vsub.f32 %v2081, %v2082
        %v2084 = vand.u32 %v2083, 4294901760
        %2085 = vmatprep.subr.mxu0 %v2084
        %v2086 = vand.u32 %v1941, 4294901760
        %v2087 = vsub.f32 %v1941, %v2086
        %v2088 = vand.u32 %v2087, 4294901760
        %v2089 = vsub.f32 %v2087, %v2088
        %v2090 = vand.u32 %v2089, 4294901760
        %2091 = vmatpush1.msra.mxu0 %v2090
        %v2092 = vand.u32 %v1946, 4294901760
        %v2093 = vsub.f32 %v1946, %v2092
        %v2094 = vand.u32 %v2093, 4294901760
        %v2095 = vsub.f32 %v2093, %v2094
        %v2096 = vand.u32 %v2095, 4294901760
        %2097 = vmatprep.subr.mxu0 %v2096
        %v2098 = vand.u32 %v1945, 4294901760
        %v2099 = vsub.f32 %v1945, %v2098
        %v2100 = vand.u32 %v2099, 4294901760
        %v2101 = vsub.f32 %v2099, %v2100
        %v2102 = vand.u32 %v2101, 4294901760
        %2103 = vmatpush1.msra.mxu0 %v2102
        %v2104 = vand.u32 %v1950, 4294901760
        %v2105 = vsub.f32 %v1950, %v2104
        %v2106 = vand.u32 %v2105, 4294901760
        %v2107 = vsub.f32 %v2105, %v2106
        %v2108 = vand.u32 %v2107, 4294901760
        %2109 = vmatprep.subr.mxu0 %v2108
        %v2110 = vand.u32 %v1949, 4294901760
        %v2111 = vsub.f32 %v1949, %v2110
        %v2112 = vand.u32 %v2111, 4294901760
        %v2113 = vsub.f32 %v2111, %v2112
        %v2114 = vand.u32 %v2113, 4294901760
        %2115 = vmatpush1.msra.mxu0 %v2114
        %v2116 = vand.u32 %v1954, 4294901760
        %v2117 = vsub.f32 %v1954, %v2116
        %v2118 = vand.u32 %v2117, 4294901760
        %v2119 = vsub.f32 %v2117, %v2118
        %v2120 = vand.u32 %v2119, 4294901760
        %2121 = vmatprep.subr.mxu0 %v2120
        %v2122 = vand.u32 %v1953, 4294901760
        %v2123 = vsub.f32 %v1953, %v2122
        %v2124 = vand.u32 %v2123, 4294901760
        %v2125 = vsub.f32 %v2123, %v2124
        %v2126 = vand.u32 %v2125, 4294901760
        %2127 = vmatpush1.msra.mxu0 %v2126
        %v2128 = vand.u32 %v1958, 4294901760
        %v2129 = vsub.f32 %v1958, %v2128
        %v2130 = vand.u32 %v2129, 4294901760
        %v2131 = vsub.f32 %v2129, %v2130
        %v2132 = vand.u32 %v2131, 4294901760
        %2133 = vmatprep.subr.mxu0 %v2132
        %v2134 = vand.u32 %v1957, 4294901760
        %v2135 = vsub.f32 %v1957, %v2134
        %v2136 = vand.u32 %v2135, 4294901760
        %v2137 = vsub.f32 %v2135, %v2136
        %v2138 = vand.u32 %v2137, 4294901760
        %2139 = vmatpush1.msra.mxu0 %v2138
        %v2140 = vand.u32 %v1962, 4294901760
        %v2141 = vsub.f32 %v1962, %v2140
        %v2142 = vand.u32 %v2141, 4294901760
        %v2143 = vsub.f32 %v2141, %v2142
        %v2144 = vand.u32 %v2143, 4294901760
        %2145 = vmatprep.subr.mxu0 %v2144
        %v2146 = vand.u32 %v1961, 4294901760
        %v2147 = vsub.f32 %v1961, %v2146
        %v2148 = vand.u32 %v2147, 4294901760
        %v2149 = vsub.f32 %v2147, %v2148
        %v2150 = vand.u32 %v2149, 4294901760
        %2151 = vmatpush1.msra.mxu0 %v2150
        %v2152 = vand.u32 %v1966, 4294901760
        %v2153 = vsub.f32 %v1966, %v2152
        %v2154 = vand.u32 %v2153, 4294901760
        %v2155 = vsub.f32 %v2153, %v2154
        %v2156 = vand.u32 %v2155, 4294901760
        %2157 = vmatprep.subr.mxu0 %v2156
        %v2158 = vand.u32 %v1965, 4294901760
        %v2159 = vsub.f32 %v1965, %v2158
        %v2160 = vand.u32 %v2159, 4294901760
        %v2161 = vsub.f32 %v2159, %v2160
        %v2162 = vand.u32 %v2161, 4294901760
        %2163 = vmatpush1.msra.mxu0 %v2162
        %2164 = vmatprep.subr.mxu0 0.0
        %2165 = vmatpush1.msra.mxu0 0.0
        %2166 = vmatprep.subr.mxu0 0.0
        %2167 = vmatpush1.msra.mxu0 0.0
        %2168 = vmatprep.subr.mxu0 0.0
        %2169 = vmatpush1.msra.mxu0 0.0
        %2170 = vmatprep.subr.mxu0 0.0
        %2171 = vmatpush1.msra.mxu0 0.0
        %2172 = vmatprep.subr.mxu0 0.0
        %2173 = vmatpush1.msra.mxu0 0.0
        %2174 = vmatprep.subr.mxu0 0.0
        %2175 = vmatpush1.msra.mxu0 0.0
        %2176 = vmatprep.subr.mxu0 0.0
        %2177 = vmatpush1.msra.mxu0 0.0
        %2178 = vmatprep.subr.mxu0 0.0
        %2179 = vmatpush1.msra.mxu0 0.0
        %2180 = vmatprep.subr.mxu0 0.0
        %2181 = vmatpush1.msra.mxu0 0.0
        %2182 = vmatprep.subr.mxu0 0.0
        %2183 = vmatpush1.msra.mxu0 0.0
        %2184 = vmatprep.subr.mxu0 0.0
        %2185 = vmatpush1.msra.mxu0 0.0
        %2186 = vmatprep.subr.mxu0 0.0
        %2187 = vmatpush1.msra.mxu0 0.0
        %2188 = vmatprep.subr.mxu0 0.0
        %2189 = vmatpush1.msra.mxu0 0.0
        %2190 = vmatprep.subr.mxu0 0.0
        %2191 = vmatpush1.msra.mxu0 0.0
        %2192 = vmatprep.subr.mxu0 0.0
        %2193 = vmatpush1.msra.mxu0 0.0
        %2194 = vmatprep.subr.mxu0 0.0
        %2195 = vmatpush1.msra.mxu0 0.0
        %2196 = vmatprep.subr.mxu0 0.0
        %2197 = vmatpush1.msra.mxu0 0.0
        %2198 = vmatprep.subr.mxu0 0.0
        %2199 = vmatpush1.msra.mxu0 0.0
        %2200 = vmatprep.subr.mxu0 0.0
        %2201 = vmatpush1.msra.mxu0 0.0
        %2202 = vmatprep.subr.mxu0 0.0
        %2203 = vmatpush1.msra.mxu0 0.0
        %2204 = vmatprep.subr.mxu0 0.0
        %2205 = vmatpush1.msra.mxu0 0.0
        %2206 = vmatprep.subr.mxu0 0.0
        %2207 = vmatpush1.msra.mxu0 0.0
        %2208 = vmatprep.subr.mxu0 0.0
        %2209 = vmatpush1.msra.mxu0 0.0
        %2210 = vmatprep.subr.mxu0 0.0
        %2211 = vmatpush1.msra.mxu0 0.0
        %2212 = vmatprep.mubr.f32.mxu0 0.0
        %v2213 = vand.u32 %v1974, 4294901760
        %2214 = vmatmul.mubr.f32.gmra.mrb[0].mxu0 %v2213
        %v2215 = vpop.f32.mrb[0].mxu0
        %v2216 = vadd.f32 %v2064, %v2215
        %v2217 = vpop.f32.mrb[0].mxu0
        %v2218 = vadd.f32 %v2066, %v2217
        %2219 = vdwg.mxu0
        %v2220 = vand.u32 %v1938, 4294901760
        %v2221 = vsub.f32 %v1938, %v2220
        %2222 = vmatprep.subr.mxu0 %v2221
        %v2223 = vand.u32 %v1937, 4294901760
        %v2224 = vsub.f32 %v1937, %v2223
        %2225 = vmatpush1.msra.mxu0 %v2224
        %v2226 = vand.u32 %v1942, 4294901760
        %v2227 = vsub.f32 %v1942, %v2226
        %2228 = vmatprep.subr.mxu0 %v2227
        %v2229 = vand.u32 %v1941, 4294901760
        %v2230 = vsub.f32 %v1941, %v2229
        %2231 = vmatpush1.msra.mxu0 %v2230
        %v2232 = vand.u32 %v1946, 4294901760
        %v2233 = vsub.f32 %v1946, %v2232
        %2234 = vmatprep.subr.mxu0 %v2233
        %v2235 = vand.u32 %v1945, 4294901760
        %v2236 = vsub.f32 %v1945, %v2235
        %2237 = vmatpush1.msra.mxu0 %v2236
        %v2238 = vand.u32 %v1950, 4294901760
        %v2239 = vsub.f32 %v1950, %v2238
        %2240 = vmatprep.subr.mxu0 %v2239
        %v2241 = vand.u32 %v1949, 4294901760
        %v2242 = vsub.f32 %v1949, %v2241
        %2243 = vmatpush1.msra.mxu0 %v2242
        %v2244 = vand.u32 %v1954, 4294901760
        %v2245 = vsub.f32 %v1954, %v2244
        %2246 = vmatprep.subr.mxu0 %v2245
        %v2247 = vand.u32 %v1953, 4294901760
        %v2248 = vsub.f32 %v1953, %v2247
        %2249 = vmatpush1.msra.mxu0 %v2248
        %v2250 = vand.u32 %v1958, 4294901760
        %v2251 = vsub.f32 %v1958, %v2250
        %2252 = vmatprep.subr.mxu0 %v2251
        %v2253 = vand.u32 %v1957, 4294901760
        %v2254 = vsub.f32 %v1957, %v2253
        %2255 = vmatpush1.msra.mxu0 %v2254
        %v2256 = vand.u32 %v1962, 4294901760
        %v2257 = vsub.f32 %v1962, %v2256
        %2258 = vmatprep.subr.mxu0 %v2257
        %v2259 = vand.u32 %v1961, 4294901760
        %v2260 = vsub.f32 %v1961, %v2259
        %2261 = vmatpush1.msra.mxu0 %v2260
        %v2262 = vand.u32 %v1966, 4294901760
        %v2263 = vsub.f32 %v1966, %v2262
        %2264 = vmatprep.subr.mxu0 %v2263
        %v2265 = vand.u32 %v1965, 4294901760
        %v2266 = vsub.f32 %v1965, %v2265
        %2267 = vmatpush1.msra.mxu0 %v2266
        %2268 = vmatprep.subr.mxu0 0.0
        %2269 = vmatpush1.msra.mxu0 0.0
        %2270 = vmatprep.subr.mxu0 0.0
        %2271 = vmatpush1.msra.mxu0 0.0
        %2272 = vmatprep.subr.mxu0 0.0
        %2273 = vmatpush1.msra.mxu0 0.0
        %2274 = vmatprep.subr.mxu0 0.0
        %2275 = vmatpush1.msra.mxu0 0.0
        %2276 = vmatprep.subr.mxu0 0.0
        %2277 = vmatpush1.msra.mxu0 0.0
        %2278 = vmatprep.subr.mxu0 0.0
        %2279 = vmatpush1.msra.mxu0 0.0
        %2280 = vmatprep.subr.mxu0 0.0
        %2281 = vmatpush1.msra.mxu0 0.0
        %2282 = vmatprep.subr.mxu0 0.0
        %2283 = vmatpush1.msra.mxu0 0.0
        %2284 = vmatprep.subr.mxu0 0.0
        %2285 = vmatpush1.msra.mxu0 0.0
        %2286 = vmatprep.subr.mxu0 0.0
        %2287 = vmatpush1.msra.mxu0 0.0
        %2288 = vmatprep.subr.mxu0 0.0
        %2289 = vmatpush1.msra.mxu0 0.0
        %2290 = vmatprep.subr.mxu0 0.0
        %2291 = vmatpush1.msra.mxu0 0.0
        %2292 = vmatprep.subr.mxu0 0.0
        %2293 = vmatpush1.msra.mxu0 0.0
        %2294 = vmatprep.subr.mxu0 0.0
        %2295 = vmatpush1.msra.mxu0 0.0
        %2296 = vmatprep.subr.mxu0 0.0
        %2297 = vmatpush1.msra.mxu0 0.0
        %2298 = vmatprep.subr.mxu0 0.0
        %2299 = vmatpush1.msra.mxu0 0.0
        %2300 = vmatprep.subr.mxu0 0.0
        %2301 = vmatpush1.msra.mxu0 0.0
        %2302 = vmatprep.subr.mxu0 0.0
        %2303 = vmatpush1.msra.mxu0 0.0
        %2304 = vmatprep.subr.mxu0 0.0
        %2305 = vmatpush1.msra.mxu0 0.0
        %2306 = vmatprep.subr.mxu0 0.0
        %2307 = vmatpush1.msra.mxu0 0.0
        %2308 = vmatprep.subr.mxu0 0.0
        %2309 = vmatpush1.msra.mxu0 0.0
        %2310 = vmatprep.subr.mxu0 0.0
        %2311 = vmatpush1.msra.mxu0 0.0
        %2312 = vmatprep.subr.mxu0 0.0
        %2313 = vmatpush1.msra.mxu0 0.0
        %2314 = vmatprep.subr.mxu0 0.0
        %2315 = vmatpush1.msra.mxu0 0.0
        %2316 = vmatprep.mubr.f32.mxu0 0.0
        %v2317 = vand.u32 %v1974, 4294901760
        %v2318 = vsub.f32 %v1974, %v2317
        %2319 = vmatmul.mubr.f32.gmra.mrb[0].mxu0 %v2318
        %v2320 = vpop.f32.mrb[0].mxu0
        %v2321 = vadd.f32 %v2216, %v2320
        %v2322 = vpop.f32.mrb[0].mxu0
        %v2323 = vadd.f32 %v2218, %v2322
        %2324 = vdwg.mxu0
        %v2325 = vand.u32 %v1938, 4294901760
        %2326 = vmatprep.subr.mxu0 %v2325
        %v2327 = vand.u32 %v1937, 4294901760
        %2328 = vmatpush1.msra.mxu0 %v2327
        %v2329 = vand.u32 %v1942, 4294901760
        %2330 = vmatprep.subr.mxu0 %v2329
        %v2331 = vand.u32 %v1941, 4294901760
        %2332 = vmatpush1.msra.mxu0 %v2331
        %v2333 = vand.u32 %v1946, 4294901760
        %2334 = vmatprep.subr.mxu0 %v2333
        %v2335 = vand.u32 %v1945, 4294901760
        %2336 = vmatpush1.msra.mxu0 %v2335
        %v2337 = vand.u32 %v1950, 4294901760
        %2338 = vmatprep.subr.mxu0 %v2337
        %v2339 = vand.u32 %v1949, 4294901760
        %2340 = vmatpush1.msra.mxu0 %v2339
        %v2341 = vand.u32 %v1954, 4294901760
        %2342 = vmatprep.subr.mxu0 %v2341
        %v2343 = vand.u32 %v1953, 4294901760
        %2344 = vmatpush1.msra.mxu0 %v2343
        %v2345 = vand.u32 %v1958, 4294901760
        %2346 = vmatprep.subr.mxu0 %v2345
        %v2347 = vand.u32 %v1957, 4294901760
        %2348 = vmatpush1.msra.mxu0 %v2347
        %v2349 = vand.u32 %v1962, 4294901760
        %2350 = vmatprep.subr.mxu0 %v2349
        %v2351 = vand.u32 %v1961, 4294901760
        %2352 = vmatpush1.msra.mxu0 %v2351
        %v2353 = vand.u32 %v1966, 4294901760
        %2354 = vmatprep.subr.mxu0 %v2353
        %v2355 = vand.u32 %v1965, 4294901760
        %2356 = vmatpush1.msra.mxu0 %v2355
        %2357 = vmatprep.subr.mxu0 0.0
        %2358 = vmatpush1.msra.mxu0 0.0
        %2359 = vmatprep.subr.mxu0 0.0
        %2360 = vmatpush1.msra.mxu0 0.0
        %2361 = vmatprep.subr.mxu0 0.0
        %2362 = vmatpush1.msra.mxu0 0.0
        %2363 = vmatprep.subr.mxu0 0.0
        %2364 = vmatpush1.msra.mxu0 0.0
        %2365 = vmatprep.subr.mxu0 0.0
        %2366 = vmatpush1.msra.mxu0 0.0
        %2367 = vmatprep.subr.mxu0 0.0
        %2368 = vmatpush1.msra.mxu0 0.0
        %2369 = vmatprep.subr.mxu0 0.0
        %2370 = vmatpush1.msra.mxu0 0.0
        %2371 = vmatprep.subr.mxu0 0.0
        %2372 = vmatpush1.msra.mxu0 0.0
        %2373 = vmatprep.subr.mxu0 0.0
        %2374 = vmatpush1.msra.mxu0 0.0
        %2375 = vmatprep.subr.mxu0 0.0
        %2376 = vmatpush1.msra.mxu0 0.0
        %2377 = vmatprep.subr.mxu0 0.0
        %2378 = vmatpush1.msra.mxu0 0.0
        %2379 = vmatprep.subr.mxu0 0.0
        %2380 = vmatpush1.msra.mxu0 0.0
        %2381 = vmatprep.subr.mxu0 0.0
        %2382 = vmatpush1.msra.mxu0 0.0
        %2383 = vmatprep.subr.mxu0 0.0
        %2384 = vmatpush1.msra.mxu0 0.0
        %2385 = vmatprep.subr.mxu0 0.0
        %2386 = vmatpush1.msra.mxu0 0.0
        %2387 = vmatprep.subr.mxu0 0.0
        %2388 = vmatpush1.msra.mxu0 0.0
        %2389 = vmatprep.subr.mxu0 0.0
        %2390 = vmatpush1.msra.mxu0 0.0
        %2391 = vmatprep.subr.mxu0 0.0
        %2392 = vmatpush1.msra.mxu0 0.0
        %2393 = vmatprep.subr.mxu0 0.0
        %2394 = vmatpush1.msra.mxu0 0.0
        %2395 = vmatprep.subr.mxu0 0.0
        %2396 = vmatpush1.msra.mxu0 0.0
        %2397 = vmatprep.subr.mxu0 0.0
        %2398 = vmatpush1.msra.mxu0 0.0
        %2399 = vmatprep.subr.mxu0 0.0
        %2400 = vmatpush1.msra.mxu0 0.0
        %2401 = vmatprep.subr.mxu0 0.0
        %2402 = vmatpush1.msra.mxu0 0.0
        %2403 = vmatprep.subr.mxu0 0.0
        %2404 = vmatpush1.msra.mxu0 0.0
        %2405 = vmatprep.mubr.f32.mxu0 0.0
        %v2406 = vand.u32 %v1974, 4294901760
        %v2407 = vsub.f32 %v1974, %v2406
        %v2408 = vand.u32 %v2407, 4294901760
        %2409 = vmatmul.mubr.f32.gmra.mrb[0].mxu0 %v2408
        %v2410 = vpop.f32.mrb[0].mxu0
        %v2411 = vadd.f32 %v2321, %v2410
        %v2412 = vpop.f32.mrb[0].mxu0
        %v2413 = vadd.f32 %v2323, %v2412
        %2414 = vdwg.mxu0
        %v2415 = vand.u32 %v1938, 4294901760
        %v2416 = vsub.f32 %v1938, %v2415
        %v2417 = vand.u32 %v2416, 4294901760
        %2418 = vmatprep.subr.mxu0 %v2417
        %v2419 = vand.u32 %v1937, 4294901760
        %v2420 = vsub.f32 %v1937, %v2419
        %v2421 = vand.u32 %v2420, 4294901760
        %2422 = vmatpush1.msra.mxu0 %v2421
        %v2423 = vand.u32 %v1942, 4294901760
        %v2424 = vsub.f32 %v1942, %v2423
        %v2425 = vand.u32 %v2424, 4294901760
        %2426 = vmatprep.subr.mxu0 %v2425
        %v2427 = vand.u32 %v1941, 4294901760
        %v2428 = vsub.f32 %v1941, %v2427
        %v2429 = vand.u32 %v2428, 4294901760
        %2430 = vmatpush1.msra.mxu0 %v2429
        %v2431 = vand.u32 %v1946, 4294901760
        %v2432 = vsub.f32 %v1946, %v2431
        %v2433 = vand.u32 %v2432, 4294901760
        %2434 = vmatprep.subr.mxu0 %v2433
        %v2435 = vand.u32 %v1945, 4294901760
        %v2436 = vsub.f32 %v1945, %v2435
        %v2437 = vand.u32 %v2436, 4294901760
        %2438 = vmatpush1.msra.mxu0 %v2437
        %v2439 = vand.u32 %v1950, 4294901760
        %v2440 = vsub.f32 %v1950, %v2439
        %v2441 = vand.u32 %v2440, 4294901760
        %2442 = vmatprep.subr.mxu0 %v2441
        %v2443 = vand.u32 %v1949, 4294901760
        %v2444 = vsub.f32 %v1949, %v2443
        %v2445 = vand.u32 %v2444, 4294901760
        %2446 = vmatpush1.msra.mxu0 %v2445
        %v2447 = vand.u32 %v1954, 4294901760
        %v2448 = vsub.f32 %v1954, %v2447
        %v2449 = vand.u32 %v2448, 4294901760
        %2450 = vmatprep.subr.mxu0 %v2449
        %v2451 = vand.u32 %v1953, 4294901760
        %v2452 = vsub.f32 %v1953, %v2451
        %v2453 = vand.u32 %v2452, 4294901760
        %2454 = vmatpush1.msra.mxu0 %v2453
        %v2455 = vand.u32 %v1958, 4294901760
        %v2456 = vsub.f32 %v1958, %v2455
        %v2457 = vand.u32 %v2456, 4294901760
        %2458 = vmatprep.subr.mxu0 %v2457
        %v2459 = vand.u32 %v1957, 4294901760
        %v2460 = vsub.f32 %v1957, %v2459
        %v2461 = vand.u32 %v2460, 4294901760
        %2462 = vmatpush1.msra.mxu0 %v2461
        %v2463 = vand.u32 %v1962, 4294901760
        %v2464 = vsub.f32 %v1962, %v2463
        %v2465 = vand.u32 %v2464, 4294901760
        %2466 = vmatprep.subr.mxu0 %v2465
        %v2467 = vand.u32 %v1961, 4294901760
        %v2468 = vsub.f32 %v1961, %v2467
        %v2469 = vand.u32 %v2468, 4294901760
        %2470 = vmatpush1.msra.mxu0 %v2469
        %v2471 = vand.u32 %v1966, 4294901760
        %v2472 = vsub.f32 %v1966, %v2471
        %v2473 = vand.u32 %v2472, 4294901760
        %2474 = vmatprep.subr.mxu0 %v2473
        %v2475 = vand.u32 %v1965, 4294901760
        %v2476 = vsub.f32 %v1965, %v2475
        %v2477 = vand.u32 %v2476, 4294901760
        %2478 = vmatpush1.msra.mxu0 %v2477
        %2479 = vmatprep.subr.mxu0 0.0
        %2480 = vmatpush1.msra.mxu0 0.0
        %2481 = vmatprep.subr.mxu0 0.0
        %2482 = vmatpush1.msra.mxu0 0.0
        %2483 = vmatprep.subr.mxu0 0.0
        %2484 = vmatpush1.msra.mxu0 0.0
        %2485 = vmatprep.subr.mxu0 0.0
        %2486 = vmatpush1.msra.mxu0 0.0
        %2487 = vmatprep.subr.mxu0 0.0
        %2488 = vmatpush1.msra.mxu0 0.0
        %2489 = vmatprep.subr.mxu0 0.0
        %2490 = vmatpush1.msra.mxu0 0.0
        %2491 = vmatprep.subr.mxu0 0.0
        %2492 = vmatpush1.msra.mxu0 0.0
        %2493 = vmatprep.subr.mxu0 0.0
        %2494 = vmatpush1.msra.mxu0 0.0
        %2495 = vmatprep.subr.mxu0 0.0
        %2496 = vmatpush1.msra.mxu0 0.0
        %2497 = vmatprep.subr.mxu0 0.0
        %2498 = vmatpush1.msra.mxu0 0.0
        %2499 = vmatprep.subr.mxu0 0.0
        %2500 = vmatpush1.msra.mxu0 0.0
        %2501 = vmatprep.subr.mxu0 0.0
        %2502 = vmatpush1.msra.mxu0 0.0
        %2503 = vmatprep.subr.mxu0 0.0
        %2504 = vmatpush1.msra.mxu0 0.0
        %2505 = vmatprep.subr.mxu0 0.0
        %2506 = vmatpush1.msra.mxu0 0.0
        %2507 = vmatprep.subr.mxu0 0.0
        %2508 = vmatpush1.msra.mxu0 0.0
        %2509 = vmatprep.subr.mxu0 0.0
        %2510 = vmatpush1.msra.mxu0 0.0
        %2511 = vmatprep.subr.mxu0 0.0
        %2512 = vmatpush1.msra.mxu0 0.0
        %2513 = vmatprep.subr.mxu0 0.0
        %2514 = vmatpush1.msra.mxu0 0.0
        %2515 = vmatprep.subr.mxu0 0.0
        %2516 = vmatpush1.msra.mxu0 0.0
        %2517 = vmatprep.subr.mxu0 0.0
        %2518 = vmatpush1.msra.mxu0 0.0
        %2519 = vmatprep.subr.mxu0 0.0
        %2520 = vmatpush1.msra.mxu0 0.0
        %2521 = vmatprep.subr.mxu0 0.0
        %2522 = vmatpush1.msra.mxu0 0.0
        %2523 = vmatprep.subr.mxu0 0.0
        %2524 = vmatpush1.msra.mxu0 0.0
        %2525 = vmatprep.subr.mxu0 0.0
        %2526 = vmatpush1.msra.mxu0 0.0
        %2527 = vmatprep.mubr.f32.mxu0 0.0
        %v2528 = vand.u32 %v1974, 4294901760
        %2529 = vmatmul.mubr.f32.gmra.mrb[0].mxu0 %v2528
        %v2530 = vpop.f32.mrb[0].mxu0
        %v2531 = vadd.f32 %v2411, %v2530
        %v2532 = vpop.f32.mrb[0].mxu0
        %v2533 = vadd.f32 %v2413, %v2532
        %2534 = vdwg.mxu0
        %v2535 = vand.u32 %v1938, 4294901760
        %2536 = vmatprep.subr.mxu0 %v2535
        %v2537 = vand.u32 %v1937, 4294901760
        %2538 = vmatpush1.msra.mxu0 %v2537
        %v2539 = vand.u32 %v1942, 4294901760
        %2540 = vmatprep.subr.mxu0 %v2539
        %v2541 = vand.u32 %v1941, 4294901760
        %2542 = vmatpush1.msra.mxu0 %v2541
        %v2543 = vand.u32 %v1946, 4294901760
        %2544 = vmatprep.subr.mxu0 %v2543
        %v2545 = vand.u32 %v1945, 4294901760
        %2546 = vmatpush1.msra.mxu0 %v2545
        %v2547 = vand.u32 %v1950, 4294901760
        %2548 = vmatprep.subr.mxu0 %v2547
        %v2549 = vand.u32 %v1949, 4294901760
        %2550 = vmatpush1.msra.mxu0 %v2549
        %v2551 = vand.u32 %v1954, 4294901760
        %2552 = vmatprep.subr.mxu0 %v2551
        %v2553 = vand.u32 %v1953, 4294901760
        %2554 = vmatpush1.msra.mxu0 %v2553
        %v2555 = vand.u32 %v1958, 4294901760
        %2556 = vmatprep.subr.mxu0 %v2555
        %v2557 = vand.u32 %v1957, 4294901760
        %2558 = vmatpush1.msra.mxu0 %v2557
        %v2559 = vand.u32 %v1962, 4294901760
        %2560 = vmatprep.subr.mxu0 %v2559
        %v2561 = vand.u32 %v1961, 4294901760
        %2562 = vmatpush1.msra.mxu0 %v2561
        %v2563 = vand.u32 %v1966, 4294901760
        %2564 = vmatprep.subr.mxu0 %v2563
        %v2565 = vand.u32 %v1965, 4294901760
        %2566 = vmatpush1.msra.mxu0 %v2565
        %2567 = vmatprep.subr.mxu0 0.0
        %2568 = vmatpush1.msra.mxu0 0.0
        %2569 = vmatprep.subr.mxu0 0.0
        %2570 = vmatpush1.msra.mxu0 0.0
        %2571 = vmatprep.subr.mxu0 0.0
        %2572 = vmatpush1.msra.mxu0 0.0
        %2573 = vmatprep.subr.mxu0 0.0
        %2574 = vmatpush1.msra.mxu0 0.0
        %2575 = vmatprep.subr.mxu0 0.0
        %2576 = vmatpush1.msra.mxu0 0.0
        %2577 = vmatprep.subr.mxu0 0.0
        %2578 = vmatpush1.msra.mxu0 0.0
        %2579 = vmatprep.subr.mxu0 0.0
        %2580 = vmatpush1.msra.mxu0 0.0
        %2581 = vmatprep.subr.mxu0 0.0
        %2582 = vmatpush1.msra.mxu0 0.0
        %2583 = vmatprep.subr.mxu0 0.0
        %2584 = vmatpush1.msra.mxu0 0.0
        %2585 = vmatprep.subr.mxu0 0.0
        %2586 = vmatpush1.msra.mxu0 0.0
        %2587 = vmatprep.subr.mxu0 0.0
        %2588 = vmatpush1.msra.mxu0 0.0
        %2589 = vmatprep.subr.mxu0 0.0
        %2590 = vmatpush1.msra.mxu0 0.0
        %2591 = vmatprep.subr.mxu0 0.0
        %2592 = vmatpush1.msra.mxu0 0.0
        %2593 = vmatprep.subr.mxu0 0.0
        %2594 = vmatpush1.msra.mxu0 0.0
        %2595 = vmatprep.subr.mxu0 0.0
        %2596 = vmatpush1.msra.mxu0 0.0
        %2597 = vmatprep.subr.mxu0 0.0
        %2598 = vmatpush1.msra.mxu0 0.0
        %2599 = vmatprep.subr.mxu0 0.0
        %2600 = vmatpush1.msra.mxu0 0.0
        %2601 = vmatprep.subr.mxu0 0.0
        %2602 = vmatpush1.msra.mxu0 0.0
        %2603 = vmatprep.subr.mxu0 0.0
        %2604 = vmatpush1.msra.mxu0 0.0
        %2605 = vmatprep.subr.mxu0 0.0
        %2606 = vmatpush1.msra.mxu0 0.0
        %2607 = vmatprep.subr.mxu0 0.0
        %2608 = vmatpush1.msra.mxu0 0.0
        %2609 = vmatprep.subr.mxu0 0.0
        %2610 = vmatpush1.msra.mxu0 0.0
        %2611 = vmatprep.subr.mxu0 0.0
        %2612 = vmatpush1.msra.mxu0 0.0
        %2613 = vmatprep.subr.mxu0 0.0
        %2614 = vmatpush1.msra.mxu0 0.0
        %2615 = vmatprep.mubr.f32.mxu0 0.0
        %v2616 = vand.u32 %v1974, 4294901760
        %2617 = vmatmul.mubr.f32.gmra.mrb[0].mxu0 %v2616
        %v2618 = vpop.f32.mrb[0].mxu0
        %v2619 = vadd.f32 %v2531, %v2618
        %v2620 = vpop.f32.mrb[0].mxu0
        %v2621 = vadd.f32 %v2533, %v2620
        %2622 = vdwg.mxu0
        %v2623 = vand.u32 %v1940, 4294901760
        %2624 = vmatprep.subr.mxu0 %v2623
        %v2625 = vand.u32 %v1939, 4294901760
        %2626 = vmatpush1.msra.mxu0 %v2625
        %v2627 = vand.u32 %v1944, 4294901760
        %2628 = vmatprep.subr.mxu0 %v2627
        %v2629 = vand.u32 %v1943, 4294901760
        %2630 = vmatpush1.msra.mxu0 %v2629
        %v2631 = vand.u32 %v1948, 4294901760
        %2632 = vmatprep.subr.mxu0 %v2631
        %v2633 = vand.u32 %v1947, 4294901760
        %2634 = vmatpush1.msra.mxu0 %v2633
        %v2635 = vand.u32 %v1952, 4294901760
        %2636 = vmatprep.subr.mxu0 %v2635
        %v2637 = vand.u32 %v1951, 4294901760
        %2638 = vmatpush1.msra.mxu0 %v2637
        %v2639 = vand.u32 %v1956, 4294901760
        %2640 = vmatprep.subr.mxu0 %v2639
        %v2641 = vand.u32 %v1955, 4294901760
        %2642 = vmatpush1.msra.mxu0 %v2641
        %v2643 = vand.u32 %v1960, 4294901760
        %2644 = vmatprep.subr.mxu0 %v2643
        %v2645 = vand.u32 %v1959, 4294901760
        %2646 = vmatpush1.msra.mxu0 %v2645
        %v2647 = vand.u32 %v1964, 4294901760
        %2648 = vmatprep.subr.mxu0 %v2647
        %v2649 = vand.u32 %v1963, 4294901760
        %2650 = vmatpush1.msra.mxu0 %v2649
        %v2651 = vand.u32 %v1968, 4294901760
        %2652 = vmatprep.subr.mxu0 %v2651
        %v2653 = vand.u32 %v1967, 4294901760
        %2654 = vmatpush1.msra.mxu0 %v2653
        %2655 = vmatprep.subr.mxu0 0.0
        %2656 = vmatpush1.msra.mxu0 0.0
        %2657 = vmatprep.subr.mxu0 0.0
        %2658 = vmatpush1.msra.mxu0 0.0
        %2659 = vmatprep.subr.mxu0 0.0
        %2660 = vmatpush1.msra.mxu0 0.0
        %2661 = vmatprep.subr.mxu0 0.0
        %2662 = vmatpush1.msra.mxu0 0.0
        %2663 = vmatprep.subr.mxu0 0.0
        %2664 = vmatpush1.msra.mxu0 0.0
        %2665 = vmatprep.subr.mxu0 0.0
        %2666 = vmatpush1.msra.mxu0 0.0
        %2667 = vmatprep.subr.mxu0 0.0
        %2668 = vmatpush1.msra.mxu0 0.0
        %2669 = vmatprep.subr.mxu0 0.0
        %2670 = vmatpush1.msra.mxu0 0.0
        %2671 = vmatprep.subr.mxu0 0.0
        %2672 = vmatpush1.msra.mxu0 0.0
        %2673 = vmatprep.subr.mxu0 0.0
        %2674 = vmatpush1.msra.mxu0 0.0
        %2675 = vmatprep.subr.mxu0 0.0
        %2676 = vmatpush1.msra.mxu0 0.0
        %2677 = vmatprep.subr.mxu0 0.0
        %2678 = vmatpush1.msra.mxu0 0.0
        %2679 = vmatprep.subr.mxu0 0.0
        %2680 = vmatpush1.msra.mxu0 0.0
        %2681 = vmatprep.subr.mxu0 0.0
        %2682 = vmatpush1.msra.mxu0 0.0
        %2683 = vmatprep.subr.mxu0 0.0
        %2684 = vmatpush1.msra.mxu0 0.0
        %2685 = vmatprep.subr.mxu0 0.0
        %2686 = vmatpush1.msra.mxu0 0.0
        %2687 = vmatprep.subr.mxu0 0.0
        %2688 = vmatpush1.msra.mxu0 0.0
        %2689 = vmatprep.subr.mxu0 0.0
        %2690 = vmatpush1.msra.mxu0 0.0
        %2691 = vmatprep.subr.mxu0 0.0
        %2692 = vmatpush1.msra.mxu0 0.0
        %2693 = vmatprep.subr.mxu0 0.0
        %2694 = vmatpush1.msra.mxu0 0.0
        %2695 = vmatprep.subr.mxu0 0.0
        %2696 = vmatpush1.msra.mxu0 0.0
        %2697 = vmatprep.subr.mxu0 0.0
        %2698 = vmatpush1.msra.mxu0 0.0
        %2699 = vmatprep.subr.mxu0 0.0
        %2700 = vmatpush1.msra.mxu0 0.0
        %2701 = vmatprep.subr.mxu0 0.0
        %2702 = vmatpush1.msra.mxu0 0.0
        %2703 = vmatprep.mubr.f32.mxu0 0.0
        %v2704 = vand.u32 %v1974, 4294901760
        %v2705 = vsub.f32 %v1974, %v2704
        %v2706 = vand.u32 %v2705, 4294901760
        %v2707 = vsub.f32 %v2705, %v2706
        %v2708 = vand.u32 %v2707, 4294901760
        %2709 = vmatmul.mubr.f32.gmra.mrb[0].mxu0 %v2708
        %v2710 = vpop.f32.mrb[0].mxu0
        %v2711 = vadd.f32 %v1971, %v2710
        %v2712 = vpop.f32.mrb[0].mxu0
        %v2713 = vadd.f32 %v1971, %v2712
        %2714 = vdwg.mxu0
        %v2715 = vand.u32 %v1940, 4294901760
        %v2716 = vsub.f32 %v1940, %v2715
        %v2717 = vand.u32 %v2716, 4294901760
        %v2718 = vsub.f32 %v2716, %v2717
        %v2719 = vand.u32 %v2718, 4294901760
        %2720 = vmatprep.subr.mxu0 %v2719
        %v2721 = vand.u32 %v1939, 4294901760
        %v2722 = vsub.f32 %v1939, %v2721
        %v2723 = vand.u32 %v2722, 4294901760
        %v2724 = vsub.f32 %v2722, %v2723
        %v2725 = vand.u32 %v2724, 4294901760
        %2726 = vmatpush1.msra.mxu0 %v2725
        %v2727 = vand.u32 %v1944, 4294901760
        %v2728 = vsub.f32 %v1944, %v2727
        %v2729 = vand.u32 %v2728, 4294901760
        %v2730 = vsub.f32 %v2728, %v2729
        %v2731 = vand.u32 %v2730, 4294901760
        %2732 = vmatprep.subr.mxu0 %v2731
        %v2733 = vand.u32 %v1943, 4294901760
        %v2734 = vsub.f32 %v1943, %v2733
        %v2735 = vand.u32 %v2734, 4294901760
        %v2736 = vsub.f32 %v2734, %v2735
        %v2737 = vand.u32 %v2736, 4294901760
        %2738 = vmatpush1.msra.mxu0 %v2737
        %v2739 = vand.u32 %v1948, 4294901760
        %v2740 = vsub.f32 %v1948, %v2739
        %v2741 = vand.u32 %v2740, 4294901760
        %v2742 = vsub.f32 %v2740, %v2741
        %v2743 = vand.u32 %v2742, 4294901760
        %2744 = vmatprep.subr.mxu0 %v2743
        %v2745 = vand.u32 %v1947, 4294901760
        %v2746 = vsub.f32 %v1947, %v2745
        %v2747 = vand.u32 %v2746, 4294901760
        %v2748 = vsub.f32 %v2746, %v2747
        %v2749 = vand.u32 %v2748, 4294901760
        %2750 = vmatpush1.msra.mxu0 %v2749
        %v2751 = vand.u32 %v1952, 4294901760
        %v2752 = vsub.f32 %v1952, %v2751
        %v2753 = vand.u32 %v2752, 4294901760
        %v2754 = vsub.f32 %v2752, %v2753
        %v2755 = vand.u32 %v2754, 4294901760
        %2756 = vmatprep.subr.mxu0 %v2755
        %v2757 = vand.u32 %v1951, 4294901760
        %v2758 = vsub.f32 %v1951, %v2757
        %v2759 = vand.u32 %v2758, 4294901760
        %v2760 = vsub.f32 %v2758, %v2759
        %v2761 = vand.u32 %v2760, 4294901760
        %2762 = vmatpush1.msra.mxu0 %v2761
        %v2763 = vand.u32 %v1956, 4294901760
        %v2764 = vsub.f32 %v1956, %v2763
        %v2765 = vand.u32 %v2764, 4294901760
        %v2766 = vsub.f32 %v2764, %v2765
        %v2767 = vand.u32 %v2766, 4294901760
        %2768 = vmatprep.subr.mxu0 %v2767
        %v2769 = vand.u32 %v1955, 4294901760
        %v2770 = vsub.f32 %v1955, %v2769
        %v2771 = vand.u32 %v2770, 4294901760
        %v2772 = vsub.f32 %v2770, %v2771
        %v2773 = vand.u32 %v2772, 4294901760
        %2774 = vmatpush1.msra.mxu0 %v2773
        %v2775 = vand.u32 %v1960, 4294901760
        %v2776 = vsub.f32 %v1960, %v2775
        %v2777 = vand.u32 %v2776, 4294901760
        %v2778 = vsub.f32 %v2776, %v2777
        %v2779 = vand.u32 %v2778, 4294901760
        %2780 = vmatprep.subr.mxu0 %v2779
        %v2781 = vand.u32 %v1959, 4294901760
        %v2782 = vsub.f32 %v1959, %v2781
        %v2783 = vand.u32 %v2782, 4294901760
        %v2784 = vsub.f32 %v2782, %v2783
        %v2785 = vand.u32 %v2784, 4294901760
        %2786 = vmatpush1.msra.mxu0 %v2785
        %v2787 = vand.u32 %v1964, 4294901760
        %v2788 = vsub.f32 %v1964, %v2787
        %v2789 = vand.u32 %v2788, 4294901760
        %v2790 = vsub.f32 %v2788, %v2789
        %v2791 = vand.u32 %v2790, 4294901760
        %2792 = vmatprep.subr.mxu0 %v2791
        %v2793 = vand.u32 %v1963, 4294901760
        %v2794 = vsub.f32 %v1963, %v2793
        %v2795 = vand.u32 %v2794, 4294901760
        %v2796 = vsub.f32 %v2794, %v2795
        %v2797 = vand.u32 %v2796, 4294901760
        %2798 = vmatpush1.msra.mxu0 %v2797
        %v2799 = vand.u32 %v1968, 4294901760
        %v2800 = vsub.f32 %v1968, %v2799
        %v2801 = vand.u32 %v2800, 4294901760
        %v2802 = vsub.f32 %v2800, %v2801
        %v2803 = vand.u32 %v2802, 4294901760
        %2804 = vmatprep.subr.mxu0 %v2803
        %v2805 = vand.u32 %v1967, 4294901760
        %v2806 = vsub.f32 %v1967, %v2805
        %v2807 = vand.u32 %v2806, 4294901760
        %v2808 = vsub.f32 %v2806, %v2807
        %v2809 = vand.u32 %v2808, 4294901760
        %2810 = vmatpush1.msra.mxu0 %v2809
        %2811 = vmatprep.subr.mxu0 0.0
        %2812 = vmatpush1.msra.mxu0 0.0
        %2813 = vmatprep.subr.mxu0 0.0
        %2814 = vmatpush1.msra.mxu0 0.0
        %2815 = vmatprep.subr.mxu0 0.0
        %2816 = vmatpush1.msra.mxu0 0.0
        %2817 = vmatprep.subr.mxu0 0.0
        %2818 = vmatpush1.msra.mxu0 0.0
        %2819 = vmatprep.subr.mxu0 0.0
        %2820 = vmatpush1.msra.mxu0 0.0
        %2821 = vmatprep.subr.mxu0 0.0
        %2822 = vmatpush1.msra.mxu0 0.0
        %2823 = vmatprep.subr.mxu0 0.0
        %2824 = vmatpush1.msra.mxu0 0.0
        %2825 = vmatprep.subr.mxu0 0.0
        %2826 = vmatpush1.msra.mxu0 0.0
        %2827 = vmatprep.subr.mxu0 0.0
        %2828 = vmatpush1.msra.mxu0 0.0
        %2829 = vmatprep.subr.mxu0 0.0
        %2830 = vmatpush1.msra.mxu0 0.0
        %2831 = vmatprep.subr.mxu0 0.0
        %2832 = vmatpush1.msra.mxu0 0.0
        %2833 = vmatprep.subr.mxu0 0.0
        %2834 = vmatpush1.msra.mxu0 0.0
        %2835 = vmatprep.subr.mxu0 0.0
        %2836 = vmatpush1.msra.mxu0 0.0
        %2837 = vmatprep.subr.mxu0 0.0
        %2838 = vmatpush1.msra.mxu0 0.0
        %2839 = vmatprep.subr.mxu0 0.0
        %2840 = vmatpush1.msra.mxu0 0.0
        %2841 = vmatprep.subr.mxu0 0.0
        %2842 = vmatpush1.msra.mxu0 0.0
        %2843 = vmatprep.subr.mxu0 0.0
        %2844 = vmatpush1.msra.mxu0 0.0
        %2845 = vmatprep.subr.mxu0 0.0
        %2846 = vmatpush1.msra.mxu0 0.0
        %2847 = vmatprep.subr.mxu0 0.0
        %2848 = vmatpush1.msra.mxu0 0.0
        %2849 = vmatprep.subr.mxu0 0.0
        %2850 = vmatpush1.msra.mxu0 0.0
        %2851 = vmatprep.subr.mxu0 0.0
        %2852 = vmatpush1.msra.mxu0 0.0
        %2853 = vmatprep.subr.mxu0 0.0
        %2854 = vmatpush1.msra.mxu0 0.0
        %2855 = vmatprep.subr.mxu0 0.0
        %2856 = vmatpush1.msra.mxu0 0.0
        %2857 = vmatprep.subr.mxu0 0.0
        %2858 = vmatpush1.msra.mxu0 0.0
        %2859 = vmatprep.mubr.f32.mxu0 0.0
        %v2860 = vand.u32 %v1974, 4294901760
        %2861 = vmatmul.mubr.f32.gmra.mrb[0].mxu0 %v2860
        %v2862 = vpop.f32.mrb[0].mxu0
        %v2863 = vadd.f32 %v2711, %v2862
        %v2864 = vpop.f32.mrb[0].mxu0
        %v2865 = vadd.f32 %v2713, %v2864
        %2866 = vdwg.mxu0
        %v2867 = vand.u32 %v1940, 4294901760
        %v2868 = vsub.f32 %v1940, %v2867
        %2869 = vmatprep.subr.mxu0 %v2868
        %v2870 = vand.u32 %v1939, 4294901760
        %v2871 = vsub.f32 %v1939, %v2870
        %2872 = vmatpush1.msra.mxu0 %v2871
        %v2873 = vand.u32 %v1944, 4294901760
        %v2874 = vsub.f32 %v1944, %v2873
        %2875 = vmatprep.subr.mxu0 %v2874
        %v2876 = vand.u32 %v1943, 4294901760
        %v2877 = vsub.f32 %v1943, %v2876
        %2878 = vmatpush1.msra.mxu0 %v2877
        %v2879 = vand.u32 %v1948, 4294901760
        %v2880 = vsub.f32 %v1948, %v2879
        %2881 = vmatprep.subr.mxu0 %v2880
        %v2882 = vand.u32 %v1947, 4294901760
        %v2883 = vsub.f32 %v1947, %v2882
        %2884 = vmatpush1.msra.mxu0 %v2883
        %v2885 = vand.u32 %v1952, 4294901760
        %v2886 = vsub.f32 %v1952, %v2885
        %2887 = vmatprep.subr.mxu0 %v2886
        %v2888 = vand.u32 %v1951, 4294901760
        %v2889 = vsub.f32 %v1951, %v2888
        %2890 = vmatpush1.msra.mxu0 %v2889
        %v2891 = vand.u32 %v1956, 4294901760
        %v2892 = vsub.f32 %v1956, %v2891
        %2893 = vmatprep.subr.mxu0 %v2892
        %v2894 = vand.u32 %v1955, 4294901760
        %v2895 = vsub.f32 %v1955, %v2894
        %2896 = vmatpush1.msra.mxu0 %v2895
        %v2897 = vand.u32 %v1960, 4294901760
        %v2898 = vsub.f32 %v1960, %v2897
        %2899 = vmatprep.subr.mxu0 %v2898
        %v2900 = vand.u32 %v1959, 4294901760
        %v2901 = vsub.f32 %v1959, %v2900
        %2902 = vmatpush1.msra.mxu0 %v2901
        %v2903 = vand.u32 %v1964, 4294901760
        %v2904 = vsub.f32 %v1964, %v2903
        %2905 = vmatprep.subr.mxu0 %v2904
        %v2906 = vand.u32 %v1963, 4294901760
        %v2907 = vsub.f32 %v1963, %v2906
        %2908 = vmatpush1.msra.mxu0 %v2907
        %v2909 = vand.u32 %v1968, 4294901760
        %v2910 = vsub.f32 %v1968, %v2909
        %2911 = vmatprep.subr.mxu0 %v2910
        %v2912 = vand.u32 %v1967, 4294901760
        %v2913 = vsub.f32 %v1967, %v2912
        %2914 = vmatpush1.msra.mxu0 %v2913
        %2915 = vmatprep.subr.mxu0 0.0
        %2916 = vmatpush1.msra.mxu0 0.0
        %2917 = vmatprep.subr.mxu0 0.0
        %2918 = vmatpush1.msra.mxu0 0.0
        %2919 = vmatprep.subr.mxu0 0.0
        %2920 = vmatpush1.msra.mxu0 0.0
        %2921 = vmatprep.subr.mxu0 0.0
        %2922 = vmatpush1.msra.mxu0 0.0
        %2923 = vmatprep.subr.mxu0 0.0
        %2924 = vmatpush1.msra.mxu0 0.0
        %2925 = vmatprep.subr.mxu0 0.0
        %2926 = vmatpush1.msra.mxu0 0.0
        %2927 = vmatprep.subr.mxu0 0.0
        %2928 = vmatpush1.msra.mxu0 0.0
        %2929 = vmatprep.subr.mxu0 0.0
        %2930 = vmatpush1.msra.mxu0 0.0
        %2931 = vmatprep.subr.mxu0 0.0
        %2932 = vmatpush1.msra.mxu0 0.0
        %2933 = vmatprep.subr.mxu0 0.0
        %2934 = vmatpush1.msra.mxu0 0.0
        %2935 = vmatprep.subr.mxu0 0.0
        %2936 = vmatpush1.msra.mxu0 0.0
        %2937 = vmatprep.subr.mxu0 0.0
        %2938 = vmatpush1.msra.mxu0 0.0
        %2939 = vmatprep.subr.mxu0 0.0
        %2940 = vmatpush1.msra.mxu0 0.0
        %2941 = vmatprep.subr.mxu0 0.0
        %2942 = vmatpush1.msra.mxu0 0.0
        %2943 = vmatprep.subr.mxu0 0.0
        %2944 = vmatpush1.msra.mxu0 0.0
        %2945 = vmatprep.subr.mxu0 0.0
        %2946 = vmatpush1.msra.mxu0 0.0
        %2947 = vmatprep.subr.mxu0 0.0
        %2948 = vmatpush1.msra.mxu0 0.0
        %2949 = vmatprep.subr.mxu0 0.0
        %2950 = vmatpush1.msra.mxu0 0.0
        %2951 = vmatprep.subr.mxu0 0.0
        %2952 = vmatpush1.msra.mxu0 0.0
        %2953 = vmatprep.subr.mxu0 0.0
        %2954 = vmatpush1.msra.mxu0 0.0
        %2955 = vmatprep.subr.mxu0 0.0
        %2956 = vmatpush1.msra.mxu0 0.0
        %2957 = vmatprep.subr.mxu0 0.0
        %2958 = vmatpush1.msra.mxu0 0.0
        %2959 = vmatprep.subr.mxu0 0.0
        %2960 = vmatpush1.msra.mxu0 0.0
        %2961 = vmatprep.subr.mxu0 0.0
        %2962 = vmatpush1.msra.mxu0 0.0
        %2963 = vmatprep.mubr.f32.mxu0 0.0
        %v2964 = vand.u32 %v1974, 4294901760
        %v2965 = vsub.f32 %v1974, %v2964
        %2966 = vmatmul.mubr.f32.gmra.mrb[0].mxu0 %v2965
        %v2967 = vpop.f32.mrb[0].mxu0
        %v2968 = vadd.f32 %v2863, %v2967
        %v2969 = vpop.f32.mrb[0].mxu0
        %v2970 = vadd.f32 %v2865, %v2969
        %2971 = vdwg.mxu0
        %v2972 = vand.u32 %v1940, 4294901760
        %2973 = vmatprep.subr.mxu0 %v2972
        %v2974 = vand.u32 %v1939, 4294901760
        %2975 = vmatpush1.msra.mxu0 %v2974
        %v2976 = vand.u32 %v1944, 4294901760
        %2977 = vmatprep.subr.mxu0 %v2976
        %v2978 = vand.u32 %v1943, 4294901760
        %2979 = vmatpush1.msra.mxu0 %v2978
        %v2980 = vand.u32 %v1948, 4294901760
        %2981 = vmatprep.subr.mxu0 %v2980
        %v2982 = vand.u32 %v1947, 4294901760
        %2983 = vmatpush1.msra.mxu0 %v2982
        %v2984 = vand.u32 %v1952, 4294901760
        %2985 = vmatprep.subr.mxu0 %v2984
        %v2986 = vand.u32 %v1951, 4294901760
        %2987 = vmatpush1.msra.mxu0 %v2986
        %v2988 = vand.u32 %v1956, 4294901760
        %2989 = vmatprep.subr.mxu0 %v2988
        %v2990 = vand.u32 %v1955, 4294901760
        %2991 = vmatpush1.msra.mxu0 %v2990
        %v2992 = vand.u32 %v1960, 4294901760
        %2993 = vmatprep.subr.mxu0 %v2992
        %v2994 = vand.u32 %v1959, 4294901760
        %2995 = vmatpush1.msra.mxu0 %v2994
        %v2996 = vand.u32 %v1964, 4294901760
        %2997 = vmatprep.subr.mxu0 %v2996
        %v2998 = vand.u32 %v1963, 4294901760
        %2999 = vmatpush1.msra.mxu0 %v2998
        %v3000 = vand.u32 %v1968, 4294901760
        %3001 = vmatprep.subr.mxu0 %v3000
        %v3002 = vand.u32 %v1967, 4294901760
        %3003 = vmatpush1.msra.mxu0 %v3002
        %3004 = vmatprep.subr.mxu0 0.0
        %3005 = vmatpush1.msra.mxu0 0.0
        %3006 = vmatprep.subr.mxu0 0.0
        %3007 = vmatpush1.msra.mxu0 0.0
        %3008 = vmatprep.subr.mxu0 0.0
        %3009 = vmatpush1.msra.mxu0 0.0
        %3010 = vmatprep.subr.mxu0 0.0
        %3011 = vmatpush1.msra.mxu0 0.0
        %3012 = vmatprep.subr.mxu0 0.0
        %3013 = vmatpush1.msra.mxu0 0.0
        %3014 = vmatprep.subr.mxu0 0.0
        %3015 = vmatpush1.msra.mxu0 0.0
        %3016 = vmatprep.subr.mxu0 0.0
        %3017 = vmatpush1.msra.mxu0 0.0
        %3018 = vmatprep.subr.mxu0 0.0
        %3019 = vmatpush1.msra.mxu0 0.0
        %3020 = vmatprep.subr.mxu0 0.0
        %3021 = vmatpush1.msra.mxu0 0.0
        %3022 = vmatprep.subr.mxu0 0.0
        %3023 = vmatpush1.msra.mxu0 0.0
        %3024 = vmatprep.subr.mxu0 0.0
        %3025 = vmatpush1.msra.mxu0 0.0
        %3026 = vmatprep.subr.mxu0 0.0
        %3027 = vmatpush1.msra.mxu0 0.0
        %3028 = vmatprep.subr.mxu0 0.0
        %3029 = vmatpush1.msra.mxu0 0.0
        %3030 = vmatprep.subr.mxu0 0.0
        %3031 = vmatpush1.msra.mxu0 0.0
        %3032 = vmatprep.subr.mxu0 0.0
        %3033 = vmatpush1.msra.mxu0 0.0
        %3034 = vmatprep.subr.mxu0 0.0
        %3035 = vmatpush1.msra.mxu0 0.0
        %3036 = vmatprep.subr.mxu0 0.0
        %3037 = vmatpush1.msra.mxu0 0.0
        %3038 = vmatprep.subr.mxu0 0.0
        %3039 = vmatpush1.msra.mxu0 0.0
        %3040 = vmatprep.subr.mxu0 0.0
        %3041 = vmatpush1.msra.mxu0 0.0
        %3042 = vmatprep.subr.mxu0 0.0
        %3043 = vmatpush1.msra.mxu0 0.0
        %3044 = vmatprep.subr.mxu0 0.0
        %3045 = vmatpush1.msra.mxu0 0.0
        %3046 = vmatprep.subr.mxu0 0.0
        %3047 = vmatpush1.msra.mxu0 0.0
        %3048 = vmatprep.subr.mxu0 0.0
        %3049 = vmatpush1.msra.mxu0 0.0
        %3050 = vmatprep.subr.mxu0 0.0
        %3051 = vmatpush1.msra.mxu0 0.0
        %3052 = vmatprep.mubr.f32.mxu0 0.0
        %v3053 = vand.u32 %v1974, 4294901760
        %v3054 = vsub.f32 %v1974, %v3053
        %v3055 = vand.u32 %v3054, 4294901760
        %3056 = vmatmul.mubr.f32.gmra.mrb[0].mxu0 %v3055
        %v3057 = vpop.f32.mrb[0].mxu0
        %v3058 = vadd.f32 %v2968, %v3057
        %v3059 = vpop.f32.mrb[0].mxu0
        %v3060 = vadd.f32 %v2970, %v3059
        %3061 = vdwg.mxu0
        %v3062 = vand.u32 %v1940, 4294901760
        %v3063 = vsub.f32 %v1940, %v3062
        %v3064 = vand.u32 %v3063, 4294901760
        %3065 = vmatprep.subr.mxu0 %v3064
        %v3066 = vand.u32 %v1939, 4294901760
        %v3067 = vsub.f32 %v1939, %v3066
        %v3068 = vand.u32 %v3067, 4294901760
        %3069 = vmatpush1.msra.mxu0 %v3068
        %v3070 = vand.u32 %v1944, 4294901760
        %v3071 = vsub.f32 %v1944, %v3070
        %v3072 = vand.u32 %v3071, 4294901760
        %3073 = vmatprep.subr.mxu0 %v3072
        %v3074 = vand.u32 %v1943, 4294901760
        %v3075 = vsub.f32 %v1943, %v3074
        %v3076 = vand.u32 %v3075, 4294901760
        %3077 = vmatpush1.msra.mxu0 %v3076
        %v3078 = vand.u32 %v1948, 4294901760
        %v3079 = vsub.f32 %v1948, %v3078
        %v3080 = vand.u32 %v3079, 4294901760
        %3081 = vmatprep.subr.mxu0 %v3080
        %v3082 = vand.u32 %v1947, 4294901760
        %v3083 = vsub.f32 %v1947, %v3082
        %v3084 = vand.u32 %v3083, 4294901760
        %3085 = vmatpush1.msra.mxu0 %v3084
        %v3086 = vand.u32 %v1952, 4294901760
        %v3087 = vsub.f32 %v1952, %v3086
        %v3088 = vand.u32 %v3087, 4294901760
        %3089 = vmatprep.subr.mxu0 %v3088
        %v3090 = vand.u32 %v1951, 4294901760
        %v3091 = vsub.f32 %v1951, %v3090
        %v3092 = vand.u32 %v3091, 4294901760
        %3093 = vmatpush1.msra.mxu0 %v3092
        %v3094 = vand.u32 %v1956, 4294901760
        %v3095 = vsub.f32 %v1956, %v3094
        %v3096 = vand.u32 %v3095, 4294901760
        %3097 = vmatprep.subr.mxu0 %v3096
        %v3098 = vand.u32 %v1955, 4294901760
        %v3099 = vsub.f32 %v1955, %v3098
        %v3100 = vand.u32 %v3099, 4294901760
        %3101 = vmatpush1.msra.mxu0 %v3100
        %v3102 = vand.u32 %v1960, 4294901760
        %v3103 = vsub.f32 %v1960, %v3102
        %v3104 = vand.u32 %v3103, 4294901760
        %3105 = vmatprep.subr.mxu0 %v3104
        %v3106 = vand.u32 %v1959, 4294901760
        %v3107 = vsub.f32 %v1959, %v3106
        %v3108 = vand.u32 %v3107, 4294901760
        %3109 = vmatpush1.msra.mxu0 %v3108
        %v3110 = vand.u32 %v1964, 4294901760
        %v3111 = vsub.f32 %v1964, %v3110
        %v3112 = vand.u32 %v3111, 4294901760
        %3113 = vmatprep.subr.mxu0 %v3112
        %v3114 = vand.u32 %v1963, 4294901760
        %v3115 = vsub.f32 %v1963, %v3114
        %v3116 = vand.u32 %v3115, 4294901760
        %3117 = vmatpush1.msra.mxu0 %v3116
        %v3118 = vand.u32 %v1968, 4294901760
        %v3119 = vsub.f32 %v1968, %v3118
        %v3120 = vand.u32 %v3119, 4294901760
        %3121 = vmatprep.subr.mxu0 %v3120
        %v3122 = vand.u32 %v1967, 4294901760
        %v3123 = vsub.f32 %v1967, %v3122
        %v3124 = vand.u32 %v3123, 4294901760
        %3125 = vmatpush1.msra.mxu0 %v3124
        %3126 = vmatprep.subr.mxu0 0.0
        %3127 = vmatpush1.msra.mxu0 0.0
        %3128 = vmatprep.subr.mxu0 0.0
        %3129 = vmatpush1.msra.mxu0 0.0
        %3130 = vmatprep.subr.mxu0 0.0
        %3131 = vmatpush1.msra.mxu0 0.0
        %3132 = vmatprep.subr.mxu0 0.0
        %3133 = vmatpush1.msra.mxu0 0.0
        %3134 = vmatprep.subr.mxu0 0.0
        %3135 = vmatpush1.msra.mxu0 0.0
        %3136 = vmatprep.subr.mxu0 0.0
        %3137 = vmatpush1.msra.mxu0 0.0
        %3138 = vmatprep.subr.mxu0 0.0
        %3139 = vmatpush1.msra.mxu0 0.0
        %3140 = vmatprep.subr.mxu0 0.0
        %3141 = vmatpush1.msra.mxu0 0.0
        %3142 = vmatprep.subr.mxu0 0.0
        %3143 = vmatpush1.msra.mxu0 0.0
        %3144 = vmatprep.subr.mxu0 0.0
        %3145 = vmatpush1.msra.mxu0 0.0
        %3146 = vmatprep.subr.mxu0 0.0
        %3147 = vmatpush1.msra.mxu0 0.0
        %3148 = vmatprep.subr.mxu0 0.0
        %3149 = vmatpush1.msra.mxu0 0.0
        %3150 = vmatprep.subr.mxu0 0.0
        %3151 = vmatpush1.msra.mxu0 0.0
        %3152 = vmatprep.subr.mxu0 0.0
        %3153 = vmatpush1.msra.mxu0 0.0
        %3154 = vmatprep.subr.mxu0 0.0
        %3155 = vmatpush1.msra.mxu0 0.0
        %3156 = vmatprep.subr.mxu0 0.0
        %3157 = vmatpush1.msra.mxu0 0.0
        %3158 = vmatprep.subr.mxu0 0.0
        %3159 = vmatpush1.msra.mxu0 0.0
        %3160 = vmatprep.subr.mxu0 0.0
        %3161 = vmatpush1.msra.mxu0 0.0
        %3162 = vmatprep.subr.mxu0 0.0
        %3163 = vmatpush1.msra.mxu0 0.0
        %3164 = vmatprep.subr.mxu0 0.0
        %3165 = vmatpush1.msra.mxu0 0.0
        %3166 = vmatprep.subr.mxu0 0.0
        %3167 = vmatpush1.msra.mxu0 0.0
        %3168 = vmatprep.subr.mxu0 0.0
        %3169 = vmatpush1.msra.mxu0 0.0
        %3170 = vmatprep.subr.mxu0 0.0
        %3171 = vmatpush1.msra.mxu0 0.0
        %3172 = vmatprep.subr.mxu0 0.0
        %3173 = vmatpush1.msra.mxu0 0.0
        %3174 = vmatprep.mubr.f32.mxu0 0.0
        %v3175 = vand.u32 %v1974, 4294901760
        %3176 = vmatmul.mubr.f32.gmra.mrb[0].mxu0 %v3175
        %v3177 = vpop.f32.mrb[0].mxu0
        %v3178 = vadd.f32 %v3058, %v3177
        %v3179 = vpop.f32.mrb[0].mxu0
        %v3180 = vadd.f32 %v3060, %v3179
        %3181 = vdwg.mxu0
        %v3182 = vand.u32 %v1940, 4294901760
        %3183 = vmatprep.subr.mxu0 %v3182
        %v3184 = vand.u32 %v1939, 4294901760
        %3185 = vmatpush1.msra.mxu0 %v3184
        %v3186 = vand.u32 %v1944, 4294901760
        %3187 = vmatprep.subr.mxu0 %v3186
        %v3188 = vand.u32 %v1943, 4294901760
        %3189 = vmatpush1.msra.mxu0 %v3188
        %v3190 = vand.u32 %v1948, 4294901760
        %3191 = vmatprep.subr.mxu0 %v3190
        %v3192 = vand.u32 %v1947, 4294901760
        %3193 = vmatpush1.msra.mxu0 %v3192
        %v3194 = vand.u32 %v1952, 4294901760
        %3195 = vmatprep.subr.mxu0 %v3194
        %v3196 = vand.u32 %v1951, 4294901760
        %3197 = vmatpush1.msra.mxu0 %v3196
        %v3198 = vand.u32 %v1956, 4294901760
        %3199 = vmatprep.subr.mxu0 %v3198
        %v3200 = vand.u32 %v1955, 4294901760
        %3201 = vmatpush1.msra.mxu0 %v3200
        %v3202 = vand.u32 %v1960, 4294901760
        %3203 = vmatprep.subr.mxu0 %v3202
        %v3204 = vand.u32 %v1959, 4294901760
        %3205 = vmatpush1.msra.mxu0 %v3204
        %v3206 = vand.u32 %v1964, 4294901760
        %3207 = vmatprep.subr.mxu0 %v3206
        %v3208 = vand.u32 %v1963, 4294901760
        %3209 = vmatpush1.msra.mxu0 %v3208
        %v3210 = vand.u32 %v1968, 4294901760
        %3211 = vmatprep.subr.mxu0 %v3210
        %v3212 = vand.u32 %v1967, 4294901760
        %3213 = vmatpush1.msra.mxu0 %v3212
        %3214 = vmatprep.subr.mxu0 0.0
        %3215 = vmatpush1.msra.mxu0 0.0
        %3216 = vmatprep.subr.mxu0 0.0
        %3217 = vmatpush1.msra.mxu0 0.0
        %3218 = vmatprep.subr.mxu0 0.0
        %3219 = vmatpush1.msra.mxu0 0.0
        %3220 = vmatprep.subr.mxu0 0.0
        %3221 = vmatpush1.msra.mxu0 0.0
        %3222 = vmatprep.subr.mxu0 0.0
        %3223 = vmatpush1.msra.mxu0 0.0
        %3224 = vmatprep.subr.mxu0 0.0
        %3225 = vmatpush1.msra.mxu0 0.0
        %3226 = vmatprep.subr.mxu0 0.0
        %3227 = vmatpush1.msra.mxu0 0.0
        %3228 = vmatprep.subr.mxu0 0.0
        %3229 = vmatpush1.msra.mxu0 0.0
        %3230 = vmatprep.subr.mxu0 0.0
        %3231 = vmatpush1.msra.mxu0 0.0
        %3232 = vmatprep.subr.mxu0 0.0
        %3233 = vmatpush1.msra.mxu0 0.0
        %3234 = vmatprep.subr.mxu0 0.0
        %3235 = vmatpush1.msra.mxu0 0.0
        %3236 = vmatprep.subr.mxu0 0.0
        %3237 = vmatpush1.msra.mxu0 0.0
        %3238 = vmatprep.subr.mxu0 0.0
        %3239 = vmatpush1.msra.mxu0 0.0
        %3240 = vmatprep.subr.mxu0 0.0
        %3241 = vmatpush1.msra.mxu0 0.0
        %3242 = vmatprep.subr.mxu0 0.0
        %3243 = vmatpush1.msra.mxu0 0.0
        %3244 = vmatprep.subr.mxu0 0.0
        %3245 = vmatpush1.msra.mxu0 0.0
        %3246 = vmatprep.subr.mxu0 0.0
        %3247 = vmatpush1.msra.mxu0 0.0
        %3248 = vmatprep.subr.mxu0 0.0
        %3249 = vmatpush1.msra.mxu0 0.0
        %3250 = vmatprep.subr.mxu0 0.0
        %3251 = vmatpush1.msra.mxu0 0.0
        %3252 = vmatprep.subr.mxu0 0.0
        %3253 = vmatpush1.msra.mxu0 0.0
        %3254 = vmatprep.subr.mxu0 0.0
        %3255 = vmatpush1.msra.mxu0 0.0
        %3256 = vmatprep.subr.mxu0 0.0
        %3257 = vmatpush1.msra.mxu0 0.0
        %3258 = vmatprep.subr.mxu0 0.0
        %3259 = vmatpush1.msra.mxu0 0.0
        %3260 = vmatprep.subr.mxu0 0.0
        %3261 = vmatpush1.msra.mxu0 0.0
        %3262 = vmatprep.mubr.f32.mxu0 0.0
        %v3263 = vand.u32 %v1974, 4294901760
        %3264 = vmatmul.mubr.f32.gmra.mrb[0].mxu0 %v3263
        %v3265 = vpop.f32.mrb[0].mxu0
        %v3266 = vadd.f32 %v3178, %v3265
        %v3267 = vpop.f32.mrb[0].mxu0
        %v3268 = vadd.f32 %v3180, %v3267
        %3269 = vdwg.mxu0
        %v3270 = vxor.u32 %v2619, 2147483648
        %v3271 = vxor.u32 %v2621, 2147483648
        %v3272 = vxor.u32 %v3266, 2147483648
        %v3273 = vxor.u32 %v3268, 2147483648
        %v3274 = vmul.f32 %v3270, 1.442695
        %v3275 = vpow.pop %v3274
        %v3276 = vmul.f32 %v3271, 1.442695
        %v3277 = vpow.pop %v3276
        %v3278 = vmul.f32 %v3272, 1.442695
        %v3279 = vpow.pop %v3278
        %v3280 = vmul.f32 %v3273, 1.442695
        %v3281 = vpow.pop %v3280
        %v3282 = vadd.f32 %v3275, 1.0
        %v3283 = vadd.f32 %v3277, 1.0
        %v3284 = vadd.f32 %v3279, 1.0
        %v3285 = vadd.f32 %v3281, 1.0
        %v3286 = vrcp.pop %v3282
        %v3287 = vmul.f32 1.0, %v3286
        %v3288 = vrcp.pop %v3283
        %v3289 = vmul.f32 1.0, %v3288
        %v3290 = vrcp.pop %v3284
        %v3291 = vmul.f32 1.0, %v3290
        %v3292 = vrcp.pop %v3285
        %v3293 = vmul.f32 1.0, %v3292
        %v3298 = vrot.slane %v228, 5
        %v3299 = vrot.slane %v229, 5
        %v3300 = vrot.slane %v230, 5
        %v3301 = vrot.slane %v231, 5
        %v3306 = vmul.f32 %v3287, %v3298
        %v3307 = vmul.f32 %v3289, %v3299
        %v3308 = vmul.f32 %v3291, %v3300
        %v3309 = vmul.f32 %v3293, %v3301
        %v3314 = vcombine.low %v3306, %v3307
        %v3315 = vcombine.low %v3308, %v3309
        %v3317 = vunpack.c.l.s4 1966171168
        %v3318 = vunpack.c.0.s8 %v3317
        %v3319 = vlaneseq
        %v3320 = vshrl.u32 %v3319, 7
        %v3321 = vsub.s32 %v3318, %v3320
        %v3322 = vrot.slane %v3314, %v3321
        %v3324 = vunpack.c.l.s4 1966171168
        %v3325 = vunpack.c.0.s8 %v3324
        %v3326 = vlaneseq
        %v3327 = vshrl.u32 %v3326, 7
        %v3328 = vsub.s32 %v3325, %v3327
        %v3329 = vrot.slane %v3315, %v3328
        %v3330 = vcombine.low %v3322, %v3329
        %v3332 = vunpack.c.l.s4 1966171168
        %v3333 = vunpack.c.0.s8 %v3332
        %v3334 = vlaneseq
        %v3335 = vshrl.u32 %v3334, 7
        %v3336 = vsub.s32 %v3333, %v3335
        %v3337 = vrot.slane %v3330, %v3336
        %v3339 = vlaneseq
        %vm3340 = vcmp.ge.s32.totalorder %v3339, 0
        %vm3341 = vcmp.lt.s32.totalorder %v3339, 512
        %vm3342 = vmand %vm3340, %vm3341
        %3343 = vst.msk [vmem:[%s216] sm:$0xf] %vm3342, %v3337
        %s3344 = sand.u32 %s132, 1
        %s3345 = scalar_lea.sflag [#allocation4], %s3344
        %s3346 = sand.u32 %s132, 1
        %s3347 = smul.addr %s3346, 4
        %s3348 = scalar_lea.vmem [#allocation3], %s3347
        // Predicated region
        $region37: #{tpu_custom_call.1} parent=35 // pred_check
          %p3349 = pneg %p142
        $region38: #{tpu_custom_call.1} parent=35 // pred_check_branch
          %3351 = sbr.rel (%p3349) target = $region40
        $region39: #{tpu_custom_call.1} parent=35 // pred_region
          %s3352 = smul.u32 4, %s24
          %s3354 = ssub.s32 64, 64
          %3355 = vsyncadd %s3345, %s3354
          %s3356 = smul.addr %s23, 4
          %s3357 = sadd.s32 %s3352, %s3356
          %s3358 = smul.addr %s3357, 16
          %s3359 = scalar_lea.hbm %s4, %s3358
          %s3361 = sshll.u32 %s3348, 4
          %s3362 = int_to_ptr.vmem [resolvable:$true] %s3361
          %3364 = dma.vmem_to_hbm [thread:$0]  %s3362, 64, %s3359, %s3345
        $region40: #{tpu_custom_call.1} parent=35 // pred_fallthru
          _
      $region36: #{tpu_custom_call.1} parent=5 // pred_fallthru
        _
      %p3365 = scmp.le.s32.totalorder 2, %s14
      // Predicated region
      $region41: #{tpu_custom_call.1} parent=5 // pred_check
        %p3366 = pneg %p3365
      $region42: #{tpu_custom_call.1} parent=5 // pred_check_branch
        %3368 = sbr.rel (%p3366) target = $region44
      $region43: #{tpu_custom_call.1} parent=5 // pred_region
        %s3369 = ssub.s32 %s14, 2
        // Predicated region
        $region45: #{tpu_custom_call.1} parent=43 // pred_check
          %p3370 = pneg %p148
        $region46: #{tpu_custom_call.1} parent=43 // pred_check_branch
          %3372 = sbr.rel (%p3370) target = $region48
        $region47: #{tpu_custom_call.1} parent=43 // pred_region
          %s3373 = sand.u32 %s133, 1
          %s3374 = scalar_lea.sflag [#allocation4], %s3373
          %s3375 = sand.u32 %s133, 1
          %s3376 = smul.addr %s3375, 4
          %s3377 = scalar_lea.vmem [#allocation3], %s3376
          %3378 = dma.done %s3374, 64
        $region48: #{tpu_custom_call.1} parent=43 // pred_fallthru
          _
      $region44: #{tpu_custom_call.1} parent=5 // pred_fallthru
        _
    $region6: #{tpu_custom_call.1} parent=1 // loop_footer
      %s18 = sadd.s32 1, %s14
    $region7: #{tpu_custom_call.1} parent=1 // loop_footer_branch
      %13 = sbr.rel target = $region3
    $region8: #{tpu_custom_call.1} parent=1 // loop_exit
      _
    %3379 = vsyncpa [#allocation4], 1
    %s3380 = scalar_lea.sflag [#allocation4], 1
    %3381 = vsyncpa %s3380, 1

</llo_original>
